<compile_context>
chip_gen: v7x
topology: tpu7x:2x2x1
jax: 0.10.0
libtpu: 0.0.40
codegen_flags: <defaults>
</compile_context>

<pallas_src>
import functools
import math

import jax
import jax.numpy as jnp
from jax.experimental import pallas as pl
from jax.experimental.pallas import tpu as pltpu


def _round_up(x, m):
    return (x + m - 1) // m * m


# ----------------------------------------------------------------------------
# Fused batched matmul kernel:
#   out[g] = out_act( pre_act(A[g]) @ B[g] + bias ),  plus per-column sum /
#   sum-of-squares of the pre-bias accumulator (for BatchNorm batch stats).
# Grid: (G, M/tm, N/tn, K/tk); accumulation in a f32 VMEM scratch tile, output
# written once (in the target dtype) at the last K step.
# ----------------------------------------------------------------------------
def _fused_matmul_kernel(a_ref, b_ref, bias_ref, o_ref, sum_ref, sq_ref,
                         acc_ref, *, pre_act, out_act):
    k = pl.program_id(3)

    @pl.when(k == 0)
    def _():
        acc_ref[...] = jnp.zeros_like(acc_ref)

    a = a_ref[...]                                  # bf16 tile (tm, tk)
    if pre_act == "lrelu":
        a = jnp.where(a >= 0, a, a * 0.2)
    elif pre_act == "relu":
        a = jnp.maximum(a, 0)

    acc_ref[...] += jnp.dot(a, b_ref[...], preferred_element_type=jnp.float32)

    @pl.when(k == pl.num_programs(3) - 1)
    def _():
        acc = acc_ref[...]                          # f32 (tm, tn)
        s = jnp.sum(acc, axis=0, keepdims=True)     # pre-bias column sums
        sq = jnp.sum(acc * acc, axis=0, keepdims=True)
        sum_ref[...] = jnp.broadcast_to(s, sum_ref.shape)
        sq_ref[...] = jnp.broadcast_to(sq, sq_ref.shape)
        out = acc + bias_ref[...]
        if out_act == "tanh":
            out = jnp.tanh(out)
        o_ref[...] = out.astype(o_ref.dtype)


def fused_matmul(a, b, bias, *, pre_act="none", out_act="none",
                 out_dtype=jnp.float32):
    """a: (G, M, K), b: (G, K, N), bias: (N,).

    Returns (out (G, M, N) out_dtype, col_sum (G, N) f32, col_sumsq (G, N) f32)
    where the column statistics are over pre_act(a) @ b (pre-bias), summed over
    the M rows of each batch slice.
    """
    G, M, K = a.shape
    _, _, N = b.shape

    tm = min(512, _round_up(M, 8))
    tn = min(256, _round_up(N, 128))
    tk = min(256, _round_up(K, 128))
    Mp, Kp, Np = _round_up(M, tm), _round_up(K, tk), _round_up(N, tn)

    a_p = jnp.pad(a, ((0, 0), (0, Mp - M), (0, Kp - K))).astype(jnp.bfloat16)
    b_p = jnp.pad(b, ((0, 0), (0, Kp - K), (0, Np - N))).astype(jnp.bfloat16)
    bias_p = jnp.pad(bias.astype(jnp.float32).reshape(1, -1),
                     ((0, 0), (0, Np - N)))

    nm, nn, nk = Mp // tm, Np // tn, Kp // tk
    kernel = functools.partial(_fused_matmul_kernel,
                               pre_act=pre_act, out_act=out_act)

    out, ssum, ssq = pl.pallas_call(
        kernel,
        out_shape=(
            jax.ShapeDtypeStruct((G, Mp, Np), out_dtype),
            jax.ShapeDtypeStruct((G, nm * 8, Np), jnp.float32),
            jax.ShapeDtypeStruct((G, nm * 8, Np), jnp.float32),
        ),
        grid_spec=pltpu.PrefetchScalarGridSpec(
            num_scalar_prefetch=0,
            grid=(G, nm, nn, nk),
            in_specs=[
                pl.BlockSpec((None, tm, tk), lambda g, i, j, k: (g, i, k)),
                pl.BlockSpec((None, tk, tn), lambda g, i, j, k: (g, k, j)),
                pl.BlockSpec((1, tn), lambda g, i, j, k: (0, j)),
            ],
            out_specs=(
                pl.BlockSpec((None, tm, tn), lambda g, i, j, k: (g, i, j)),
                pl.BlockSpec((None, 8, tn), lambda g, i, j, k: (g, i, j)),
                pl.BlockSpec((None, 8, tn), lambda g, i, j, k: (g, i, j)),
            ),
            scratch_shapes=[pltpu.VMEM((tm, tn), jnp.float32)],
        ),
        compiler_params=pltpu.CompilerParams(
            dimension_semantics=("parallel", "parallel", "parallel",
                                 "arbitrary"),
            vmem_limit_bytes=32 * 1024 * 1024),
    )(a_p, b_p, bias_p)

    # Each (g, M-tile) wrote its column sums broadcast over an 8-row block;
    # take one row per tile and reduce over M tiles.  Zero-padded rows give 0.
    col_sum = ssum[:, ::8, :N].sum(axis=1)
    col_sq = ssq[:, ::8, :N].sum(axis=1)
    return out[:, :M, :N], col_sum, col_sq


# ----------------------------------------------------------------------------
# im2col glue (plain JAX slicing / padding; fused by XLA)
# ----------------------------------------------------------------------------
def _im2col_conv_s2(x):
    """x: (N, H, W, C) -> patches (N*Ho*Wo, 16*C) in (kh, kw, c) order."""
    n, h, w, c = x.shape
    ho, wo = h // 2, w // 2
    xp = jnp.pad(x, ((0, 0), (1, 1), (1, 1), (0, 0)))
    cols = []
    for kh in range(4):
        for kw in range(4):
            cols.append(xp[:, kh:kh + 2 * ho:2, kw:kw + 2 * wo:2, :])
    patches = jnp.stack(cols, axis=3)                 # (N, Ho, Wo, 16, C)
    return patches.reshape(n * ho * wo, 16 * c), (n, ho, wo)


def _shift2d(x, dr, dc):
    """y[:, m, n] = x[:, m+dr, n+dc], zero-padded at the boundary."""
    n, h, w, c = x.shape
    pr = ((-dr if dr < 0 else 0), (dr if dr > 0 else 0))
    pc = ((-dc if dc < 0 else 0), (dc if dc > 0 else 0))
    xp = jnp.pad(x, ((0, 0), pr, pc, (0, 0)))
    r0 = dr if dr > 0 else 0
    c0 = dc if dc > 0 else 0
    return xp[:, r0:r0 + h, c0:c0 + w, :]


def _phase_taps(d):
    """(input shift, flipped-kernel tap) pairs for output phase d (k=4,s=2,p=1)."""
    return ((-1, 0), (0, 2)) if d == 0 else ((0, 1), (1, 3))


def _deconv_phase_operands(x, wf_t, dy, dx):
    """Stride-phase decomposition of ConvTranspose2d(k=4,s=2,p=1).

    x: (N, H, W, Cin);  wf_t: spatially-flipped weight in (kh, kw, cin, cout).
    Returns A (N*H*W, 4*Cin), B (4*Cin, Cout) for output phase (dy, dx).
    """
    n, h, w, c = x.shape
    cout = wf_t.shape[-1]
    cols, wrows = [], []
    for (rs, kh) in _phase_taps(dy):
        for (cs, kw) in _phase_taps(dx):
            cols.append(_shift2d(x, rs, cs))
            wrows.append(wf_t[kh, kw])                # (cin, cout)
    patches = jnp.stack(cols, axis=3)                 # (N, H, W, 4, Cin)
    a_mat = patches.reshape(n * h * w, 4 * c)
    b_mat = jnp.stack(wrows, axis=0).reshape(4 * c, cout)
    return a_mat, b_mat


def _bn_from_stats(y2d, col_sum, col_sq, count, bias, eps=1e-5):
    """Normalize y2d (M, C) with batch stats derived from pre-bias column sums."""
    mean_acc = col_sum / count
    var = jnp.maximum(col_sq / count - mean_acc * mean_acc, 0.0)  # biased var
    mean = mean_acc + bias.astype(jnp.float32)
    return (y2d - mean) * jax.lax.rsqrt(var + eps)


# ----------------------------------------------------------------------------
# Blocks
# ----------------------------------------------------------------------------
def conv_block(x, p, *, activation=True, batch_norm=True,
               out_dtype=jnp.bfloat16):
    """ConvBlock: [LeakyReLU(0.2)] -> Conv2d(k4,s2,p1) -> [BN].  x: NHWC."""
    w, b = p["w"], p["b"]                 # w: (Cout, Cin, 4, 4)
    cout, cin = w.shape[0], w.shape[1]
    patches, (n, ho, wo) = _im2col_conv_s2(x)
    bmat = jnp.transpose(w, (2, 3, 1, 0)).reshape(16 * cin, cout)
    y, s, sq = fused_matmul(
        patches[None], bmat[None], b,
        pre_act="lrelu" if activation else "none",
        out_dtype=jnp.float32 if batch_norm else out_dtype)
    y, s, sq = y[0], s[0], sq[0]
    if batch_norm:
        y = _bn_from_stats(y, s, sq, count=y.shape[0], bias=b)
    return y.reshape(n, ho, wo, cout).astype(out_dtype)


def deconv_block(x, p, *, batch_norm=True, dropout=False,
                 pre_act="relu", out_act="none", out_dtype=jnp.bfloat16):
    """DeconvBlock: [ReLU] -> ConvTranspose2d(k4,s2,p1) -> [BN] -> [Dropout]."""
    w, b = p["w"], p["b"]                 # w: (Cin, Cout, 4, 4)
    cout = w.shape[1]
    n, h, wd, _ = x.shape
    wf_t = jnp.transpose(jnp.flip(w, axis=(2, 3)), (2, 3, 0, 1))  # (kh,kw,ci,co)

    # Batch the 4 stride phases into one pallas_call (leading G grid axis).
    a_list, b_list = [], []
    for dy in (0, 1):
        for dx in (0, 1):
            a_mat, b_mat = _deconv_phase_operands(x, wf_t, dy, dx)
            a_list.append(a_mat)
            b_list.append(b_mat)
    a_all = jnp.stack(a_list, axis=0)                 # (4, N*H*W, 4*Cin)
    b_all = jnp.stack(b_list, axis=0)                 # (4, 4*Cin, Cout)

    kernel_dtype = jnp.float32 if batch_norm else out_dtype
    y, s, sq = fused_matmul(a_all, b_all, b, pre_act=pre_act, out_act=out_act,
                            out_dtype=kernel_dtype)

    # Interleave phases: out[:, 2m+dy, 2k+dx] = phase[dy][dx][:, m, k]
    y = y.reshape(2, 2, n, h, wd, cout)               # (dy, dx, n, h, w, c)
    y = jnp.transpose(y, (2, 3, 0, 4, 1, 5)).reshape(n, 2 * h, 2 * wd, cout)

    if batch_norm:
        tot_sum, tot_sq = s.sum(axis=0), sq.sum(axis=0)
        y2 = _bn_from_stats(y.reshape(-1, cout), tot_sum, tot_sq,
                            count=4 * n * h * wd, bias=b)
        y = y2.reshape(n, 2 * h, 2 * wd, cout)
    # TODO(synk): training-mode Dropout(p=0.5) is stochastic; identity here.
    del dropout
    return y.astype(out_dtype)


# ----------------------------------------------------------------------------
# Generator forward (NCHW in / NCHW out, like the PyTorch module)
# ----------------------------------------------------------------------------
def generator_forward(params, x_nchw):
    x = jnp.transpose(x_nchw, (0, 2, 3, 1)).astype(jnp.bfloat16)   # -> NHWC

    en1 = conv_block(x, params["en1"], activation=False, batch_norm=False)
    en2 = conv_block(en1, params["en2"])
    en3 = conv_block(en2, params["en3"])
    bottleneck = conv_block(en3, params["bottle_neck"], batch_norm=False)

    de1 = deconv_block(bottleneck, params["de1"], dropout=True)
    de1_cat = jnp.concatenate([de1, en3], axis=-1)     # channel concat (skip)
    de2 = deconv_block(de1_cat, params["de2"])
    de2_cat = jnp.concatenate([de2, en2], axis=-1)
    de3 = deconv_block(de2_cat, params["de3"])
    de3_cat = jnp.concatenate([de3, en1], axis=-1)
    out = deconv_block(de3_cat, params["final"], batch_norm=False,
                       pre_act="none", out_act="tanh", out_dtype=jnp.float32)

    return jnp.transpose(out, (0, 3, 1, 2))            # -> NCHW


# ----------------------------------------------------------------------------
# Deterministic parameter initialization (shapes follow the torch __init__)
# ----------------------------------------------------------------------------
def _uniform(key, shape, bound):
    return jax.random.uniform(key, shape, jnp.float32, -bound, bound)


def _init_conv(key, cin, cout):
    kw, kb = jax.random.split(key)
    bound = 1.0 / math.sqrt(cin * 16)
    return {"w": _uniform(kw, (cout, cin, 4, 4), bound),
            "b": _uniform(kb, (cout,), bound)}


def _init_deconv(key, cin, cout):
    kw, kb = jax.random.split(key)
    bound = 1.0 / math.sqrt(cout * 16)
    return {"w": _uniform(kw, (cin, cout, 4, 4), bound),
            "b": _uniform(kb, (cout,), bound)}


def init_generator_params(key, in_ch, out_ch, ngf):
    ks = jax.random.split(key, 8)
    return {
        "en1": _init_conv(ks[0], in_ch, ngf),
        "en2": _init_conv(ks[1], ngf, ngf * 2),
        "en3": _init_conv(ks[2], ngf * 2, ngf * 4),
        "bottle_neck": _init_conv(ks[3], ngf * 4, ngf * 8),
        "de1": _init_deconv(ks[4], ngf * 8, ngf * 4),
        "de2": _init_deconv(ks[5], ngf * 8, ngf * 2),
        "de3": _init_deconv(ks[6], ngf * 4, ngf),
        "final": _init_deconv(ks[7], ngf * 2, out_ch),
    }


if __name__ == "__main__":
    in_ch, out_ch, ngf = 4, 3, 8
    batch, spatial = 2, 16                       # spatial must be /16 (4 halvings)

    x = jax.random.normal(jax.random.PRNGKey(0),
                          (batch, in_ch, spatial, spatial), jnp.float32)
    params = init_generator_params(jax.random.PRNGKey(1), in_ch, out_ch, ngf)

    fwd = jax.jit(generator_forward)
    y = fwd(params, x)
    jax.block_until_ready(y)

    assert y.shape == (batch, out_ch, spatial, spatial), y.shape
    assert bool(jnp.all(jnp.isfinite(y)))
    assert bool(jnp.all(jnp.abs(y) <= 1.0))      # tanh output range
    print("KERNEL_OK")
</pallas_src>

<mosaic_0001>
module attributes {stable_mosaic.version = 11 : i64} {
  func.func @_fused_matmul_kernel(%arg0: i32, %arg1: i32, %arg2: i32, %arg3: i32, %arg4: memref<1x128x128xbf16, #tpu.memory_space<vmem>>, %arg5: memref<1x128x128xbf16, #tpu.memory_space<vmem>>, %arg6: memref<1x128xf32, #tpu.memory_space<vmem>>, %arg7: memref<1x128x128xbf16, #tpu.memory_space<vmem>>, %arg8: memref<1x8x128xf32, #tpu.memory_space<vmem>>, %arg9: memref<1x8x128xf32, #tpu.memory_space<vmem>>, %arg10: memref<128x128xf32, #tpu.memory_space<vmem>>) attributes {dimension_semantics = [#tpu.dimension_semantics<parallel>, #tpu.dimension_semantics<parallel>, #tpu.dimension_semantics<parallel>, #tpu.dimension_semantics<arbitrary>], iteration_bounds = array<i64: 1, 1, 1, 1>, scalar_prefetch = 0 : i64, scratch_operands = 1 : i64, tpu.core_type = #tpu.core_type<tc>, window_params = [{transform_indices = @transform_0, window_bounds = array<i64: 1, 128, 128>}, {transform_indices = @transform_1, window_bounds = array<i64: 1, 128, 128>}, {transform_indices = @transform_2, window_bounds = array<i64: 1, 128>}, {transform_indices = @transform_3, window_bounds = array<i64: 1, 128, 128>}, {transform_indices = @transform_4, window_bounds = array<i64: 1, 8, 128>}, {transform_indices = @transform_5, window_bounds = array<i64: 1, 8, 128>}]} {
    %c0_i32 = arith.constant 0 : i32
    %0 = arith.cmpi eq, %arg3, %c0_i32 : i32
    %1 = arith.extui %0 : i1 to i32
    %c0_i32_0 = arith.constant 0 : i32
    %2 = arith.cmpi ne, %1, %c0_i32_0 : i32
    scf.if %2 {
      %cst_12 = arith.constant 0.000000e+00 : f32
      %14 = vector.broadcast %cst_12 : f32 to vector<128x128xf32>
      %c0_13 = arith.constant 0 : index
      %c0_14 = arith.constant 0 : index
      %15 = vector.load %arg10[%c0_13, %c0_14] : memref<128x128xf32, #tpu.memory_space<vmem>>, vector<128x128xf32>
      tpu.vector_store %arg10[%c0_13, %c0_14], %14 {strides = array<i32>} : memref<128x128xf32, #tpu.memory_space<vmem>>, vector<128x128xf32>,
    } else {
    }
    %c0 = arith.constant 0 : index
    %c0_1 = arith.constant 0 : index
    %c0_2 = arith.constant 0 : index
    %3 = vector.load %arg4[%c0, %c0_1, %c0_2] : memref<1x128x128xbf16, #tpu.memory_space<vmem>>, vector<1x128x128xbf16>
    %4 = vector.shape_cast %3 : vector<1x128x128xbf16> to vector<128x128xbf16>
    %c0_3 = arith.constant 0 : index
    %c0_4 = arith.constant 0 : index
    %5 = vector.load %arg10[%c0_3, %c0_4] : memref<128x128xf32, #tpu.memory_space<vmem>>, vector<128x128xf32>
    %c0_5 = arith.constant 0 : index
    %c0_6 = arith.constant 0 : index
    %c0_7 = arith.constant 0 : index
    %6 = vector.load %arg5[%c0_5, %c0_6, %c0_7] : memref<1x128x128xbf16, #tpu.memory_space<vmem>>, vector<1x128x128xbf16>
    %7 = vector.shape_cast %6 : vector<1x128x128xbf16> to vector<128x128xbf16>
    %cst = arith.constant dense<0.000000e+00> : vector<128x128xf32>
    %8 = tpu.matmul %4, %7, %cst {dimension_numbers = #tpu.dot_dimension_numbers<[1], [0], [0], [1], [0, 0, 1, 1], [], []>} : vector<128x128xbf16>, vector<128x128xbf16>, vector<128x128xf32> -> vector<128x128xf32>
    %9 = arith.addf %5, %8 : vector<128x128xf32>
    %c0_8 = arith.constant 0 : index
    %c0_9 = arith.constant 0 : index
    %10 = vector.load %arg10[%c0_8, %c0_9] : memref<128x128xf32, #tpu.memory_space<vmem>>, vector<128x128xf32>
    tpu.vector_store %arg10[%c0_8, %c0_9], %9 {strides = array<i32>} : memref<128x128xf32, #tpu.memory_space<vmem>>, vector<128x128xf32>,
    %c0_i32_10 = arith.constant 0 : i32
    %11 = arith.cmpi eq, %arg3, %c0_i32_10 : i32
    %12 = arith.extui %11 : i1 to i32
    %c0_i32_11 = arith.constant 0 : i32
    %13 = arith.cmpi ne, %12, %c0_i32_11 : i32
    scf.if %13 {
      %c0_12 = arith.constant 0 : index
      %c0_13 = arith.constant 0 : index
      %14 = vector.load %arg10[%c0_12, %c0_13] : memref<128x128xf32, #tpu.memory_space<vmem>>, vector<128x128xf32>
      %cst_14 = arith.constant dense<0.000000e+00> : vector<128xf32>
      %15 = vector.multi_reduction <add>, %14, %cst_14 [0] : vector<128x128xf32> to vector<128xf32>
      %16 = vector.shape_cast %15 : vector<128xf32> to vector<1x128xf32>
      %17 = arith.mulf %14, %14 : vector<128x128xf32>
      %cst_15 = arith.constant dense<0.000000e+00> : vector<128xf32>
      %18 = vector.multi_reduction <add>, %17, %cst_15 [0] : vector<128x128xf32> to vector<128xf32>
      %19 = vector.shape_cast %18 : vector<128xf32> to vector<1x128xf32>
      %20 = vector.shape_cast %16 : vector<1x128xf32> to vector<1x128xf32>
      %21 = vector.broadcast %20 : vector<1x128xf32> to vector<8x128xf32>
      %c0_16 = arith.constant 0 : index
      %c0_17 = arith.constant 0 : index
      %c0_18 = arith.constant 0 : index
      %22 = vector.load %arg8[%c0_16, %c0_17, %c0_18] : memref<1x8x128xf32, #tpu.memory_space<vmem>>, vector<1x8x128xf32>
      %23 = vector.shape_cast %22 : vector<1x8x128xf32> to vector<8x128xf32>
      %24 = vector.shape_cast %21 : vector<8x128xf32> to vector<1x8x128xf32>
      tpu.vector_store %arg8[%c0_16, %c0_17, %c0_18], %24 {strides = array<i32>} : memref<1x8x128xf32, #tpu.memory_space<vmem>>, vector<1x8x128xf32>,
      %25 = vector.shape_cast %19 : vector<1x128xf32> to vector<1x128xf32>
      %26 = vector.broadcast %25 : vector<1x128xf32> to vector<8x128xf32>
      %c0_19 = arith.constant 0 : index
      %c0_20 = arith.constant 0 : index
      %c0_21 = arith.constant 0 : index
      %27 = vector.load %arg9[%c0_19, %c0_20, %c0_21] : memref<1x8x128xf32, #tpu.memory_space<vmem>>, vector<1x8x128xf32>
      %28 = vector.shape_cast %27 : vector<1x8x128xf32> to vector<8x128xf32>
      %29 = vector.shape_cast %26 : vector<8x128xf32> to vector<1x8x128xf32>
      tpu.vector_store %arg9[%c0_19, %c0_20, %c0_21], %29 {strides = array<i32>} : memref<1x8x128xf32, #tpu.memory_space<vmem>>, vector<1x8x128xf32>,
      %c0_22 = arith.constant 0 : index
      %c0_23 = arith.constant 0 : index
      %30 = vector.load %arg6[%c0_22, %c0_23] : memref<1x128xf32, #tpu.memory_space<vmem>>, vector<1x128xf32>
      %31 = vector.broadcast %30 : vector<1x128xf32> to vector<128x128xf32>
      %32 = arith.addf %14, %31 : vector<128x128xf32>
      %33 = arith.truncf %32 : vector<128x128xf32> to vector<128x128xbf16>
      %c0_24 = arith.constant 0 : index
      %c0_25 = arith.constant 0 : index
      %c0_26 = arith.constant 0 : index
      %34 = vector.load %arg7[%c0_24, %c0_25, %c0_26] : memref<1x128x128xbf16, #tpu.memory_space<vmem>>, vector<1x128x128xbf16>
      %35 = vector.shape_cast %34 : vector<1x128x128xbf16> to vector<128x128xbf16>
      %36 = vector.shape_cast %33 : vector<128x128xbf16> to vector<1x128x128xbf16>
      tpu.vector_store %arg7[%c0_24, %c0_25, %c0_26], %36 {strides = array<i32>} : memref<1x128x128xbf16, #tpu.memory_space<vmem>>, vector<1x128x128xbf16>,
    } else {
    }
    return
  }
  func.func @transform_0(%arg0: i32, %arg1: i32, %arg2: i32, %arg3: i32) -> (i32, i32, i32) {
    %c0_i32 = arith.constant 0 : i32
    return %arg0, %arg1, %arg3 : i32, i32, i32
  }
  func.func @transform_1(%arg0: i32, %arg1: i32, %arg2: i32, %arg3: i32) -> (i32, i32, i32) {
    %c0_i32 = arith.constant 0 : i32
    return %arg0, %arg3, %arg2 : i32, i32, i32
  }
  func.func @transform_2(%arg0: i32, %arg1: i32, %arg2: i32, %arg3: i32) -> (i32, i32) {
    %c0_i32 = arith.constant 0 : i32
    %c0_i32_0 = arith.constant 0 : i32
    return %c0_i32, %arg2 : i32, i32
  }
  func.func @transform_3(%arg0: i32, %arg1: i32, %arg2: i32, %arg3: i32) -> (i32, i32, i32) {
    %c0_i32 = arith.constant 0 : i32
    return %arg0, %arg1, %arg2 : i32, i32, i32
  }
  func.func @transform_4(%arg0: i32, %arg1: i32, %arg2: i32, %arg3: i32) -> (i32, i32, i32) {
    %c0_i32 = arith.constant 0 : i32
    return %arg0, %arg1, %arg2 : i32, i32, i32
  }
  func.func @transform_5(%arg0: i32, %arg1: i32, %arg2: i32, %arg3: i32) -> (i32, i32, i32) {
    %c0_i32 = arith.constant 0 : i32
    return %arg0, %arg1, %arg2 : i32, i32, i32
  }
}

module attributes {stable_mosaic.version = 11 : i64} {
  func.func @_fused_matmul_kernel(%arg0: i32, %arg1: i32, %arg2: i32, %arg3: i32, %arg4: memref<1x32x128xbf16, #tpu.memory_space<vmem>>, %arg5: memref<1x128x128xbf16, #tpu.memory_space<vmem>>, %arg6: memref<1x128xf32, #tpu.memory_space<vmem>>, %arg7: memref<1x32x128xf32, #tpu.memory_space<vmem>>, %arg8: memref<1x8x128xf32, #tpu.memory_space<vmem>>, %arg9: memref<1x8x128xf32, #tpu.memory_space<vmem>>, %arg10: memref<32x128xf32, #tpu.memory_space<vmem>>) attributes {dimension_semantics = [#tpu.dimension_semantics<parallel>, #tpu.dimension_semantics<parallel>, #tpu.dimension_semantics<parallel>, #tpu.dimension_semantics<arbitrary>], iteration_bounds = array<i64: 1, 1, 1, 1>, scalar_prefetch = 0 : i64, scratch_operands = 1 : i64, tpu.core_type = #tpu.core_type<tc>, window_params = [{transform_indices = @transform_0, window_bounds = array<i64: 1, 32, 128>}, {transform_indices = @transform_1, window_bounds = array<i64: 1, 128, 128>}, {transform_indices = @transform_2, window_bounds = array<i64: 1, 128>}, {transform_indices = @transform_3, window_bounds = array<i64: 1, 32, 128>}, {transform_indices = @transform_4, window_bounds = array<i64: 1, 8, 128>}, {transform_indices = @transform_5, window_bounds = array<i64: 1, 8, 128>}]} {
    %c0_i32 = arith.constant 0 : i32
    %0 = arith.cmpi eq, %arg3, %c0_i32 : i32
    %1 = arith.extui %0 : i1 to i32
    %c0_i32_0 = arith.constant 0 : i32
    %2 = arith.cmpi ne, %1, %c0_i32_0 : i32
    scf.if %2 {
      %cst_14 = arith.constant 0.000000e+00 : f32
      %19 = vector.broadcast %cst_14 : f32 to vector<32x128xf32>
      %c0_15 = arith.constant 0 : index
      %c0_16 = arith.constant 0 : index
      %20 = vector.load %arg10[%c0_15, %c0_16] : memref<32x128xf32, #tpu.memory_space<vmem>>, vector<32x128xf32>
      tpu.vector_store %arg10[%c0_15, %c0_16], %19 {strides = array<i32>} : memref<32x128xf32, #tpu.memory_space<vmem>>, vector<32x128xf32>,
    } else {
    }
    %c0 = arith.constant 0 : index
    %c0_1 = arith.constant 0 : index
    %c0_2 = arith.constant 0 : index
    %3 = vector.load %arg4[%c0, %c0_1, %c0_2] : memref<1x32x128xbf16, #tpu.memory_space<vmem>>, vector<1x32x128xbf16>
    %4 = vector.shape_cast %3 : vector<1x32x128xbf16> to vector<32x128xbf16>
    %cst = arith.constant 0.000000e+00 : bf16
    %5 = vector.broadcast %cst : bf16 to vector<32x128xbf16>
    %6 = arith.cmpf oge, %4, %5 : vector<32x128xbf16>
    %cst_3 = arith.constant 2.001950e-01 : bf16
    %7 = vector.broadcast %cst_3 : bf16 to vector<32x128xbf16>
    %8 = arith.mulf %4, %7 : vector<32x128xbf16>
    %9 = arith.select %6, %4, %8 : vector<32x128xi1>, vector<32x128xbf16>
    %c0_4 = arith.constant 0 : index
    %c0_5 = arith.constant 0 : index
    %10 = vector.load %arg10[%c0_4, %c0_5] : memref<32x128xf32, #tpu.memory_space<vmem>>, vector<32x128xf32>
    %c0_6 = arith.constant 0 : index
    %c0_7 = arith.constant 0 : index
    %c0_8 = arith.constant 0 : index
    %11 = vector.load %arg5[%c0_6, %c0_7, %c0_8] : memref<1x128x128xbf16, #tpu.memory_space<vmem>>, vector<1x128x128xbf16>
    %12 = vector.shape_cast %11 : vector<1x128x128xbf16> to vector<128x128xbf16>
    %cst_9 = arith.constant dense<0.000000e+00> : vector<32x128xf32>
    %13 = tpu.matmul %9, %12, %cst_9 {dimension_numbers = #tpu.dot_dimension_numbers<[1], [0], [0], [1], [0, 0, 1, 1], [], []>} : vector<32x128xbf16>, vector<128x128xbf16>, vector<32x128xf32> -> vector<32x128xf32>
    %14 = arith.addf %10, %13 : vector<32x128xf32>
    %c0_10 = arith.constant 0 : index
    %c0_11 = arith.constant 0 : index
    %15 = vector.load %arg10[%c0_10, %c0_11] : memref<32x128xf32, #tpu.memory_space<vmem>>, vector<32x128xf32>
    tpu.vector_store %arg10[%c0_10, %c0_11], %14 {strides = array<i32>} : memref<32x128xf32, #tpu.memory_space<vmem>>, vector<32x128xf32>,
    %c0_i32_12 = arith.constant 0 : i32
    %16 = arith.cmpi eq, %arg3, %c0_i32_12 : i32
    %17 = arith.extui %16 : i1 to i32
    %c0_i32_13 = arith.constant 0 : i32
    %18 = arith.cmpi ne, %17, %c0_i32_13 : i32
    scf.if %18 {
      %c0_14 = arith.constant 0 : index
      %c0_15 = arith.constant 0 : index
      %19 = vector.load %arg10[%c0_14, %c0_15] : memref<32x128xf32, #tpu.memory_space<vmem>>, vector<32x128xf32>
      %cst_16 = arith.constant dense<0.000000e+00> : vector<128xf32>
      %20 = vector.multi_reduction <add>, %19, %cst_16 [0] : vector<32x128xf32> to vector<128xf32>
      %21 = vector.shape_cast %20 : vector<128xf32> to vector<1x128xf32>
      %22 = arith.mulf %19, %19 : vector<32x128xf32>
      %cst_17 = arith.constant dense<0.000000e+00> : vector<128xf32>
      %23 = vector.multi_reduction <add>, %22, %cst_17 [0] : vector<32x128xf32> to vector<128xf32>
      %24 = vector.shape_cast %23 : vector<128xf32> to vector<1x128xf32>
      %25 = vector.shape_cast %21 : vector<1x128xf32> to vector<1x128xf32>
      %26 = vector.broadcast %25 : vector<1x128xf32> to vector<8x128xf32>
      %c0_18 = arith.constant 0 : index
      %c0_19 = arith.constant 0 : index
      %c0_20 = arith.constant 0 : index
      %27 = vector.load %arg8[%c0_18, %c0_19, %c0_20] : memref<1x8x128xf32, #tpu.memory_space<vmem>>, vector<1x8x128xf32>
      %28 = vector.shape_cast %27 : vector<1x8x128xf32> to vector<8x128xf32>
      %29 = vector.shape_cast %26 : vector<8x128xf32> to vector<1x8x128xf32>
      tpu.vector_store %arg8[%c0_18, %c0_19, %c0_20], %29 {strides = array<i32>} : memref<1x8x128xf32, #tpu.memory_space<vmem>>, vector<1x8x128xf32>,
      %30 = vector.shape_cast %24 : vector<1x128xf32> to vector<1x128xf32>
      %31 = vector.broadcast %30 : vector<1x128xf32> to vector<8x128xf32>
      %c0_21 = arith.constant 0 : index
      %c0_22 = arith.constant 0 : index
      %c0_23 = arith.constant 0 : index
      %32 = vector.load %arg9[%c0_21, %c0_22, %c0_23] : memref<1x8x128xf32, #tpu.memory_space<vmem>>, vector<1x8x128xf32>
      %33 = vector.shape_cast %32 : vector<1x8x128xf32> to vector<8x128xf32>
      %34 = vector.shape_cast %31 : vector<8x128xf32> to vector<1x8x128xf32>
      tpu.vector_store %arg9[%c0_21, %c0_22, %c0_23], %34 {strides = array<i32>} : memref<1x8x128xf32, #tpu.memory_space<vmem>>, vector<1x8x128xf32>,
      %c0_24 = arith.constant 0 : index
      %c0_25 = arith.constant 0 : index
      %35 = vector.load %arg6[%c0_24, %c0_25] : memref<1x128xf32, #tpu.memory_space<vmem>>, vector<1x128xf32>
      %36 = vector.broadcast %35 : vector<1x128xf32> to vector<32x128xf32>
      %37 = arith.addf %19, %36 : vector<32x128xf32>
      %c0_26 = arith.constant 0 : index
      %c0_27 = arith.constant 0 : index
      %c0_28 = arith.constant 0 : index
      %38 = vector.load %arg7[%c0_26, %c0_27, %c0_28] : memref<1x32x128xf32, #tpu.memory_space<vmem>>, vector<1x32x128xf32>
      %39 = vector.shape_cast %38 : vector<1x32x128xf32> to vector<32x128xf32>
      %40 = vector.shape_cast %37 : vector<32x128xf32> to vector<1x32x128xf32>
      tpu.vector_store %arg7[%c0_26, %c0_27, %c0_28], %40 {strides = array<i32>} : memref<1x32x128xf32, #tpu.memory_space<vmem>>, vector<1x32x128xf32>,
    } else {
    }
    return
  }
  func.func @transform_0(%arg0: i32, %arg1: i32, %arg2: i32, %arg3: i32) -> (i32, i32, i32) {
    %c0_i32 = arith.constant 0 : i32
    return %arg0, %arg1, %arg3 : i32, i32, i32
  }
  func.func @transform_1(%arg0: i32, %arg1: i32, %arg2: i32, %arg3: i32) -> (i32, i32, i32) {
    %c0_i32 = arith.constant 0 : i32
    return %arg0, %arg3, %arg2 : i32, i32, i32
  }
  func.func @transform_2(%arg0: i32, %arg1: i32, %arg2: i32, %arg3: i32) -> (i32, i32) {
    %c0_i32 = arith.constant 0 : i32
    %c0_i32_0 = arith.constant 0 : i32
    return %c0_i32, %arg2 : i32, i32
  }
  func.func @transform_3(%arg0: i32, %arg1: i32, %arg2: i32, %arg3: i32) -> (i32, i32, i32) {
    %c0_i32 = arith.constant 0 : i32
    return %arg0, %arg1, %arg2 : i32, i32, i32
  }
  func.func @transform_4(%arg0: i32, %arg1: i32, %arg2: i32, %arg3: i32) -> (i32, i32, i32) {
    %c0_i32 = arith.constant 0 : i32
    return %arg0, %arg1, %arg2 : i32, i32, i32
  }
  func.func @transform_5(%arg0: i32, %arg1: i32, %arg2: i32, %arg3: i32) -> (i32, i32, i32) {
    %c0_i32 = arith.constant 0 : i32
    return %arg0, %arg1, %arg2 : i32, i32, i32
  }
}

module attributes {stable_mosaic.version = 11 : i64} {
  func.func @_fused_matmul_kernel(%arg0: i32, %arg1: i32, %arg2: i32, %arg3: i32, %arg4: memref<1x8x256xbf16, #tpu.memory_space<vmem>>, %arg5: memref<1x256x128xbf16, #tpu.memory_space<vmem>>, %arg6: memref<1x128xf32, #tpu.memory_space<vmem>>, %arg7: memref<1x8x128xf32, #tpu.memory_space<vmem>>, %arg8: memref<1x8x128xf32, #tpu.memory_space<vmem>>, %arg9: memref<1x8x128xf32, #tpu.memory_space<vmem>>, %arg10: memref<8x128xf32, #tpu.memory_space<vmem>>) attributes {dimension_semantics = [#tpu.dimension_semantics<parallel>, #tpu.dimension_semantics<parallel>, #tpu.dimension_semantics<parallel>, #tpu.dimension_semantics<arbitrary>], iteration_bounds = array<i64: 1, 1, 1, 1>, scalar_prefetch = 0 : i64, scratch_operands = 1 : i64, tpu.core_type = #tpu.core_type<tc>, window_params = [{transform_indices = @transform_0, window_bounds = array<i64: 1, 8, 256>}, {transform_indices = @transform_1, window_bounds = array<i64: 1, 256, 128>}, {transform_indices = @transform_2, window_bounds = array<i64: 1, 128>}, {transform_indices = @transform_3, window_bounds = array<i64: 1, 8, 128>}, {transform_indices = @transform_4, window_bounds = array<i64: 1, 8, 128>}, {transform_indices = @transform_5, window_bounds = array<i64: 1, 8, 128>}]} {
    %c0_i32 = arith.constant 0 : i32
    %0 = arith.cmpi eq, %arg3, %c0_i32 : i32
    %1 = arith.extui %0 : i1 to i32
    %c0_i32_0 = arith.constant 0 : i32
    %2 = arith.cmpi ne, %1, %c0_i32_0 : i32
    scf.if %2 {
      %cst_14 = arith.constant 0.000000e+00 : f32
      %19 = vector.broadcast %cst_14 : f32 to vector<8x128xf32>
      %c0_15 = arith.constant 0 : index
      %c0_16 = arith.constant 0 : index
      %20 = vector.load %arg10[%c0_15, %c0_16] : memref<8x128xf32, #tpu.memory_space<vmem>>, vector<8x128xf32>
      tpu.vector_store %arg10[%c0_15, %c0_16], %19 {strides = array<i32>} : memref<8x128xf32, #tpu.memory_space<vmem>>, vector<8x128xf32>,
    } else {
    }
    %c0 = arith.constant 0 : index
    %c0_1 = arith.constant 0 : index
    %c0_2 = arith.constant 0 : index
    %3 = vector.load %arg4[%c0, %c0_1, %c0_2] : memref<1x8x256xbf16, #tpu.memory_space<vmem>>, vector<1x8x256xbf16>
    %4 = vector.shape_cast %3 : vector<1x8x256xbf16> to vector<8x256xbf16>
    %cst = arith.constant 0.000000e+00 : bf16
    %5 = vector.broadcast %cst : bf16 to vector<8x256xbf16>
    %6 = arith.cmpf oge, %4, %5 : vector<8x256xbf16>
    %cst_3 = arith.constant 2.001950e-01 : bf16
    %7 = vector.broadcast %cst_3 : bf16 to vector<8x256xbf16>
    %8 = arith.mulf %4, %7 : vector<8x256xbf16>
    %9 = arith.select %6, %4, %8 : vector<8x256xi1>, vector<8x256xbf16>
    %c0_4 = arith.constant 0 : index
    %c0_5 = arith.constant 0 : index
    %10 = vector.load %arg10[%c0_4, %c0_5] : memref<8x128xf32, #tpu.memory_space<vmem>>, vector<8x128xf32>
    %c0_6 = arith.constant 0 : index
    %c0_7 = arith.constant 0 : index
    %c0_8 = arith.constant 0 : index
    %11 = vector.load %arg5[%c0_6, %c0_7, %c0_8] : memref<1x256x128xbf16, #tpu.memory_space<vmem>>, vector<1x256x128xbf16>
    %12 = vector.shape_cast %11 : vector<1x256x128xbf16> to vector<256x128xbf16>
    %cst_9 = arith.constant dense<0.000000e+00> : vector<8x128xf32>
    %13 = tpu.matmul %9, %12, %cst_9 {dimension_numbers = #tpu.dot_dimension_numbers<[1], [0], [0], [1], [0, 0, 1, 1], [], []>} : vector<8x256xbf16>, vector<256x128xbf16>, vector<8x128xf32> -> vector<8x128xf32>
    %14 = arith.addf %10, %13 : vector<8x128xf32>
    %c0_10 = arith.constant 0 : index
    %c0_11 = arith.constant 0 : index
    %15 = vector.load %arg10[%c0_10, %c0_11] : memref<8x128xf32, #tpu.memory_space<vmem>>, vector<8x128xf32>
    tpu.vector_store %arg10[%c0_10, %c0_11], %14 {strides = array<i32>} : memref<8x128xf32, #tpu.memory_space<vmem>>, vector<8x128xf32>,
    %c0_i32_12 = arith.constant 0 : i32
    %16 = arith.cmpi eq, %arg3, %c0_i32_12 : i32
    %17 = arith.extui %16 : i1 to i32
    %c0_i32_13 = arith.constant 0 : i32
    %18 = arith.cmpi ne, %17, %c0_i32_13 : i32
    scf.if %18 {
      %c0_14 = arith.constant 0 : index
      %c0_15 = arith.constant 0 : index
      %19 = vector.load %arg10[%c0_14, %c0_15] : memref<8x128xf32, #tpu.memory_space<vmem>>, vector<8x128xf32>
      %cst_16 = arith.constant dense<0.000000e+00> : vector<128xf32>
      %20 = vector.multi_reduction <add>, %19, %cst_16 [0] : vector<8x128xf32> to vector<128xf32>
      %21 = vector.shape_cast %20 : vector<128xf32> to vector<1x128xf32>
      %22 = arith.mulf %19, %19 : vector<8x128xf32>
      %cst_17 = arith.constant dense<0.000000e+00> : vector<128xf32>
      %23 = vector.multi_reduction <add>, %22, %cst_17 [0] : vector<8x128xf32> to vector<128xf32>
      %24 = vector.shape_cast %23 : vector<128xf32> to vector<1x128xf32>
      %25 = vector.shape_cast %21 : vector<1x128xf32> to vector<1x128xf32>
      %26 = vector.broadcast %25 : vector<1x128xf32> to vector<8x128xf32>
      %c0_18 = arith.constant 0 : index
      %c0_19 = arith.constant 0 : index
      %c0_20 = arith.constant 0 : index
      %27 = vector.load %arg8[%c0_18, %c0_19, %c0_20] : memref<1x8x128xf32, #tpu.memory_space<vmem>>, vector<1x8x128xf32>
      %28 = vector.shape_cast %27 : vector<1x8x128xf32> to vector<8x128xf32>
      %29 = vector.shape_cast %26 : vector<8x128xf32> to vector<1x8x128xf32>
      tpu.vector_store %arg8[%c0_18, %c0_19, %c0_20], %29 {strides = array<i32>} : memref<1x8x128xf32, #tpu.memory_space<vmem>>, vector<1x8x128xf32>,
      %30 = vector.shape_cast %24 : vector<1x128xf32> to vector<1x128xf32>
      %31 = vector.broadcast %30 : vector<1x128xf32> to vector<8x128xf32>
      %c0_21 = arith.constant 0 : index
      %c0_22 = arith.constant 0 : index
      %c0_23 = arith.constant 0 : index
      %32 = vector.load %arg9[%c0_21, %c0_22, %c0_23] : memref<1x8x128xf32, #tpu.memory_space<vmem>>, vector<1x8x128xf32>
      %33 = vector.shape_cast %32 : vector<1x8x128xf32> to vector<8x128xf32>
      %34 = vector.shape_cast %31 : vector<8x128xf32> to vector<1x8x128xf32>
      tpu.vector_store %arg9[%c0_21, %c0_22, %c0_23], %34 {strides = array<i32>} : memref<1x8x128xf32, #tpu.memory_space<vmem>>, vector<1x8x128xf32>,
      %c0_24 = arith.constant 0 : index
      %c0_25 = arith.constant 0 : index
      %35 = vector.load %arg6[%c0_24, %c0_25] : memref<1x128xf32, #tpu.memory_space<vmem>>, vector<1x128xf32>
      %36 = vector.broadcast %35 : vector<1x128xf32> to vector<8x128xf32>
      %37 = arith.addf %19, %36 : vector<8x128xf32>
      %c0_26 = arith.constant 0 : index
      %c0_27 = arith.constant 0 : index
      %c0_28 = arith.constant 0 : index
      %38 = vector.load %arg7[%c0_26, %c0_27, %c0_28] : memref<1x8x128xf32, #tpu.memory_space<vmem>>, vector<1x8x128xf32>
      %39 = vector.shape_cast %38 : vector<1x8x128xf32> to vector<8x128xf32>
      %40 = vector.shape_cast %37 : vector<8x128xf32> to vector<1x8x128xf32>
      tpu.vector_store %arg7[%c0_26, %c0_27, %c0_28], %40 {strides = array<i32>} : memref<1x8x128xf32, #tpu.memory_space<vmem>>, vector<1x8x128xf32>,
    } else {
    }
    return
  }
  func.func @transform_0(%arg0: i32, %arg1: i32, %arg2: i32, %arg3: i32) -> (i32, i32, i32) {
    %c0_i32 = arith.constant 0 : i32
    return %arg0, %arg1, %arg3 : i32, i32, i32
  }
  func.func @transform_1(%arg0: i32, %arg1: i32, %arg2: i32, %arg3: i32) -> (i32, i32, i32) {
    %c0_i32 = arith.constant 0 : i32
    return %arg0, %arg3, %arg2 : i32, i32, i32
  }
  func.func @transform_2(%arg0: i32, %arg1: i32, %arg2: i32, %arg3: i32) -> (i32, i32) {
    %c0_i32 = arith.constant 0 : i32
    %c0_i32_0 = arith.constant 0 : i32
    return %c0_i32, %arg2 : i32, i32
  }
  func.func @transform_3(%arg0: i32, %arg1: i32, %arg2: i32, %arg3: i32) -> (i32, i32, i32) {
    %c0_i32 = arith.constant 0 : i32
    return %arg0, %arg1, %arg2 : i32, i32, i32
  }
  func.func @transform_4(%arg0: i32, %arg1: i32, %arg2: i32, %arg3: i32) -> (i32, i32, i32) {
    %c0_i32 = arith.constant 0 : i32
    return %arg0, %arg1, %arg2 : i32, i32, i32
  }
  func.func @transform_5(%arg0: i32, %arg1: i32, %arg2: i32, %arg3: i32) -> (i32, i32, i32) {
    %c0_i32 = arith.constant 0 : i32
    return %arg0, %arg1, %arg2 : i32, i32, i32
  }
}

module attributes {stable_mosaic.version = 11 : i64} {
  func.func @_fused_matmul_kernel(%arg0: i32, %arg1: i32, %arg2: i32, %arg3: i32, %arg4: memref<1x8x256xbf16, #tpu.memory_space<vmem>>, %arg5: memref<1x256x128xbf16, #tpu.memory_space<vmem>>, %arg6: memref<1x128xf32, #tpu.memory_space<vmem>>, %arg7: memref<1x8x128xbf16, #tpu.memory_space<vmem>>, %arg8: memref<1x8x128xf32, #tpu.memory_space<vmem>>, %arg9: memref<1x8x128xf32, #tpu.memory_space<vmem>>, %arg10: memref<8x128xf32, #tpu.memory_space<vmem>>) attributes {dimension_semantics = [#tpu.dimension_semantics<parallel>, #tpu.dimension_semantics<parallel>, #tpu.dimension_semantics<parallel>, #tpu.dimension_semantics<arbitrary>], iteration_bounds = array<i64: 1, 1, 1, 2>, scalar_prefetch = 0 : i64, scratch_operands = 1 : i64, tpu.core_type = #tpu.core_type<tc>, window_params = [{transform_indices = @transform_0, window_bounds = array<i64: 1, 8, 256>}, {transform_indices = @transform_1, window_bounds = array<i64: 1, 256, 128>}, {transform_indices = @transform_2, window_bounds = array<i64: 1, 128>}, {transform_indices = @transform_3, window_bounds = array<i64: 1, 8, 128>}, {transform_indices = @transform_4, window_bounds = array<i64: 1, 8, 128>}, {transform_indices = @transform_5, window_bounds = array<i64: 1, 8, 128>}]} {
    %c0_i32 = arith.constant 0 : i32
    %0 = arith.cmpi eq, %arg3, %c0_i32 : i32
    %1 = arith.extui %0 : i1 to i32
    %c0_i32_0 = arith.constant 0 : i32
    %2 = arith.cmpi ne, %1, %c0_i32_0 : i32
    scf.if %2 {
      %cst_13 = arith.constant 0.000000e+00 : f32
      %19 = vector.broadcast %cst_13 : f32 to vector<8x128xf32>
      %c0_14 = arith.constant 0 : index
      %c0_15 = arith.constant 0 : index
      %20 = vector.load %arg10[%c0_14, %c0_15] : memref<8x128xf32, #tpu.memory_space<vmem>>, vector<8x128xf32>
      tpu.vector_store %arg10[%c0_14, %c0_15], %19 {strides = array<i32>} : memref<8x128xf32, #tpu.memory_space<vmem>>, vector<8x128xf32>,
    } else {
    }
    %c0 = arith.constant 0 : index
    %c0_1 = arith.constant 0 : index
    %c0_2 = arith.constant 0 : index
    %3 = vector.load %arg4[%c0, %c0_1, %c0_2] : memref<1x8x256xbf16, #tpu.memory_space<vmem>>, vector<1x8x256xbf16>
    %4 = vector.shape_cast %3 : vector<1x8x256xbf16> to vector<8x256xbf16>
    %cst = arith.constant 0.000000e+00 : bf16
    %5 = vector.broadcast %cst : bf16 to vector<8x256xbf16>
    %6 = arith.cmpf oge, %4, %5 : vector<8x256xbf16>
    %cst_3 = arith.constant 2.001950e-01 : bf16
    %7 = vector.broadcast %cst_3 : bf16 to vector<8x256xbf16>
    %8 = arith.mulf %4, %7 : vector<8x256xbf16>
    %9 = arith.select %6, %4, %8 : vector<8x256xi1>, vector<8x256xbf16>
    %c0_4 = arith.constant 0 : index
    %c0_5 = arith.constant 0 : index
    %10 = vector.load %arg10[%c0_4, %c0_5] : memref<8x128xf32, #tpu.memory_space<vmem>>, vector<8x128xf32>
    %c0_6 = arith.constant 0 : index
    %c0_7 = arith.constant 0 : index
    %c0_8 = arith.constant 0 : index
    %11 = vector.load %arg5[%c0_6, %c0_7, %c0_8] : memref<1x256x128xbf16, #tpu.memory_space<vmem>>, vector<1x256x128xbf16>
    %12 = vector.shape_cast %11 : vector<1x256x128xbf16> to vector<256x128xbf16>
    %cst_9 = arith.constant dense<0.000000e+00> : vector<8x128xf32>
    %13 = tpu.matmul %9, %12, %cst_9 {dimension_numbers = #tpu.dot_dimension_numbers<[1], [0], [0], [1], [0, 0, 1, 1], [], []>} : vector<8x256xbf16>, vector<256x128xbf16>, vector<8x128xf32> -> vector<8x128xf32>
    %14 = arith.addf %10, %13 : vector<8x128xf32>
    %c0_10 = arith.constant 0 : index
    %c0_11 = arith.constant 0 : index
    %15 = vector.load %arg10[%c0_10, %c0_11] : memref<8x128xf32, #tpu.memory_space<vmem>>, vector<8x128xf32>
    tpu.vector_store %arg10[%c0_10, %c0_11], %14 {strides = array<i32>} : memref<8x128xf32, #tpu.memory_space<vmem>>, vector<8x128xf32>,
    %c1_i32 = arith.constant 1 : i32
    %16 = arith.cmpi eq, %arg3, %c1_i32 : i32
    %17 = arith.extui %16 : i1 to i32
    %c0_i32_12 = arith.constant 0 : i32
    %18 = arith.cmpi ne, %17, %c0_i32_12 : i32
    scf.if %18 {
      %c0_13 = arith.constant 0 : index
      %c0_14 = arith.constant 0 : index
      %19 = vector.load %arg10[%c0_13, %c0_14] : memref<8x128xf32, #tpu.memory_space<vmem>>, vector<8x128xf32>
      %cst_15 = arith.constant dense<0.000000e+00> : vector<128xf32>
      %20 = vector.multi_reduction <add>, %19, %cst_15 [0] : vector<8x128xf32> to vector<128xf32>
      %21 = vector.shape_cast %20 : vector<128xf32> to vector<1x128xf32>
      %22 = arith.mulf %19, %19 : vector<8x128xf32>
      %cst_16 = arith.constant dense<0.000000e+00> : vector<128xf32>
      %23 = vector.multi_reduction <add>, %22, %cst_16 [0] : vector<8x128xf32> to vector<128xf32>
      %24 = vector.shape_cast %23 : vector<128xf32> to vector<1x128xf32>
      %25 = vector.shape_cast %21 : vector<1x128xf32> to vector<1x128xf32>
      %26 = vector.broadcast %25 : vector<1x128xf32> to vector<8x128xf32>
      %c0_17 = arith.constant 0 : index
      %c0_18 = arith.constant 0 : index
      %c0_19 = arith.constant 0 : index
      %27 = vector.load %arg8[%c0_17, %c0_18, %c0_19] : memref<1x8x128xf32, #tpu.memory_space<vmem>>, vector<1x8x128xf32>
      %28 = vector.shape_cast %27 : vector<1x8x128xf32> to vector<8x128xf32>
      %29 = vector.shape_cast %26 : vector<8x128xf32> to vector<1x8x128xf32>
      tpu.vector_store %arg8[%c0_17, %c0_18, %c0_19], %29 {strides = array<i32>} : memref<1x8x128xf32, #tpu.memory_space<vmem>>, vector<1x8x128xf32>,
      %30 = vector.shape_cast %24 : vector<1x128xf32> to vector<1x128xf32>
      %31 = vector.broadcast %30 : vector<1x128xf32> to vector<8x128xf32>
      %c0_20 = arith.constant 0 : index
      %c0_21 = arith.constant 0 : index
      %c0_22 = arith.constant 0 : index
      %32 = vector.load %arg9[%c0_20, %c0_21, %c0_22] : memref<1x8x128xf32, #tpu.memory_space<vmem>>, vector<1x8x128xf32>
      %33 = vector.shape_cast %32 : vector<1x8x128xf32> to vector<8x128xf32>
      %34 = vector.shape_cast %31 : vector<8x128xf32> to vector<1x8x128xf32>
      tpu.vector_store %arg9[%c0_20, %c0_21, %c0_22], %34 {strides = array<i32>} : memref<1x8x128xf32, #tpu.memory_space<vmem>>, vector<1x8x128xf32>,
      %c0_23 = arith.constant 0 : index
      %c0_24 = arith.constant 0 : index
      %35 = vector.load %arg6[%c0_23, %c0_24] : memref<1x128xf32, #tpu.memory_space<vmem>>, vector<1x128xf32>
      %36 = vector.broadcast %35 : vector<1x128xf32> to vector<8x128xf32>
      %37 = arith.addf %19, %36 : vector<8x128xf32>
      %38 = arith.truncf %37 : vector<8x128xf32> to vector<8x128xbf16>
      %c0_25 = arith.constant 0 : index
      %c0_26 = arith.constant 0 : index
      %c0_27 = arith.constant 0 : index
      %39 = vector.load %arg7[%c0_25, %c0_26, %c0_27] : memref<1x8x128xbf16, #tpu.memory_space<vmem>>, vector<1x8x128xbf16>
      %40 = vector.shape_cast %39 : vector<1x8x128xbf16> to vector<8x128xbf16>
      %41 = vector.shape_cast %38 : vector<8x128xbf16> to vector<1x8x128xbf16>
      tpu.vector_store %arg7[%c0_25, %c0_26, %c0_27], %41 {strides = array<i32>} : memref<1x8x128xbf16, #tpu.memory_space<vmem>>, vector<1x8x128xbf16>,
    } else {
    }
    return
  }
  func.func @transform_0(%arg0: i32, %arg1: i32, %arg2: i32, %arg3: i32) -> (i32, i32, i32) {
    %c0_i32 = arith.constant 0 : i32
    return %arg0, %arg1, %arg3 : i32, i32, i32
  }
  func.func @transform_1(%arg0: i32, %arg1: i32, %arg2: i32, %arg3: i32) -> (i32, i32, i32) {
    %c0_i32 = arith.constant 0 : i32
    return %arg0, %arg3, %arg2 : i32, i32, i32
  }
  func.func @transform_2(%arg0: i32, %arg1: i32, %arg2: i32, %arg3: i32) -> (i32, i32) {
    %c0_i32 = arith.constant 0 : i32
    %c0_i32_0 = arith.constant 0 : i32
    return %c0_i32, %arg2 : i32, i32
  }
  func.func @transform_3(%arg0: i32, %arg1: i32, %arg2: i32, %arg3: i32) -> (i32, i32, i32) {
    %c0_i32 = arith.constant 0 : i32
    return %arg0, %arg1, %arg2 : i32, i32, i32
  }
  func.func @transform_4(%arg0: i32, %arg1: i32, %arg2: i32, %arg3: i32) -> (i32, i32, i32) {
    %c0_i32 = arith.constant 0 : i32
    return %arg0, %arg1, %arg2 : i32, i32, i32
  }
  func.func @transform_5(%arg0: i32, %arg1: i32, %arg2: i32, %arg3: i32) -> (i32, i32, i32) {
    %c0_i32 = arith.constant 0 : i32
    return %arg0, %arg1, %arg2 : i32, i32, i32
  }
}

module attributes {stable_mosaic.version = 11 : i64} {
  func.func @_fused_matmul_kernel(%arg0: i32, %arg1: i32, %arg2: i32, %arg3: i32, %arg4: memref<1x8x256xbf16, #tpu.memory_space<vmem>>, %arg5: memref<1x256x128xbf16, #tpu.memory_space<vmem>>, %arg6: memref<1x128xf32, #tpu.memory_space<vmem>>, %arg7: memref<1x8x128xf32, #tpu.memory_space<vmem>>, %arg8: memref<1x8x128xf32, #tpu.memory_space<vmem>>, %arg9: memref<1x8x128xf32, #tpu.memory_space<vmem>>, %arg10: memref<8x128xf32, #tpu.memory_space<vmem>>) attributes {dimension_semantics = [#tpu.dimension_semantics<parallel>, #tpu.dimension_semantics<parallel>, #tpu.dimension_semantics<parallel>, #tpu.dimension_semantics<arbitrary>], iteration_bounds = array<i64: 4, 1, 1, 1>, scalar_prefetch = 0 : i64, scratch_operands = 1 : i64, tpu.core_type = #tpu.core_type<tc>, window_params = [{transform_indices = @transform_0, window_bounds = array<i64: 1, 8, 256>}, {transform_indices = @transform_1, window_bounds = array<i64: 1, 256, 128>}, {transform_indices = @transform_2, window_bounds = array<i64: 1, 128>}, {transform_indices = @transform_3, window_bounds = array<i64: 1, 8, 128>}, {transform_indices = @transform_4, window_bounds = array<i64: 1, 8, 128>}, {transform_indices = @transform_5, window_bounds = array<i64: 1, 8, 128>}]} {
    %c0_i32 = arith.constant 0 : i32
    %0 = arith.cmpi eq, %arg3, %c0_i32 : i32
    %1 = arith.extui %0 : i1 to i32
    %c0_i32_0 = arith.constant 0 : i32
    %2 = arith.cmpi ne, %1, %c0_i32_0 : i32
    scf.if %2 {
      %cst_13 = arith.constant 0.000000e+00 : f32
      %16 = vector.broadcast %cst_13 : f32 to vector<8x128xf32>
      %c0_14 = arith.constant 0 : index
      %c0_15 = arith.constant 0 : index
      %17 = vector.load %arg10[%c0_14, %c0_15] : memref<8x128xf32, #tpu.memory_space<vmem>>, vector<8x128xf32>
      tpu.vector_store %arg10[%c0_14, %c0_15], %16 {strides = array<i32>} : memref<8x128xf32, #tpu.memory_space<vmem>>, vector<8x128xf32>,
    } else {
    }
    %c0 = arith.constant 0 : index
    %c0_1 = arith.constant 0 : index
    %c0_2 = arith.constant 0 : index
    %3 = vector.load %arg4[%c0, %c0_1, %c0_2] : memref<1x8x256xbf16, #tpu.memory_space<vmem>>, vector<1x8x256xbf16>
    %4 = vector.shape_cast %3 : vector<1x8x256xbf16> to vector<8x256xbf16>
    %cst = arith.constant 0.000000e+00 : bf16
    %5 = vector.broadcast %cst : bf16 to vector<8x256xbf16>
    %6 = arith.maximumf %4, %5 : vector<8x256xbf16>
    %c0_3 = arith.constant 0 : index
    %c0_4 = arith.constant 0 : index
    %7 = vector.load %arg10[%c0_3, %c0_4] : memref<8x128xf32, #tpu.memory_space<vmem>>, vector<8x128xf32>
    %c0_5 = arith.constant 0 : index
    %c0_6 = arith.constant 0 : index
    %c0_7 = arith.constant 0 : index
    %8 = vector.load %arg5[%c0_5, %c0_6, %c0_7] : memref<1x256x128xbf16, #tpu.memory_space<vmem>>, vector<1x256x128xbf16>
    %9 = vector.shape_cast %8 : vector<1x256x128xbf16> to vector<256x128xbf16>
    %cst_8 = arith.constant dense<0.000000e+00> : vector<8x128xf32>
    %10 = tpu.matmul %6, %9, %cst_8 {dimension_numbers = #tpu.dot_dimension_numbers<[1], [0], [0], [1], [0, 0, 1, 1], [], []>} : vector<8x256xbf16>, vector<256x128xbf16>, vector<8x128xf32> -> vector<8x128xf32>
    %11 = arith.addf %7, %10 : vector<8x128xf32>
    %c0_9 = arith.constant 0 : index
    %c0_10 = arith.constant 0 : index
    %12 = vector.load %arg10[%c0_9, %c0_10] : memref<8x128xf32, #tpu.memory_space<vmem>>, vector<8x128xf32>
    tpu.vector_store %arg10[%c0_9, %c0_10], %11 {strides = array<i32>} : memref<8x128xf32, #tpu.memory_space<vmem>>, vector<8x128xf32>,
    %c0_i32_11 = arith.constant 0 : i32
    %13 = arith.cmpi eq, %arg3, %c0_i32_11 : i32
    %14 = arith.extui %13 : i1 to i32
    %c0_i32_12 = arith.constant 0 : i32
    %15 = arith.cmpi ne, %14, %c0_i32_12 : i32
    scf.if %15 {
      %c0_13 = arith.constant 0 : index
      %c0_14 = arith.constant 0 : index
      %16 = vector.load %arg10[%c0_13, %c0_14] : memref<8x128xf32, #tpu.memory_space<vmem>>, vector<8x128xf32>
      %cst_15 = arith.constant dense<0.000000e+00> : vector<128xf32>
      %17 = vector.multi_reduction <add>, %16, %cst_15 [0] : vector<8x128xf32> to vector<128xf32>
      %18 = vector.shape_cast %17 : vector<128xf32> to vector<1x128xf32>
      %19 = arith.mulf %16, %16 : vector<8x128xf32>
      %cst_16 = arith.constant dense<0.000000e+00> : vector<128xf32>
      %20 = vector.multi_reduction <add>, %19, %cst_16 [0] : vector<8x128xf32> to vector<128xf32>
      %21 = vector.shape_cast %20 : vector<128xf32> to vector<1x128xf32>
      %22 = vector.shape_cast %18 : vector<1x128xf32> to vector<1x128xf32>
      %23 = vector.broadcast %22 : vector<1x128xf32> to vector<8x128xf32>
      %c0_17 = arith.constant 0 : index
      %c0_18 = arith.constant 0 : index
      %c0_19 = arith.constant 0 : index
      %24 = vector.load %arg8[%c0_17, %c0_18, %c0_19] : memref<1x8x128xf32, #tpu.memory_space<vmem>>, vector<1x8x128xf32>
      %25 = vector.shape_cast %24 : vector<1x8x128xf32> to vector<8x128xf32>
      %26 = vector.shape_cast %23 : vector<8x128xf32> to vector<1x8x128xf32>
      tpu.vector_store %arg8[%c0_17, %c0_18, %c0_19], %26 {strides = array<i32>} : memref<1x8x128xf32, #tpu.memory_space<vmem>>, vector<1x8x128xf32>,
      %27 = vector.shape_cast %21 : vector<1x128xf32> to vector<1x128xf32>
      %28 = vector.broadcast %27 : vector<1x128xf32> to vector<8x128xf32>
      %c0_20 = arith.constant 0 : index
      %c0_21 = arith.constant 0 : index
      %c0_22 = arith.constant 0 : index
      %29 = vector.load %arg9[%c0_20, %c0_21, %c0_22] : memref<1x8x128xf32, #tpu.memory_space<vmem>>, vector<1x8x128xf32>
      %30 = vector.shape_cast %29 : vector<1x8x128xf32> to vector<8x128xf32>
      %31 = vector.shape_cast %28 : vector<8x128xf32> to vector<1x8x128xf32>
      tpu.vector_store %arg9[%c0_20, %c0_21, %c0_22], %31 {strides = array<i32>} : memref<1x8x128xf32, #tpu.memory_space<vmem>>, vector<1x8x128xf32>,
      %c0_23 = arith.constant 0 : index
      %c0_24 = arith.constant 0 : index
      %32 = vector.load %arg6[%c0_23, %c0_24] : memref<1x128xf32, #tpu.memory_space<vmem>>, vector<1x128xf32>
      %33 = vector.broadcast %32 : vector<1x128xf32> to vector<8x128xf32>
      %34 = arith.addf %16, %33 : vector<8x128xf32>
      %c0_25 = arith.constant 0 : index
      %c0_26 = arith.constant 0 : index
      %c0_27 = arith.constant 0 : index
      %35 = vector.load %arg7[%c0_25, %c0_26, %c0_27] : memref<1x8x128xf32, #tpu.memory_space<vmem>>, vector<1x8x128xf32>
      %36 = vector.shape_cast %35 : vector<1x8x128xf32> to vector<8x128xf32>
      %37 = vector.shape_cast %34 : vector<8x128xf32> to vector<1x8x128xf32>
      tpu.vector_store %arg7[%c0_25, %c0_26, %c0_27], %37 {strides = array<i32>} : memref<1x8x128xf32, #tpu.memory_space<vmem>>, vector<1x8x128xf32>,
    } else {
    }
    return
  }
  func.func @transform_0(%arg0: i32, %arg1: i32, %arg2: i32, %arg3: i32) -> (i32, i32, i32) {
    %c0_i32 = arith.constant 0 : i32
    return %arg0, %arg1, %arg3 : i32, i32, i32
  }
  func.func @transform_1(%arg0: i32, %arg1: i32, %arg2: i32, %arg3: i32) -> (i32, i32, i32) {
    %c0_i32 = arith.constant 0 : i32
    return %arg0, %arg3, %arg2 : i32, i32, i32
  }
  func.func @transform_2(%arg0: i32, %arg1: i32, %arg2: i32, %arg3: i32) -> (i32, i32) {
    %c0_i32 = arith.constant 0 : i32
    %c0_i32_0 = arith.constant 0 : i32
    return %c0_i32, %arg2 : i32, i32
  }
  func.func @transform_3(%arg0: i32, %arg1: i32, %arg2: i32, %arg3: i32) -> (i32, i32, i32) {
    %c0_i32 = arith.constant 0 : i32
    return %arg0, %arg1, %arg2 : i32, i32, i32
  }
  func.func @transform_4(%arg0: i32, %arg1: i32, %arg2: i32, %arg3: i32) -> (i32, i32, i32) {
    %c0_i32 = arith.constant 0 : i32
    return %arg0, %arg1, %arg2 : i32, i32, i32
  }
  func.func @transform_5(%arg0: i32, %arg1: i32, %arg2: i32, %arg3: i32) -> (i32, i32, i32) {
    %c0_i32 = arith.constant 0 : i32
    return %arg0, %arg1, %arg2 : i32, i32, i32
  }
}

module attributes {stable_mosaic.version = 11 : i64} {
  func.func @_fused_matmul_kernel(%arg0: i32, %arg1: i32, %arg2: i32, %arg3: i32, %arg4: memref<1x32x128xbf16, #tpu.memory_space<vmem>>, %arg5: memref<1x128x128xbf16, #tpu.memory_space<vmem>>, %arg6: memref<1x128xf32, #tpu.memory_space<vmem>>, %arg7: memref<1x32x128xf32, #tpu.memory_space<vmem>>, %arg8: memref<1x8x128xf32, #tpu.memory_space<vmem>>, %arg9: memref<1x8x128xf32, #tpu.memory_space<vmem>>, %arg10: memref<32x128xf32, #tpu.memory_space<vmem>>) attributes {dimension_semantics = [#tpu.dimension_semantics<parallel>, #tpu.dimension_semantics<parallel>, #tpu.dimension_semantics<parallel>, #tpu.dimension_semantics<arbitrary>], iteration_bounds = array<i64: 4, 1, 1, 1>, scalar_prefetch = 0 : i64, scratch_operands = 1 : i64, tpu.core_type = #tpu.core_type<tc>, window_params = [{transform_indices = @transform_0, window_bounds = array<i64: 1, 32, 128>}, {transform_indices = @transform_1, window_bounds = array<i64: 1, 128, 128>}, {transform_indices = @transform_2, window_bounds = array<i64: 1, 128>}, {transform_indices = @transform_3, window_bounds = array<i64: 1, 32, 128>}, {transform_indices = @transform_4, window_bounds = array<i64: 1, 8, 128>}, {transform_indices = @transform_5, window_bounds = array<i64: 1, 8, 128>}]} {
    %c0_i32 = arith.constant 0 : i32
    %0 = arith.cmpi eq, %arg3, %c0_i32 : i32
    %1 = arith.extui %0 : i1 to i32
    %c0_i32_0 = arith.constant 0 : i32
    %2 = arith.cmpi ne, %1, %c0_i32_0 : i32
    scf.if %2 {
      %cst_13 = arith.constant 0.000000e+00 : f32
      %16 = vector.broadcast %cst_13 : f32 to vector<32x128xf32>
      %c0_14 = arith.constant 0 : index
      %c0_15 = arith.constant 0 : index
      %17 = vector.load %arg10[%c0_14, %c0_15] : memref<32x128xf32, #tpu.memory_space<vmem>>, vector<32x128xf32>
      tpu.vector_store %arg10[%c0_14, %c0_15], %16 {strides = array<i32>} : memref<32x128xf32, #tpu.memory_space<vmem>>, vector<32x128xf32>,
    } else {
    }
    %c0 = arith.constant 0 : index
    %c0_1 = arith.constant 0 : index
    %c0_2 = arith.constant 0 : index
    %3 = vector.load %arg4[%c0, %c0_1, %c0_2] : memref<1x32x128xbf16, #tpu.memory_space<vmem>>, vector<1x32x128xbf16>
    %4 = vector.shape_cast %3 : vector<1x32x128xbf16> to vector<32x128xbf16>
    %cst = arith.constant 0.000000e+00 : bf16
    %5 = vector.broadcast %cst : bf16 to vector<32x128xbf16>
    %6 = arith.maximumf %4, %5 : vector<32x128xbf16>
    %c0_3 = arith.constant 0 : index
    %c0_4 = arith.constant 0 : index
    %7 = vector.load %arg10[%c0_3, %c0_4] : memref<32x128xf32, #tpu.memory_space<vmem>>, vector<32x128xf32>
    %c0_5 = arith.constant 0 : index
    %c0_6 = arith.constant 0 : index
    %c0_7 = arith.constant 0 : index
    %8 = vector.load %arg5[%c0_5, %c0_6, %c0_7] : memref<1x128x128xbf16, #tpu.memory_space<vmem>>, vector<1x128x128xbf16>
    %9 = vector.shape_cast %8 : vector<1x128x128xbf16> to vector<128x128xbf16>
    %cst_8 = arith.constant dense<0.000000e+00> : vector<32x128xf32>
    %10 = tpu.matmul %6, %9, %cst_8 {dimension_numbers = #tpu.dot_dimension_numbers<[1], [0], [0], [1], [0, 0, 1, 1], [], []>} : vector<32x128xbf16>, vector<128x128xbf16>, vector<32x128xf32> -> vector<32x128xf32>
    %11 = arith.addf %7, %10 : vector<32x128xf32>
    %c0_9 = arith.constant 0 : index
    %c0_10 = arith.constant 0 : index
    %12 = vector.load %arg10[%c0_9, %c0_10] : memref<32x128xf32, #tpu.memory_space<vmem>>, vector<32x128xf32>
    tpu.vector_store %arg10[%c0_9, %c0_10], %11 {strides = array<i32>} : memref<32x128xf32, #tpu.memory_space<vmem>>, vector<32x128xf32>,
    %c0_i32_11 = arith.constant 0 : i32
    %13 = arith.cmpi eq, %arg3, %c0_i32_11 : i32
    %14 = arith.extui %13 : i1 to i32
    %c0_i32_12 = arith.constant 0 : i32
    %15 = arith.cmpi ne, %14, %c0_i32_12 : i32
    scf.if %15 {
      %c0_13 = arith.constant 0 : index
      %c0_14 = arith.constant 0 : index
      %16 = vector.load %arg10[%c0_13, %c0_14] : memref<32x128xf32, #tpu.memory_space<vmem>>, vector<32x128xf32>
      %cst_15 = arith.constant dense<0.000000e+00> : vector<128xf32>
      %17 = vector.multi_reduction <add>, %16, %cst_15 [0] : vector<32x128xf32> to vector<128xf32>
      %18 = vector.shape_cast %17 : vector<128xf32> to vector<1x128xf32>
      %19 = arith.mulf %16, %16 : vector<32x128xf32>
      %cst_16 = arith.constant dense<0.000000e+00> : vector<128xf32>
      %20 = vector.multi_reduction <add>, %19, %cst_16 [0] : vector<32x128xf32> to vector<128xf32>
      %21 = vector.shape_cast %20 : vector<128xf32> to vector<1x128xf32>
      %22 = vector.shape_cast %18 : vector<1x128xf32> to vector<1x128xf32>
      %23 = vector.broadcast %22 : vector<1x128xf32> to vector<8x128xf32>
      %c0_17 = arith.constant 0 : index
      %c0_18 = arith.constant 0 : index
      %c0_19 = arith.constant 0 : index
      %24 = vector.load %arg8[%c0_17, %c0_18, %c0_19] : memref<1x8x128xf32, #tpu.memory_space<vmem>>, vector<1x8x128xf32>
      %25 = vector.shape_cast %24 : vector<1x8x128xf32> to vector<8x128xf32>
      %26 = vector.shape_cast %23 : vector<8x128xf32> to vector<1x8x128xf32>
      tpu.vector_store %arg8[%c0_17, %c0_18, %c0_19], %26 {strides = array<i32>} : memref<1x8x128xf32, #tpu.memory_space<vmem>>, vector<1x8x128xf32>,
      %27 = vector.shape_cast %21 : vector<1x128xf32> to vector<1x128xf32>
      %28 = vector.broadcast %27 : vector<1x128xf32> to vector<8x128xf32>
      %c0_20 = arith.constant 0 : index
      %c0_21 = arith.constant 0 : index
      %c0_22 = arith.constant 0 : index
      %29 = vector.load %arg9[%c0_20, %c0_21, %c0_22] : memref<1x8x128xf32, #tpu.memory_space<vmem>>, vector<1x8x128xf32>
      %30 = vector.shape_cast %29 : vector<1x8x128xf32> to vector<8x128xf32>
      %31 = vector.shape_cast %28 : vector<8x128xf32> to vector<1x8x128xf32>
      tpu.vector_store %arg9[%c0_20, %c0_21, %c0_22], %31 {strides = array<i32>} : memref<1x8x128xf32, #tpu.memory_space<vmem>>, vector<1x8x128xf32>,
      %c0_23 = arith.constant 0 : index
      %c0_24 = arith.constant 0 : index
      %32 = vector.load %arg6[%c0_23, %c0_24] : memref<1x128xf32, #tpu.memory_space<vmem>>, vector<1x128xf32>
      %33 = vector.broadcast %32 : vector<1x128xf32> to vector<32x128xf32>
      %34 = arith.addf %16, %33 : vector<32x128xf32>
      %c0_25 = arith.constant 0 : index
      %c0_26 = arith.constant 0 : index
      %c0_27 = arith.constant 0 : index
      %35 = vector.load %arg7[%c0_25, %c0_26, %c0_27] : memref<1x32x128xf32, #tpu.memory_space<vmem>>, vector<1x32x128xf32>
      %36 = vector.shape_cast %35 : vector<1x32x128xf32> to vector<32x128xf32>
      %37 = vector.shape_cast %34 : vector<32x128xf32> to vector<1x32x128xf32>
      tpu.vector_store %arg7[%c0_25, %c0_26, %c0_27], %37 {strides = array<i32>} : memref<1x32x128xf32, #tpu.memory_space<vmem>>, vector<1x32x128xf32>,
    } else {
    }
    return
  }
  func.func @transform_0(%arg0: i32, %arg1: i32, %arg2: i32, %arg3: i32) -> (i32, i32, i32) {
    %c0_i32 = arith.constant 0 : i32
    return %arg0, %arg1, %arg3 : i32, i32, i32
  }
  func.func @transform_1(%arg0: i32, %arg1: i32, %arg2: i32, %arg3: i32) -> (i32, i32, i32) {
    %c0_i32 = arith.constant 0 : i32
    return %arg0, %arg3, %arg2 : i32, i32, i32
  }
  func.func @transform_2(%arg0: i32, %arg1: i32, %arg2: i32, %arg3: i32) -> (i32, i32) {
    %c0_i32 = arith.constant 0 : i32
    %c0_i32_0 = arith.constant 0 : i32
    return %c0_i32, %arg2 : i32, i32
  }
  func.func @transform_3(%arg0: i32, %arg1: i32, %arg2: i32, %arg3: i32) -> (i32, i32, i32) {
    %c0_i32 = arith.constant 0 : i32
    return %arg0, %arg1, %arg2 : i32, i32, i32
  }
  func.func @transform_4(%arg0: i32, %arg1: i32, %arg2: i32, %arg3: i32) -> (i32, i32, i32) {
    %c0_i32 = arith.constant 0 : i32
    return %arg0, %arg1, %arg2 : i32, i32, i32
  }
  func.func @transform_5(%arg0: i32, %arg1: i32, %arg2: i32, %arg3: i32) -> (i32, i32, i32) {
    %c0_i32 = arith.constant 0 : i32
    return %arg0, %arg1, %arg2 : i32, i32, i32
  }
}

module attributes {stable_mosaic.version = 11 : i64} {
  func.func @_fused_matmul_kernel(%arg0: i32, %arg1: i32, %arg2: i32, %arg3: i32, %arg4: memref<1x128x128xbf16, #tpu.memory_space<vmem>>, %arg5: memref<1x128x128xbf16, #tpu.memory_space<vmem>>, %arg6: memref<1x128xf32, #tpu.memory_space<vmem>>, %arg7: memref<1x128x128xf32, #tpu.memory_space<vmem>>, %arg8: memref<1x8x128xf32, #tpu.memory_space<vmem>>, %arg9: memref<1x8x128xf32, #tpu.memory_space<vmem>>, %arg10: memref<128x128xf32, #tpu.memory_space<vmem>>) attributes {dimension_semantics = [#tpu.dimension_semantics<parallel>, #tpu.dimension_semantics<parallel>, #tpu.dimension_semantics<parallel>, #tpu.dimension_semantics<arbitrary>], iteration_bounds = array<i64: 4, 1, 1, 1>, scalar_prefetch = 0 : i64, scratch_operands = 1 : i64, tpu.core_type = #tpu.core_type<tc>, window_params = [{transform_indices = @transform_0, window_bounds = array<i64: 1, 128, 128>}, {transform_indices = @transform_1, window_bounds = array<i64: 1, 128, 128>}, {transform_indices = @transform_2, window_bounds = array<i64: 1, 128>}, {transform_indices = @transform_3, window_bounds = array<i64: 1, 128, 128>}, {transform_indices = @transform_4, window_bounds = array<i64: 1, 8, 128>}, {transform_indices = @transform_5, window_bounds = array<i64: 1, 8, 128>}]} {
    %c0_i32 = arith.constant 0 : i32
    %0 = arith.cmpi eq, %arg3, %c0_i32 : i32
    %1 = arith.extui %0 : i1 to i32
    %c0_i32_0 = arith.constant 0 : i32
    %2 = arith.cmpi ne, %1, %c0_i32_0 : i32
    scf.if %2 {
      %cst_12 = arith.constant 0.000000e+00 : f32
      %14 = vector.broadcast %cst_12 : f32 to vector<128x128xf32>
      %c0_13 = arith.constant 0 : index
      %c0_14 = arith.constant 0 : index
      %15 = vector.load %arg10[%c0_13, %c0_14] : memref<128x128xf32, #tpu.memory_space<vmem>>, vector<128x128xf32>
      tpu.vector_store %arg10[%c0_13, %c0_14], %14 {strides = array<i32>} : memref<128x128xf32, #tpu.memory_space<vmem>>, vector<128x128xf32>,
    } else {
    }
    %c0 = arith.constant 0 : index
    %c0_1 = arith.constant 0 : index
    %c0_2 = arith.constant 0 : index
    %3 = vector.load %arg4[%c0, %c0_1, %c0_2] : memref<1x128x128xbf16, #tpu.memory_space<vmem>>, vector<1x128x128xbf16>
    %4 = vector.shape_cast %3 : vector<1x128x128xbf16> to vector<128x128xbf16>
    %c0_3 = arith.constant 0 : index
    %c0_4 = arith.constant 0 : index
    %5 = vector.load %arg10[%c0_3, %c0_4] : memref<128x128xf32, #tpu.memory_space<vmem>>, vector<128x128xf32>
    %c0_5 = arith.constant 0 : index
    %c0_6 = arith.constant 0 : index
    %c0_7 = arith.constant 0 : index
    %6 = vector.load %arg5[%c0_5, %c0_6, %c0_7] : memref<1x128x128xbf16, #tpu.memory_space<vmem>>, vector<1x128x128xbf16>
    %7 = vector.shape_cast %6 : vector<1x128x128xbf16> to vector<128x128xbf16>
    %cst = arith.constant dense<0.000000e+00> : vector<128x128xf32>
    %8 = tpu.matmul %4, %7, %cst {dimension_numbers = #tpu.dot_dimension_numbers<[1], [0], [0], [1], [0, 0, 1, 1], [], []>} : vector<128x128xbf16>, vector<128x128xbf16>, vector<128x128xf32> -> vector<128x128xf32>
    %9 = arith.addf %5, %8 : vector<128x128xf32>
    %c0_8 = arith.constant 0 : index
    %c0_9 = arith.constant 0 : index
    %10 = vector.load %arg10[%c0_8, %c0_9] : memref<128x128xf32, #tpu.memory_space<vmem>>, vector<128x128xf32>
    tpu.vector_store %arg10[%c0_8, %c0_9], %9 {strides = array<i32>} : memref<128x128xf32, #tpu.memory_space<vmem>>, vector<128x128xf32>,
    %c0_i32_10 = arith.constant 0 : i32
    %11 = arith.cmpi eq, %arg3, %c0_i32_10 : i32
    %12 = arith.extui %11 : i1 to i32
    %c0_i32_11 = arith.constant 0 : i32
    %13 = arith.cmpi ne, %12, %c0_i32_11 : i32
    scf.if %13 {
      %c0_12 = arith.constant 0 : index
      %c0_13 = arith.constant 0 : index
      %14 = vector.load %arg10[%c0_12, %c0_13] : memref<128x128xf32, #tpu.memory_space<vmem>>, vector<128x128xf32>
      %cst_14 = arith.constant dense<0.000000e+00> : vector<128xf32>
      %15 = vector.multi_reduction <add>, %14, %cst_14 [0] : vector<128x128xf32> to vector<128xf32>
      %16 = vector.shape_cast %15 : vector<128xf32> to vector<1x128xf32>
      %17 = arith.mulf %14, %14 : vector<128x128xf32>
      %cst_15 = arith.constant dense<0.000000e+00> : vector<128xf32>
      %18 = vector.multi_reduction <add>, %17, %cst_15 [0] : vector<128x128xf32> to vector<128xf32>
      %19 = vector.shape_cast %18 : vector<128xf32> to vector<1x128xf32>
      %20 = vector.shape_cast %16 : vector<1x128xf32> to vector<1x128xf32>
      %21 = vector.broadcast %20 : vector<1x128xf32> to vector<8x128xf32>
      %c0_16 = arith.constant 0 : index
      %c0_17 = arith.constant 0 : index
      %c0_18 = arith.constant 0 : index
      %22 = vector.load %arg8[%c0_16, %c0_17, %c0_18] : memref<1x8x128xf32, #tpu.memory_space<vmem>>, vector<1x8x128xf32>
      %23 = vector.shape_cast %22 : vector<1x8x128xf32> to vector<8x128xf32>
      %24 = vector.shape_cast %21 : vector<8x128xf32> to vector<1x8x128xf32>
      tpu.vector_store %arg8[%c0_16, %c0_17, %c0_18], %24 {strides = array<i32>} : memref<1x8x128xf32, #tpu.memory_space<vmem>>, vector<1x8x128xf32>,
      %25 = vector.shape_cast %19 : vector<1x128xf32> to vector<1x128xf32>
      %26 = vector.broadcast %25 : vector<1x128xf32> to vector<8x128xf32>
      %c0_19 = arith.constant 0 : index
      %c0_20 = arith.constant 0 : index
      %c0_21 = arith.constant 0 : index
      %27 = vector.load %arg9[%c0_19, %c0_20, %c0_21] : memref<1x8x128xf32, #tpu.memory_space<vmem>>, vector<1x8x128xf32>
      %28 = vector.shape_cast %27 : vector<1x8x128xf32> to vector<8x128xf32>
      %29 = vector.shape_cast %26 : vector<8x128xf32> to vector<1x8x128xf32>
      tpu.vector_store %arg9[%c0_19, %c0_20, %c0_21], %29 {strides = array<i32>} : memref<1x8x128xf32, #tpu.memory_space<vmem>>, vector<1x8x128xf32>,
      %c0_22 = arith.constant 0 : index
      %c0_23 = arith.constant 0 : index
      %30 = vector.load %arg6[%c0_22, %c0_23] : memref<1x128xf32, #tpu.memory_space<vmem>>, vector<1x128xf32>
      %31 = vector.broadcast %30 : vector<1x128xf32> to vector<128x128xf32>
      %32 = arith.addf %14, %31 : vector<128x128xf32>
      %33 = math.tanh %32 : vector<128x128xf32>
      %c0_24 = arith.constant 0 : index
      %c0_25 = arith.constant 0 : index
      %c0_26 = arith.constant 0 : index
      %34 = vector.load %arg7[%c0_24, %c0_25, %c0_26] : memref<1x128x128xf32, #tpu.memory_space<vmem>>, vector<1x128x128xf32>
      %35 = vector.shape_cast %34 : vector<1x128x128xf32> to vector<128x128xf32>
      %36 = vector.shape_cast %33 : vector<128x128xf32> to vector<1x128x128xf32>
      tpu.vector_store %arg7[%c0_24, %c0_25, %c0_26], %36 {strides = array<i32>} : memref<1x128x128xf32, #tpu.memory_space<vmem>>, vector<1x128x128xf32>,
    } else {
    }
    return
  }
  func.func @transform_0(%arg0: i32, %arg1: i32, %arg2: i32, %arg3: i32) -> (i32, i32, i32) {
    %c0_i32 = arith.constant 0 : i32
    return %arg0, %arg1, %arg3 : i32, i32, i32
  }
  func.func @transform_1(%arg0: i32, %arg1: i32, %arg2: i32, %arg3: i32) -> (i32, i32, i32) {
    %c0_i32 = arith.constant 0 : i32
    return %arg0, %arg3, %arg2 : i32, i32, i32
  }
  func.func @transform_2(%arg0: i32, %arg1: i32, %arg2: i32, %arg3: i32) -> (i32, i32) {
    %c0_i32 = arith.constant 0 : i32
    %c0_i32_0 = arith.constant 0 : i32
    return %c0_i32, %arg2 : i32, i32
  }
  func.func @transform_3(%arg0: i32, %arg1: i32, %arg2: i32, %arg3: i32) -> (i32, i32, i32) {
    %c0_i32 = arith.constant 0 : i32
    return %arg0, %arg1, %arg2 : i32, i32, i32
  }
  func.func @transform_4(%arg0: i32, %arg1: i32, %arg2: i32, %arg3: i32) -> (i32, i32, i32) {
    %c0_i32 = arith.constant 0 : i32
    return %arg0, %arg1, %arg2 : i32, i32, i32
  }
  func.func @transform_5(%arg0: i32, %arg1: i32, %arg2: i32, %arg3: i32) -> (i32, i32, i32) {
    %c0_i32 = arith.constant 0 : i32
    return %arg0, %arg1, %arg2 : i32, i32, i32
  }
}

</mosaic_0001>

<llo_original>
// kernel: generator_forward.8
$region0: #{generator_forward.8}
  #allocation0 [shape = 'u32[]', space=smem, size = 0x4, offset = 0x4, fixed_abs, tag = 'smem constant byte address 0x4 - core index']
  #allocation1 [shape = 'u32[144,128]{1,0:T(1,128)}', space=vmem, size = 0x12000, scoped, tag = 'internal scratch']
  #allocation2 [shape = 'f32[128,128]{1,0:T(8,128)}', space=vmem, size = 0x10000, scoped, tag = 'scratch operand']
  %s0 = inlined_call_operand.vmem [shape: bf16[1,128,128], index: 0, kind: input, shape index: {}]
  %s1 = inlined_call_operand.vmem [shape: bf16[1,128,128], index: 1, kind: input, shape index: {}]
  %s2 = inlined_call_operand.vmem [shape: f32[1,128], index: 2, kind: input, shape index: {}]
  %s3 = inlined_call_operand.vmem [shape: bf16[1,128,128], index: 3, kind: output, shape index: {0}]
  %s4 = inlined_call_operand.hbm [shape: f32[1,8,128], index: 4, kind: output, shape index: {1}]
  %s5 = inlined_call_operand.hbm [shape: f32[1,8,128], index: 5, kind: output, shape index: {2}]
  %6 = xla_tuple %s3, %s4, %s5
  %s7 = sld [smem:[#allocation0]]
  $region46: #{generator_forward.8} parent=0
    _
  %s9 = ssub.s32 1, %s7
  %s10 = scalar_select 0, %s9, %s7
  $region1: #{generator_forward.8} parent=0
    #allocation3 [shape = 'u8[4096]{0}', space=vmem, size = 0x1000, scoped, tag = 'output window, operand 1, single buffered']
    #allocation4 [shape = 's32[1]{0}', space=sflag, size = 0x4, scoped, tag = 'scoped memory for generator_forward.8']
    #allocation5 [shape = 'u8[4096]{0}', space=vmem, size = 0x1000, scoped, tag = 'output window, operand 2, single buffered']
    #allocation6 [shape = 's32[1]{0}', space=sflag, size = 0x4, scoped, tag = 'scoped memory for generator_forward.8']
    %11 = vsyncpa [#allocation4], 0
    %12 = vsyncpa [#allocation6], 0
    // Predicated region
    $region2: #{generator_forward.8} parent=1 // pred_check
      _
    $region3: #{generator_forward.8} parent=1 // pred_check_branch
      %14 = sbr.rel (0) target = $region5
    $region4: #{generator_forward.8} parent=1 // pred_region
      _
    $region5: #{generator_forward.8} parent=1 // pred_fallthru
      _
    // Predicated region
    $region6: #{generator_forward.8} parent=1 // pred_check
      _
    $region7: #{generator_forward.8} parent=1 // pred_check_branch
      %16 = sbr.rel (0) target = $region9
    $region8: #{generator_forward.8} parent=1 // pred_region
      _
    $region9: #{generator_forward.8} parent=1 // pred_fallthru
      _
    // Predicated region
    $region10: #{generator_forward.8} parent=1 // pred_check
      _
    $region11: #{generator_forward.8} parent=1 // pred_check_branch
      %18 = sbr.rel (0) target = $region13
    $region12: #{generator_forward.8} parent=1 // pred_region
      _
    $region13: #{generator_forward.8} parent=1 // pred_fallthru
      _
    %p20 = scmp.eq.s32.totalorder 0, 0
    // Predicated region
    $region14: #{generator_forward.8} parent=1 // pred_check
      %p21 = pneg %p20
    $region15: #{generator_forward.8} parent=1 // pred_check_branch
      %23 = sbr.rel (%p21) target = $region17
    $region16: #{generator_forward.8} parent=1 // pred_region
      %24 = vst [vmem:[#allocation2] sm:$0xff] 0.0
      %25 = vst [vmem:[#allocation2 + $0x8] sm:$0xff] 0.0
      %26 = vst [vmem:[#allocation2 + $0x10] sm:$0xff] 0.0
      %27 = vst [vmem:[#allocation2 + $0x18] sm:$0xff] 0.0
      %28 = vst [vmem:[#allocation2 + $0x20] sm:$0xff] 0.0
      %29 = vst [vmem:[#allocation2 + $0x28] sm:$0xff] 0.0
      %30 = vst [vmem:[#allocation2 + $0x30] sm:$0xff] 0.0
      %31 = vst [vmem:[#allocation2 + $0x38] sm:$0xff] 0.0
      %32 = vst [vmem:[#allocation2 + $0x40] sm:$0xff] 0.0
      %33 = vst [vmem:[#allocation2 + $0x48] sm:$0xff] 0.0
      %34 = vst [vmem:[#allocation2 + $0x50] sm:$0xff] 0.0
      %35 = vst [vmem:[#allocation2 + $0x58] sm:$0xff] 0.0
      %36 = vst [vmem:[#allocation2 + $0x60] sm:$0xff] 0.0
      %37 = vst [vmem:[#allocation2 + $0x68] sm:$0xff] 0.0
      %38 = vst [vmem:[#allocation2 + $0x70] sm:$0xff] 0.0
      %39 = vst [vmem:[#allocation2 + $0x78] sm:$0xff] 0.0
    $region17: #{generator_forward.8} parent=1 // pred_fallthru
      _
    %v40 = vld [vmem:[%s0] sm:$0xf]
    %v41 = vld [vmem:[%s0 + $0x4] sm:$0xf]
    %v42 = vld [vmem:[%s0 + $0x8] sm:$0xf]
    %v43 = vld [vmem:[%s0 + $0xc] sm:$0xf]
    %v44 = vld [vmem:[%s0 + $0x10] sm:$0xf]
    %v45 = vld [vmem:[%s0 + $0x14] sm:$0xf]
    %v46 = vld [vmem:[%s0 + $0x18] sm:$0xf]
    %v47 = vld [vmem:[%s0 + $0x1c] sm:$0xf]
    %v48 = vld [vmem:[%s0 + $0x20] sm:$0xf]
    %v49 = vld [vmem:[%s0 + $0x24] sm:$0xf]
    %v50 = vld [vmem:[%s0 + $0x28] sm:$0xf]
    %v51 = vld [vmem:[%s0 + $0x2c] sm:$0xf]
    %v52 = vld [vmem:[%s0 + $0x30] sm:$0xf]
    %v53 = vld [vmem:[%s0 + $0x34] sm:$0xf]
    %v54 = vld [vmem:[%s0 + $0x38] sm:$0xf]
    %v55 = vld [vmem:[%s0 + $0x3c] sm:$0xf]
    %v56 = vld [vmem:[#allocation2] sm:$0xff]
    %v57 = vld [vmem:[#allocation2 + $0x8] sm:$0xff]
    %v58 = vld [vmem:[#allocation2 + $0x10] sm:$0xff]
    %v59 = vld [vmem:[#allocation2 + $0x18] sm:$0xff]
    %v60 = vld [vmem:[#allocation2 + $0x20] sm:$0xff]
    %v61 = vld [vmem:[#allocation2 + $0x28] sm:$0xff]
    %v62 = vld [vmem:[#allocation2 + $0x30] sm:$0xff]
    %v63 = vld [vmem:[#allocation2 + $0x38] sm:$0xff]
    %v64 = vld [vmem:[#allocation2 + $0x40] sm:$0xff]
    %v65 = vld [vmem:[#allocation2 + $0x48] sm:$0xff]
    %v66 = vld [vmem:[#allocation2 + $0x50] sm:$0xff]
    %v67 = vld [vmem:[#allocation2 + $0x58] sm:$0xff]
    %v68 = vld [vmem:[#allocation2 + $0x60] sm:$0xff]
    %v69 = vld [vmem:[#allocation2 + $0x68] sm:$0xff]
    %v70 = vld [vmem:[#allocation2 + $0x70] sm:$0xff]
    %v71 = vld [vmem:[#allocation2 + $0x78] sm:$0xff]
    %v72 = vld [vmem:[%s1] sm:$0xf]
    %v73 = vld [vmem:[%s1 + $0x4] sm:$0xf]
    %v74 = vld [vmem:[%s1 + $0x8] sm:$0xf]
    %v75 = vld [vmem:[%s1 + $0xc] sm:$0xf]
    %v76 = vld [vmem:[%s1 + $0x10] sm:$0xf]
    %v77 = vld [vmem:[%s1 + $0x14] sm:$0xf]
    %v78 = vld [vmem:[%s1 + $0x18] sm:$0xf]
    %v79 = vld [vmem:[%s1 + $0x1c] sm:$0xf]
    %v80 = vld [vmem:[%s1 + $0x20] sm:$0xf]
    %v81 = vld [vmem:[%s1 + $0x24] sm:$0xf]
    %v82 = vld [vmem:[%s1 + $0x28] sm:$0xf]
    %v83 = vld [vmem:[%s1 + $0x2c] sm:$0xf]
    %v84 = vld [vmem:[%s1 + $0x30] sm:$0xf]
    %v85 = vld [vmem:[%s1 + $0x34] sm:$0xf]
    %v86 = vld [vmem:[%s1 + $0x38] sm:$0xf]
    %v87 = vld [vmem:[%s1 + $0x3c] sm:$0xf]
    %v104 = vunpack.c.l.b16 %v40
    %v105 = vunpack.c.l.b16 %v41
    %v106 = vunpack.c.l.b16 %v42
    %v107 = vunpack.c.l.b16 %v43
    %v108 = vunpack.c.l.b16 %v44
    %v109 = vunpack.c.l.b16 %v45
    %v110 = vunpack.c.l.b16 %v46
    %v111 = vunpack.c.l.b16 %v47
    %v112 = vunpack.c.l.b16 %v48
    %v113 = vunpack.c.l.b16 %v49
    %v114 = vunpack.c.l.b16 %v50
    %v115 = vunpack.c.l.b16 %v51
    %v116 = vunpack.c.l.b16 %v52
    %v117 = vunpack.c.l.b16 %v53
    %v118 = vunpack.c.l.b16 %v54
    %v119 = vunpack.c.l.b16 %v55
    %v120 = vpack.c.b16 %v105, %v104
    %v121 = vpack.c.b16 %v107, %v106
    %v122 = vpack.c.b16 %v109, %v108
    %v123 = vpack.c.b16 %v111, %v110
    %v124 = vpack.c.b16 %v113, %v112
    %v125 = vpack.c.b16 %v115, %v114
    %v126 = vpack.c.b16 %v117, %v116
    %v127 = vpack.c.b16 %v119, %v118
    %v152 = vunpack.c.l.b16 %v72
    %v153 = vunpack.c.l.b16 %v73
    %v154 = vunpack.c.l.b16 %v74
    %v155 = vunpack.c.l.b16 %v75
    %v156 = vunpack.c.l.b16 %v76
    %v157 = vunpack.c.l.b16 %v77
    %v158 = vunpack.c.l.b16 %v78
    %v159 = vunpack.c.l.b16 %v79
    %v160 = vunpack.c.l.b16 %v80
    %v161 = vunpack.c.l.b16 %v81
    %v162 = vunpack.c.l.b16 %v82
    %v163 = vunpack.c.l.b16 %v83
    %v164 = vunpack.c.l.b16 %v84
    %v165 = vunpack.c.l.b16 %v85
    %v166 = vunpack.c.l.b16 %v86
    %v167 = vunpack.c.l.b16 %v87
    %v168 = vpack.c.b16 %v153, %v152
    %v169 = vpack.c.b16 %v155, %v154
    %v170 = vpack.c.b16 %v157, %v156
    %v171 = vpack.c.b16 %v159, %v158
    %v172 = vpack.c.b16 %v161, %v160
    %v173 = vpack.c.b16 %v163, %v162
    %v174 = vpack.c.b16 %v165, %v164
    %v175 = vpack.c.b16 %v167, %v166
    %184 = vmatprep.subr.bf16.mxu0 0
    %185 = vmatpush1.bf16.msra.mxu0 %v168
    %186 = vmatprep.subr.bf16.mxu0 0
    %187 = vmatpush1.bf16.msra.mxu0 %v169
    %188 = vmatprep.subr.bf16.mxu0 0
    %189 = vmatpush1.bf16.msra.mxu0 %v170
    %190 = vmatprep.subr.bf16.mxu0 0
    %191 = vmatpush1.bf16.msra.mxu0 %v171
    %192 = vmatprep.subr.bf16.mxu0 0
    %193 = vmatpush1.bf16.msra.mxu0 %v172
    %194 = vmatprep.subr.bf16.mxu0 0
    %195 = vmatpush1.bf16.msra.mxu0 %v173
    %196 = vmatprep.subr.bf16.mxu0 0
    %197 = vmatpush1.bf16.msra.mxu0 %v174
    %198 = vmatprep.subr.bf16.mxu0 0
    %199 = vmatpush1.bf16.msra.mxu0 %v175
    %200 = vmatprep.subr.bf16.mxu0 0
    %201 = vmatpush1.bf16.msra.mxu0 0
    %202 = vmatprep.subr.bf16.mxu0 0
    %203 = vmatpush1.bf16.msra.mxu0 0
    %204 = vmatprep.subr.bf16.mxu0 0
    %205 = vmatpush1.bf16.msra.mxu0 0
    %206 = vmatprep.subr.bf16.mxu0 0
    %207 = vmatpush1.bf16.msra.mxu0 0
    %208 = vmatprep.subr.bf16.mxu0 0
    %209 = vmatpush1.bf16.msra.mxu0 0
    %210 = vmatprep.subr.bf16.mxu0 0
    %211 = vmatpush1.bf16.msra.mxu0 0
    %212 = vmatprep.subr.bf16.mxu0 0
    %213 = vmatpush1.bf16.msra.mxu0 0
    %214 = vmatprep.subr.bf16.mxu0 0
    %215 = vmatpush1.bf16.msra.mxu0 0
    %216 = vmatprep.mubr.bf16.mxu0 0
    %217 = vmatmul.mubr.bf16.gmra.mrb[0].mxu0 %v120
    %v218 = vpop.f32.mrb[0].mxu0
    %v219 = vadd.f32 0.0, %v218
    %v220 = vpop.f32.mrb[0].mxu0
    %v221 = vpop.f32.mrb[0].mxu0
    %v222 = vadd.f32 0.0, %v221
    %v223 = vpop.f32.mrb[0].mxu0
    %224 = vmatprep.mubr.bf16.mxu0 0
    %225 = vmatmul.mubr.bf16.gmra.mrb[0].mxu0 %v121
    %v226 = vpop.f32.mrb[0].mxu0
    %v227 = vadd.f32 0.0, %v226
    %v228 = vpop.f32.mrb[0].mxu0
    %v229 = vpop.f32.mrb[0].mxu0
    %v230 = vadd.f32 0.0, %v229
    %v231 = vpop.f32.mrb[0].mxu0
    %232 = vmatprep.mubr.bf16.mxu0 0
    %233 = vmatmul.mubr.bf16.gmra.mrb[0].mxu0 %v122
    %v234 = vpop.f32.mrb[0].mxu0
    %v235 = vadd.f32 0.0, %v234
    %v236 = vpop.f32.mrb[0].mxu0
    %v237 = vpop.f32.mrb[0].mxu0
    %v238 = vadd.f32 0.0, %v237
    %v239 = vpop.f32.mrb[0].mxu0
    %240 = vmatprep.mubr.bf16.mxu0 0
    %241 = vmatmul.mubr.bf16.gmra.mrb[0].mxu0 %v123
    %v242 = vpop.f32.mrb[0].mxu0
    %v243 = vadd.f32 0.0, %v242
    %v244 = vpop.f32.mrb[0].mxu0
    %v245 = vpop.f32.mrb[0].mxu0
    %v246 = vadd.f32 0.0, %v245
    %v247 = vpop.f32.mrb[0].mxu0
    %248 = vmatprep.mubr.bf16.mxu0 0
    %249 = vmatmul.mubr.bf16.gmra.mrb[0].mxu0 %v124
    %v250 = vpop.f32.mrb[0].mxu0
    %v251 = vadd.f32 0.0, %v250
    %v252 = vpop.f32.mrb[0].mxu0
    %v253 = vpop.f32.mrb[0].mxu0
    %v254 = vadd.f32 0.0, %v253
    %v255 = vpop.f32.mrb[0].mxu0
    %256 = vmatprep.mubr.bf16.mxu0 0
    %257 = vmatmul.mubr.bf16.gmra.mrb[0].mxu0 %v125
    %v258 = vpop.f32.mrb[0].mxu0
    %v259 = vadd.f32 0.0, %v258
    %v260 = vpop.f32.mrb[0].mxu0
    %v261 = vpop.f32.mrb[0].mxu0
    %v262 = vadd.f32 0.0, %v261
    %v263 = vpop.f32.mrb[0].mxu0
    %264 = vmatprep.mubr.bf16.mxu0 0
    %265 = vmatmul.mubr.bf16.gmra.mrb[0].mxu0 %v126
    %v266 = vpop.f32.mrb[0].mxu0
    %v267 = vadd.f32 0.0, %v266
    %v268 = vpop.f32.mrb[0].mxu0
    %v269 = vpop.f32.mrb[0].mxu0
    %v270 = vadd.f32 0.0, %v269
    %v271 = vpop.f32.mrb[0].mxu0
    %272 = vmatprep.mubr.bf16.mxu0 0
    %273 = vmatmul.mubr.bf16.gmra.mrb[0].mxu0 %v127
    %v274 = vpop.f32.mrb[0].mxu0
    %v275 = vadd.f32 0.0, %v274
    %v276 = vpop.f32.mrb[0].mxu0
    %v277 = vpop.f32.mrb[0].mxu0
    %v278 = vadd.f32 0.0, %v277
    %v279 = vpop.f32.mrb[0].mxu0
    %280 = vdwg.mxu0
    %v281 = vadd.f32 %v56, %v219
    %v282 = vadd.f32 %v57, %v222
    %v283 = vadd.f32 %v58, %v227
    %v284 = vadd.f32 %v59, %v230
    %v285 = vadd.f32 %v60, %v235
    %v286 = vadd.f32 %v61, %v238
    %v287 = vadd.f32 %v62, %v243
    %v288 = vadd.f32 %v63, %v246
    %v289 = vadd.f32 %v64, %v251
    %v290 = vadd.f32 %v65, %v254
    %v291 = vadd.f32 %v66, %v259
    %v292 = vadd.f32 %v67, %v262
    %v293 = vadd.f32 %v68, %v267
    %v294 = vadd.f32 %v69, %v270
    %v295 = vadd.f32 %v70, %v275
    %v296 = vadd.f32 %v71, %v278
    %297 = vst [vmem:[#allocation2] sm:$0xff] %v281
    %298 = vst [vmem:[#allocation2 + $0x8] sm:$0xff] %v282
    %299 = vst [vmem:[#allocation2 + $0x10] sm:$0xff] %v283
    %300 = vst [vmem:[#allocation2 + $0x18] sm:$0xff] %v284
    %301 = vst [vmem:[#allocation2 + $0x20] sm:$0xff] %v285
    %302 = vst [vmem:[#allocation2 + $0x28] sm:$0xff] %v286
    %303 = vst [vmem:[#allocation2 + $0x30] sm:$0xff] %v287
    %304 = vst [vmem:[#allocation2 + $0x38] sm:$0xff] %v288
    %305 = vst [vmem:[#allocation2 + $0x40] sm:$0xff] %v289
    %306 = vst [vmem:[#allocation2 + $0x48] sm:$0xff] %v290
    %307 = vst [vmem:[#allocation2 + $0x50] sm:$0xff] %v291
    %308 = vst [vmem:[#allocation2 + $0x58] sm:$0xff] %v292
    %309 = vst [vmem:[#allocation2 + $0x60] sm:$0xff] %v293
    %310 = vst [vmem:[#allocation2 + $0x68] sm:$0xff] %v294
    %311 = vst [vmem:[#allocation2 + $0x70] sm:$0xff] %v295
    %312 = vst [vmem:[#allocation2 + $0x78] sm:$0xff] %v296
    // Predicated region
    $region18: #{generator_forward.8} parent=1 // pred_check
      %p313 = pneg %p20
    $region19: #{generator_forward.8} parent=1 // pred_check_branch
      %315 = sbr.rel (%p313) target = $region21
    $region20: #{generator_forward.8} parent=1 // pred_region
      %v316 = vld [vmem:[#allocation2] sm:$0xff]
      %v317 = vld [vmem:[#allocation2 + $0x8] sm:$0xff]
      %v318 = vld [vmem:[#allocation2 + $0x10] sm:$0xff]
      %v319 = vld [vmem:[#allocation2 + $0x18] sm:$0xff]
      %v320 = vld [vmem:[#allocation2 + $0x20] sm:$0xff]
      %v321 = vld [vmem:[#allocation2 + $0x28] sm:$0xff]
      %v322 = vld [vmem:[#allocation2 + $0x30] sm:$0xff]
      %v323 = vld [vmem:[#allocation2 + $0x38] sm:$0xff]
      %v324 = vld [vmem:[#allocation2 + $0x40] sm:$0xff]
      %v325 = vld [vmem:[#allocation2 + $0x48] sm:$0xff]
      %v326 = vld [vmem:[#allocation2 + $0x50] sm:$0xff]
      %v327 = vld [vmem:[#allocation2 + $0x58] sm:$0xff]
      %v328 = vld [vmem:[#allocation2 + $0x60] sm:$0xff]
      %v329 = vld [vmem:[#allocation2 + $0x68] sm:$0xff]
      %v330 = vld [vmem:[#allocation2 + $0x70] sm:$0xff]
      %v331 = vld [vmem:[#allocation2 + $0x78] sm:$0xff]
      %v332 = vadd.f32 %v316, %v317
      %v333 = vadd.f32 %v332, %v318
      %v334 = vadd.f32 %v333, %v319
      %v335 = vadd.f32 %v334, %v320
      %v336 = vadd.f32 %v335, %v321
      %v337 = vadd.f32 %v336, %v322
      %v338 = vadd.f32 %v337, %v323
      %v339 = vadd.f32 %v338, %v324
      %v340 = vadd.f32 %v339, %v325
      %v341 = vadd.f32 %v340, %v326
      %v342 = vadd.f32 %v341, %v327
      %v343 = vadd.f32 %v342, %v328
      %v344 = vadd.f32 %v343, %v329
      %v345 = vadd.f32 %v344, %v330
      %v346 = vadd.f32 %v345, %v331
      %v347 = vrot.slane %v346, 4
      %v348 = vadd.f32 %v346, %v347
      %v349 = vrot.slane %v348, 2
      %v350 = vadd.f32 %v348, %v349
      %v351 = vrot.slane %v350, 1
      %v352 = vadd.f32 %v350, %v351
      %v353 = vmul.f32 %v316, %v316
      %v354 = vmul.f32 %v317, %v317
      %v355 = vmul.f32 %v318, %v318
      %v356 = vmul.f32 %v319, %v319
      %v357 = vmul.f32 %v320, %v320
      %v358 = vmul.f32 %v321, %v321
      %v359 = vmul.f32 %v322, %v322
      %v360 = vmul.f32 %v323, %v323
      %v361 = vmul.f32 %v324, %v324
      %v362 = vmul.f32 %v325, %v325
      %v363 = vmul.f32 %v326, %v326
      %v364 = vmul.f32 %v327, %v327
      %v365 = vmul.f32 %v328, %v328
      %v366 = vmul.f32 %v329, %v329
      %v367 = vmul.f32 %v330, %v330
      %v368 = vmul.f32 %v331, %v331
      %v369 = vadd.f32 %v353, %v354
      %v370 = vadd.f32 %v369, %v355
      %v371 = vadd.f32 %v370, %v356
      %v372 = vadd.f32 %v371, %v357
      %v373 = vadd.f32 %v372, %v358
      %v374 = vadd.f32 %v373, %v359
      %v375 = vadd.f32 %v374, %v360
      %v376 = vadd.f32 %v375, %v361
      %v377 = vadd.f32 %v376, %v362
      %v378 = vadd.f32 %v377, %v363
      %v379 = vadd.f32 %v378, %v364
      %v380 = vadd.f32 %v379, %v365
      %v381 = vadd.f32 %v380, %v366
      %v382 = vadd.f32 %v381, %v367
      %v383 = vadd.f32 %v382, %v368
      %v384 = vrot.slane %v383, 4
      %v385 = vadd.f32 %v383, %v384
      %v386 = vrot.slane %v385, 2
      %v387 = vadd.f32 %v385, %v386
      %v388 = vrot.slane %v387, 1
      %v389 = vadd.f32 %v387, %v388
      %390 = vst [vmem:[#allocation3] sm:$0xff] %v352
      %391 = vst [vmem:[#allocation5] sm:$0xff] %v389
      %v392 = vld [vmem:[%s2] sm:$0x1]
      %v394 = vlaneseq
      %v395 = vshrl.u32 %v394, 7
      %v396 = vsub.s32 0, %v395
      %v397 = vrot.slane %v392, %v396
      %v399 = vadd.f32 %v316, %v397
      %v400 = vadd.f32 %v317, %v397
      %v401 = vadd.f32 %v318, %v397
      %v402 = vadd.f32 %v319, %v397
      %v403 = vadd.f32 %v320, %v397
      %v404 = vadd.f32 %v321, %v397
      %v405 = vadd.f32 %v322, %v397
      %v406 = vadd.f32 %v323, %v397
      %v407 = vadd.f32 %v324, %v397
      %v408 = vadd.f32 %v325, %v397
      %v409 = vadd.f32 %v326, %v397
      %v410 = vadd.f32 %v327, %v397
      %v411 = vadd.f32 %v328, %v397
      %v412 = vadd.f32 %v329, %v397
      %v413 = vadd.f32 %v330, %v397
      %v414 = vadd.f32 %v331, %v397
      %v415 = vpack.c.bf16 %v400, %v399
      %v416 = vpack.c.bf16 %v402, %v401
      %v417 = vpack.c.bf16 %v404, %v403
      %v418 = vpack.c.bf16 %v406, %v405
      %v419 = vpack.c.bf16 %v408, %v407
      %v420 = vpack.c.bf16 %v410, %v409
      %v421 = vpack.c.bf16 %v412, %v411
      %v422 = vpack.c.bf16 %v414, %v413
      %v431 = vunpack.c.l.b16 %v415
      %v432 = vunpack.c.h.b16 %v415
      %v433 = vunpack.c.l.b16 %v416
      %v434 = vunpack.c.h.b16 %v416
      %v435 = vunpack.c.l.b16 %v417
      %v436 = vunpack.c.h.b16 %v417
      %v437 = vunpack.c.l.b16 %v418
      %v438 = vunpack.c.h.b16 %v418
      %v439 = vunpack.c.l.b16 %v419
      %v440 = vunpack.c.h.b16 %v419
      %v441 = vunpack.c.l.b16 %v420
      %v442 = vunpack.c.h.b16 %v420
      %v443 = vunpack.c.l.b16 %v421
      %v444 = vunpack.c.h.b16 %v421
      %v445 = vunpack.c.l.b16 %v422
      %v446 = vunpack.c.h.b16 %v422
      %v447 = vpack.c.b16 %v431, %v431
      %v448 = vpack.c.b16 %v432, %v432
      %v449 = vpack.c.b16 %v433, %v433
      %v450 = vpack.c.b16 %v434, %v434
      %v451 = vpack.c.b16 %v435, %v435
      %v452 = vpack.c.b16 %v436, %v436
      %v453 = vpack.c.b16 %v437, %v437
      %v454 = vpack.c.b16 %v438, %v438
      %v455 = vpack.c.b16 %v439, %v439
      %v456 = vpack.c.b16 %v440, %v440
      %v457 = vpack.c.b16 %v441, %v441
      %v458 = vpack.c.b16 %v442, %v442
      %v459 = vpack.c.b16 %v443, %v443
      %v460 = vpack.c.b16 %v444, %v444
      %v461 = vpack.c.b16 %v445, %v445
      %v462 = vpack.c.b16 %v446, %v446
      %479 = vst [vmem:[%s3] sm:$0xf] %v447
      %480 = vst [vmem:[%s3 + $0x4] sm:$0xf] %v448
      %481 = vst [vmem:[%s3 + $0x8] sm:$0xf] %v449
      %482 = vst [vmem:[%s3 + $0xc] sm:$0xf] %v450
      %483 = vst [vmem:[%s3 + $0x10] sm:$0xf] %v451
      %484 = vst [vmem:[%s3 + $0x14] sm:$0xf] %v452
      %485 = vst [vmem:[%s3 + $0x18] sm:$0xf] %v453
      %486 = vst [vmem:[%s3 + $0x1c] sm:$0xf] %v454
      %487 = vst [vmem:[%s3 + $0x20] sm:$0xf] %v455
      %488 = vst [vmem:[%s3 + $0x24] sm:$0xf] %v456
      %489 = vst [vmem:[%s3 + $0x28] sm:$0xf] %v457
      %490 = vst [vmem:[%s3 + $0x2c] sm:$0xf] %v458
      %491 = vst [vmem:[%s3 + $0x30] sm:$0xf] %v459
      %492 = vst [vmem:[%s3 + $0x34] sm:$0xf] %v460
      %493 = vst [vmem:[%s3 + $0x38] sm:$0xf] %v461
      %494 = vst [vmem:[%s3 + $0x3c] sm:$0xf] %v462
    $region21: #{generator_forward.8} parent=1 // pred_fallthru
      _
    // Predicated region
    $region22: #{generator_forward.8} parent=1 // pred_check
      _
    $region23: #{generator_forward.8} parent=1 // pred_check_branch
      %496 = sbr.rel (0) target = $region25
    $region24: #{generator_forward.8} parent=1 // pred_region
      _
    $region25: #{generator_forward.8} parent=1 // pred_fallthru
      _
    // Predicated region
    $region26: #{generator_forward.8} parent=1 // pred_check
      _
    $region27: #{generator_forward.8} parent=1 // pred_check_branch
      %498 = sbr.rel (0) target = $region29
    $region28: #{generator_forward.8} parent=1 // pred_region
      %s500 = ssub.s32 128, 128
      %501 = vsyncadd [#allocation4], %s500
      %s503 = sshll.u32 [#allocation3], 4
      %s504 = int_to_ptr.vmem [resolvable:$true] %s503
      %506 = dma.vmem_to_hbm [thread:$0]  %s504, 128, %s4, [#allocation4]
    $region29: #{generator_forward.8} parent=1 // pred_fallthru
      _
    // Predicated region
    $region30: #{generator_forward.8} parent=1 // pred_check
      _
    $region31: #{generator_forward.8} parent=1 // pred_check_branch
      %508 = sbr.rel (0) target = $region33
    $region32: #{generator_forward.8} parent=1 // pred_region
      %s510 = ssub.s32 128, 128
      %511 = vsyncadd [#allocation6], %s510
      %s513 = sshll.u32 [#allocation5], 4
      %s514 = int_to_ptr.vmem [resolvable:$true] %s513
      %516 = dma.vmem_to_hbm [thread:$0]  %s514, 128, %s5, [#allocation6]
    $region33: #{generator_forward.8} parent=1 // pred_fallthru
      _
    // Predicated region
    $region34: #{generator_forward.8} parent=1 // pred_check
      _
    $region35: #{generator_forward.8} parent=1 // pred_check_branch
      %518 = sbr.rel (0) target = $region37
    $region36: #{generator_forward.8} parent=1 // pred_region
      _
    $region37: #{generator_forward.8} parent=1 // pred_fallthru
      _
    // Predicated region
    $region38: #{generator_forward.8} parent=1 // pred_check
      _
    $region39: #{generator_forward.8} parent=1 // pred_check_branch
      %520 = sbr.rel (0) target = $region41
    $region40: #{generator_forward.8} parent=1 // pred_region
      %521 = dma.done [#allocation4], 128
    $region41: #{generator_forward.8} parent=1 // pred_fallthru
      _
    // Predicated region
    $region42: #{generator_forward.8} parent=1 // pred_check
      _
    $region43: #{generator_forward.8} parent=1 // pred_check_branch
      %523 = sbr.rel (0) target = $region45
    $region44: #{generator_forward.8} parent=1 // pred_region
      %524 = dma.done [#allocation6], 128
    $region45: #{generator_forward.8} parent=1 // pred_fallthru
      _
    %525 = vsyncpa [#allocation4], 1
    %526 = vsyncpa [#allocation6], 1

// kernel: generator_forward.9
$region0: #{generator_forward.9}
  #allocation0 [shape = 'u32[]', space=smem, size = 0x4, offset = 0x4, fixed_abs, tag = 'smem constant byte address 0x4 - core index']
  #allocation1 [shape = 'u32[144,128]{1,0:T(1,128)}', space=vmem, size = 0x12000, scoped, tag = 'internal scratch']
  #allocation2 [shape = 'f32[32,128]{1,0:T(8,128)}', space=vmem, size = 0x4000, scoped, tag = 'scratch operand']
  %s0 = inlined_call_operand.vmem [shape: bf16[1,32,128], index: 0, kind: input, shape index: {}]
  %s1 = inlined_call_operand.vmem [shape: bf16[1,128,128], index: 1, kind: input, shape index: {}]
  %s2 = inlined_call_operand.vmem [shape: f32[1,128], index: 2, kind: input, shape index: {}]
  %s3 = inlined_call_operand.vmem [shape: f32[1,32,128], index: 3, kind: output, shape index: {0}]
  %s4 = inlined_call_operand.vmem [shape: f32[1,8,128], index: 4, kind: output, shape index: {1}]
  %s5 = inlined_call_operand.vmem [shape: f32[1,8,128], index: 5, kind: output, shape index: {2}]
  %6 = xla_tuple %s3, %s4, %s5
  %s7 = sld [smem:[#allocation0]]
  $region46: #{generator_forward.9} parent=0
    _
  %s9 = ssub.s32 1, %s7
  %s10 = scalar_select 0, %s9, %s7
  // Predicated region
  $region2: #{generator_forward.9} parent=0 // pred_check
    _
  $region3: #{generator_forward.9} parent=0 // pred_check_branch
    %12 = sbr.rel (0) target = $region5
  $region4: #{generator_forward.9} parent=0 // pred_region
    _
  $region5: #{generator_forward.9} parent=0 // pred_fallthru
    _
  // Predicated region
  $region6: #{generator_forward.9} parent=0 // pred_check
    _
  $region7: #{generator_forward.9} parent=0 // pred_check_branch
    %14 = sbr.rel (0) target = $region9
  $region8: #{generator_forward.9} parent=0 // pred_region
    _
  $region9: #{generator_forward.9} parent=0 // pred_fallthru
    _
  // Predicated region
  $region10: #{generator_forward.9} parent=0 // pred_check
    _
  $region11: #{generator_forward.9} parent=0 // pred_check_branch
    %16 = sbr.rel (0) target = $region13
  $region12: #{generator_forward.9} parent=0 // pred_region
    _
  $region13: #{generator_forward.9} parent=0 // pred_fallthru
    _
  %p19 = scmp.eq.s32.totalorder 0, 0
  // Predicated region
  $region14: #{generator_forward.9} parent=0 // pred_check
    %p20 = pneg %p19
  $region15: #{generator_forward.9} parent=0 // pred_check_branch
    %22 = sbr.rel (%p20) target = $region17
  $region16: #{generator_forward.9} parent=0 // pred_region
    %23 = vst [vmem:[#allocation2] sm:$0xff] 0.0
    %24 = vst [vmem:[#allocation2 + $0x8] sm:$0xff] 0.0
    %25 = vst [vmem:[#allocation2 + $0x10] sm:$0xff] 0.0
    %26 = vst [vmem:[#allocation2 + $0x18] sm:$0xff] 0.0
  $region17: #{generator_forward.9} parent=0 // pred_fallthru
    _
  %v27 = vld [vmem:[%s0] sm:$0xf]
  %v28 = vld [vmem:[%s0 + $0x4] sm:$0xf]
  %v29 = vld [vmem:[%s0 + $0x8] sm:$0xf]
  %v30 = vld [vmem:[%s0 + $0xc] sm:$0xf]
  %vm31 = vcmp.ge.bf16.partialorder %v27, 0
  %vm32 = vcmp.ge.bf16.partialorder %v28, 0
  %vm33 = vcmp.ge.bf16.partialorder %v29, 0
  %vm34 = vcmp.ge.bf16.partialorder %v30, 0
  %v35 = vmul.bf16 %v27, 1045249613
  %v36 = vmul.bf16 %v28, 1045249613
  %v37 = vmul.bf16 %v29, 1045249613
  %v38 = vmul.bf16 %v30, 1045249613
  %v39 = vsel %vm31, %v27, %v35
  %v40 = vsel %vm32, %v28, %v36
  %v41 = vsel %vm33, %v29, %v37
  %v42 = vsel %vm34, %v30, %v38
  %v43 = vld [vmem:[#allocation2] sm:$0xff]
  %v44 = vld [vmem:[#allocation2 + $0x8] sm:$0xff]
  %v45 = vld [vmem:[#allocation2 + $0x10] sm:$0xff]
  %v46 = vld [vmem:[#allocation2 + $0x18] sm:$0xff]
  %v47 = vld [vmem:[%s1] sm:$0xf]
  %v48 = vld [vmem:[%s1 + $0x4] sm:$0xf]
  %v49 = vld [vmem:[%s1 + $0x8] sm:$0xf]
  %v50 = vld [vmem:[%s1 + $0xc] sm:$0xf]
  %v51 = vld [vmem:[%s1 + $0x10] sm:$0xf]
  %v52 = vld [vmem:[%s1 + $0x14] sm:$0xf]
  %v53 = vld [vmem:[%s1 + $0x18] sm:$0xf]
  %v54 = vld [vmem:[%s1 + $0x1c] sm:$0xf]
  %v55 = vld [vmem:[%s1 + $0x20] sm:$0xf]
  %v56 = vld [vmem:[%s1 + $0x24] sm:$0xf]
  %v57 = vld [vmem:[%s1 + $0x28] sm:$0xf]
  %v58 = vld [vmem:[%s1 + $0x2c] sm:$0xf]
  %v59 = vld [vmem:[%s1 + $0x30] sm:$0xf]
  %v60 = vld [vmem:[%s1 + $0x34] sm:$0xf]
  %v61 = vld [vmem:[%s1 + $0x38] sm:$0xf]
  %v62 = vld [vmem:[%s1 + $0x3c] sm:$0xf]
  %v67 = vunpack.c.l.b16 %v39
  %v68 = vunpack.c.l.b16 %v40
  %v69 = vunpack.c.l.b16 %v41
  %v70 = vunpack.c.l.b16 %v42
  %v71 = vpack.c.b16 %v68, %v67
  %v72 = vpack.c.b16 %v70, %v69
  %v91 = vunpack.c.l.b16 %v47
  %v92 = vunpack.c.l.b16 %v48
  %v93 = vunpack.c.l.b16 %v49
  %v94 = vunpack.c.l.b16 %v50
  %v95 = vunpack.c.l.b16 %v51
  %v96 = vunpack.c.l.b16 %v52
  %v97 = vunpack.c.l.b16 %v53
  %v98 = vunpack.c.l.b16 %v54
  %v99 = vunpack.c.l.b16 %v55
  %v100 = vunpack.c.l.b16 %v56
  %v101 = vunpack.c.l.b16 %v57
  %v102 = vunpack.c.l.b16 %v58
  %v103 = vunpack.c.l.b16 %v59
  %v104 = vunpack.c.l.b16 %v60
  %v105 = vunpack.c.l.b16 %v61
  %v106 = vunpack.c.l.b16 %v62
  %v107 = vpack.c.b16 %v92, %v91
  %v108 = vpack.c.b16 %v94, %v93
  %v109 = vpack.c.b16 %v96, %v95
  %v110 = vpack.c.b16 %v98, %v97
  %v111 = vpack.c.b16 %v100, %v99
  %v112 = vpack.c.b16 %v102, %v101
  %v113 = vpack.c.b16 %v104, %v103
  %v114 = vpack.c.b16 %v106, %v105
  %123 = vmatprep.subr.bf16.mxu0 0
  %124 = vmatpush1.bf16.msra.mxu0 %v107
  %125 = vmatprep.subr.bf16.mxu0 0
  %126 = vmatpush1.bf16.msra.mxu0 %v108
  %127 = vmatprep.subr.bf16.mxu0 0
  %128 = vmatpush1.bf16.msra.mxu0 %v109
  %129 = vmatprep.subr.bf16.mxu0 0
  %130 = vmatpush1.bf16.msra.mxu0 %v110
  %131 = vmatprep.subr.bf16.mxu0 0
  %132 = vmatpush1.bf16.msra.mxu0 %v111
  %133 = vmatprep.subr.bf16.mxu0 0
  %134 = vmatpush1.bf16.msra.mxu0 %v112
  %135 = vmatprep.subr.bf16.mxu0 0
  %136 = vmatpush1.bf16.msra.mxu0 %v113
  %137 = vmatprep.subr.bf16.mxu0 0
  %138 = vmatpush1.bf16.msra.mxu0 %v114
  %139 = vmatprep.subr.bf16.mxu0 0
  %140 = vmatpush1.bf16.msra.mxu0 0
  %141 = vmatprep.subr.bf16.mxu0 0
  %142 = vmatpush1.bf16.msra.mxu0 0
  %143 = vmatprep.subr.bf16.mxu0 0
  %144 = vmatpush1.bf16.msra.mxu0 0
  %145 = vmatprep.subr.bf16.mxu0 0
  %146 = vmatpush1.bf16.msra.mxu0 0
  %147 = vmatprep.subr.bf16.mxu0 0
  %148 = vmatpush1.bf16.msra.mxu0 0
  %149 = vmatprep.subr.bf16.mxu0 0
  %150 = vmatpush1.bf16.msra.mxu0 0
  %151 = vmatprep.subr.bf16.mxu0 0
  %152 = vmatpush1.bf16.msra.mxu0 0
  %153 = vmatprep.subr.bf16.mxu0 0
  %154 = vmatpush1.bf16.msra.mxu0 0
  %155 = vmatprep.mubr.bf16.mxu0 0
  %156 = vmatmul.mubr.bf16.gmra.mrb[0].mxu0 %v71
  %v157 = vpop.f32.mrb[0].mxu0
  %v158 = vadd.f32 0.0, %v157
  %v159 = vpop.f32.mrb[0].mxu0
  %v160 = vpop.f32.mrb[0].mxu0
  %v161 = vadd.f32 0.0, %v160
  %v162 = vpop.f32.mrb[0].mxu0
  %163 = vmatprep.mubr.bf16.mxu0 0
  %164 = vmatmul.mubr.bf16.gmra.mrb[0].mxu0 %v72
  %v165 = vpop.f32.mrb[0].mxu0
  %v166 = vadd.f32 0.0, %v165
  %v167 = vpop.f32.mrb[0].mxu0
  %v168 = vpop.f32.mrb[0].mxu0
  %v169 = vadd.f32 0.0, %v168
  %v170 = vpop.f32.mrb[0].mxu0
  %171 = vdwg.mxu0
  %v172 = vadd.f32 %v43, %v158
  %v173 = vadd.f32 %v44, %v161
  %v174 = vadd.f32 %v45, %v166
  %v175 = vadd.f32 %v46, %v169
  %176 = vst [vmem:[#allocation2] sm:$0xff] %v172
  %177 = vst [vmem:[#allocation2 + $0x8] sm:$0xff] %v173
  %178 = vst [vmem:[#allocation2 + $0x10] sm:$0xff] %v174
  %179 = vst [vmem:[#allocation2 + $0x18] sm:$0xff] %v175
  // Predicated region
  $region18: #{generator_forward.9} parent=0 // pred_check
    %p180 = pneg %p19
  $region19: #{generator_forward.9} parent=0 // pred_check_branch
    %182 = sbr.rel (%p180) target = $region21
  $region20: #{generator_forward.9} parent=0 // pred_region
    %v183 = vld [vmem:[#allocation2] sm:$0xff]
    %v184 = vld [vmem:[#allocation2 + $0x8] sm:$0xff]
    %v185 = vld [vmem:[#allocation2 + $0x10] sm:$0xff]
    %v186 = vld [vmem:[#allocation2 + $0x18] sm:$0xff]
    %v187 = vadd.f32 %v183, %v184
    %v188 = vadd.f32 %v187, %v185
    %v189 = vadd.f32 %v188, %v186
    %v190 = vrot.slane %v189, 4
    %v191 = vadd.f32 %v189, %v190
    %v192 = vrot.slane %v191, 2
    %v193 = vadd.f32 %v191, %v192
    %v194 = vrot.slane %v193, 1
    %v195 = vadd.f32 %v193, %v194
    %v196 = vmul.f32 %v183, %v183
    %v197 = vmul.f32 %v184, %v184
    %v198 = vmul.f32 %v185, %v185
    %v199 = vmul.f32 %v186, %v186
    %v200 = vadd.f32 %v196, %v197
    %v201 = vadd.f32 %v200, %v198
    %v202 = vadd.f32 %v201, %v199
    %v203 = vrot.slane %v202, 4
    %v204 = vadd.f32 %v202, %v203
    %v205 = vrot.slane %v204, 2
    %v206 = vadd.f32 %v204, %v205
    %v207 = vrot.slane %v206, 1
    %v208 = vadd.f32 %v206, %v207
    %209 = vst [vmem:[%s4] sm:$0xff] %v195
    %210 = vst [vmem:[%s5] sm:$0xff] %v208
    %v211 = vld [vmem:[%s2] sm:$0x1]
    %v213 = vlaneseq
    %v214 = vshrl.u32 %v213, 7
    %v215 = vsub.s32 0, %v214
    %v216 = vrot.slane %v211, %v215
    %v218 = vadd.f32 %v183, %v216
    %v219 = vadd.f32 %v184, %v216
    %v220 = vadd.f32 %v185, %v216
    %v221 = vadd.f32 %v186, %v216
    %222 = vst [vmem:[%s3] sm:$0xff] %v218
    %223 = vst [vmem:[%s3 + $0x8] sm:$0xff] %v219
    %224 = vst [vmem:[%s3 + $0x10] sm:$0xff] %v220
    %225 = vst [vmem:[%s3 + $0x18] sm:$0xff] %v221
  $region21: #{generator_forward.9} parent=0 // pred_fallthru
    _
  // Predicated region
  $region22: #{generator_forward.9} parent=0 // pred_check
    _
  $region23: #{generator_forward.9} parent=0 // pred_check_branch
    %227 = sbr.rel (0) target = $region25
  $region24: #{generator_forward.9} parent=0 // pred_region
    _
  $region25: #{generator_forward.9} parent=0 // pred_fallthru
    _
  // Predicated region
  $region26: #{generator_forward.9} parent=0 // pred_check
    _
  $region27: #{generator_forward.9} parent=0 // pred_check_branch
    %229 = sbr.rel (0) target = $region29
  $region28: #{generator_forward.9} parent=0 // pred_region
    _
  $region29: #{generator_forward.9} parent=0 // pred_fallthru
    _
  // Predicated region
  $region30: #{generator_forward.9} parent=0 // pred_check
    _
  $region31: #{generator_forward.9} parent=0 // pred_check_branch
    %231 = sbr.rel (0) target = $region33
  $region32: #{generator_forward.9} parent=0 // pred_region
    _
  $region33: #{generator_forward.9} parent=0 // pred_fallthru
    _
  // Predicated region
  $region34: #{generator_forward.9} parent=0 // pred_check
    _
  $region35: #{generator_forward.9} parent=0 // pred_check_branch
    %233 = sbr.rel (0) target = $region37
  $region36: #{generator_forward.9} parent=0 // pred_region
    _
  $region37: #{generator_forward.9} parent=0 // pred_fallthru
    _
  // Predicated region
  $region38: #{generator_forward.9} parent=0 // pred_check
    _
  $region39: #{generator_forward.9} parent=0 // pred_check_branch
    %235 = sbr.rel (0) target = $region41
  $region40: #{generator_forward.9} parent=0 // pred_region
    _
  $region41: #{generator_forward.9} parent=0 // pred_fallthru
    _
  // Predicated region
  $region42: #{generator_forward.9} parent=0 // pred_check
    _
  $region43: #{generator_forward.9} parent=0 // pred_check_branch
    %237 = sbr.rel (0) target = $region45
  $region44: #{generator_forward.9} parent=0 // pred_region
    _
  $region45: #{generator_forward.9} parent=0 // pred_fallthru
    _

// kernel: generator_forward.10
$region0: #{generator_forward.10}
  #allocation0 [shape = 'u32[]', space=smem, size = 0x4, offset = 0x4, fixed_abs, tag = 'smem constant byte address 0x4 - core index']
  #allocation1 [shape = 'u32[144,128]{1,0:T(1,128)}', space=vmem, size = 0x12000, scoped, tag = 'internal scratch']
  #allocation2 [shape = 'f32[8,128]{1,0:T(8,128)}', space=vmem, size = 0x1000, scoped, tag = 'scratch operand']
  %s0 = inlined_call_operand.vmem [shape: bf16[1,8,256], index: 0, kind: input, shape index: {}]
  %s1 = inlined_call_operand.vmem [shape: bf16[1,256,128], index: 1, kind: input, shape index: {}]
  %s2 = inlined_call_operand.vmem [shape: f32[1,128], index: 2, kind: input, shape index: {}]
  %s3 = inlined_call_operand.vmem [shape: f32[1,8,128], index: 3, kind: output, shape index: {0}]
  %s4 = inlined_call_operand.vmem [shape: f32[1,8,128], index: 4, kind: output, shape index: {1}]
  %s5 = inlined_call_operand.vmem [shape: f32[1,8,128], index: 5, kind: output, shape index: {2}]
  %6 = xla_tuple %s3, %s4, %s5
  %s7 = sld [smem:[#allocation0]]
  $region46: #{generator_forward.10} parent=0
    _
  %s9 = ssub.s32 1, %s7
  %s10 = scalar_select 0, %s9, %s7
  // Predicated region
  $region2: #{generator_forward.10} parent=0 // pred_check
    _
  $region3: #{generator_forward.10} parent=0 // pred_check_branch
    %12 = sbr.rel (0) target = $region5
  $region4: #{generator_forward.10} parent=0 // pred_region
    _
  $region5: #{generator_forward.10} parent=0 // pred_fallthru
    _
  // Predicated region
  $region6: #{generator_forward.10} parent=0 // pred_check
    _
  $region7: #{generator_forward.10} parent=0 // pred_check_branch
    %14 = sbr.rel (0) target = $region9
  $region8: #{generator_forward.10} parent=0 // pred_region
    _
  $region9: #{generator_forward.10} parent=0 // pred_fallthru
    _
  // Predicated region
  $region10: #{generator_forward.10} parent=0 // pred_check
    _
  $region11: #{generator_forward.10} parent=0 // pred_check_branch
    %16 = sbr.rel (0) target = $region13
  $region12: #{generator_forward.10} parent=0 // pred_region
    _
  $region13: #{generator_forward.10} parent=0 // pred_fallthru
    _
  %p19 = scmp.eq.s32.totalorder 0, 0
  // Predicated region
  $region14: #{generator_forward.10} parent=0 // pred_check
    %p20 = pneg %p19
  $region15: #{generator_forward.10} parent=0 // pred_check_branch
    %22 = sbr.rel (%p20) target = $region17
  $region16: #{generator_forward.10} parent=0 // pred_region
    %23 = vst [vmem:[#allocation2] sm:$0xff] 0.0
  $region17: #{generator_forward.10} parent=0 // pred_fallthru
    _
  %v24 = vld [vmem:[%s0] sm:$0xff]
  %vm25 = vcmp.ge.bf16.partialorder %v24, 0
  %v26 = vmul.bf16 %v24, 1045249613
  %v27 = vsel %vm25, %v24, %v26
  %v28 = vld [vmem:[#allocation2] sm:$0xff]
  %v29 = vld [vmem:[%s1] sm:$0xf]
  %v30 = vld [vmem:[%s1 + $0x4] sm:$0xf]
  %v31 = vld [vmem:[%s1 + $0x8] sm:$0xf]
  %v32 = vld [vmem:[%s1 + $0xc] sm:$0xf]
  %v33 = vld [vmem:[%s1 + $0x10] sm:$0xf]
  %v34 = vld [vmem:[%s1 + $0x14] sm:$0xf]
  %v35 = vld [vmem:[%s1 + $0x18] sm:$0xf]
  %v36 = vld [vmem:[%s1 + $0x1c] sm:$0xf]
  %v37 = vld [vmem:[%s1 + $0x20] sm:$0xf]
  %v38 = vld [vmem:[%s1 + $0x24] sm:$0xf]
  %v39 = vld [vmem:[%s1 + $0x28] sm:$0xf]
  %v40 = vld [vmem:[%s1 + $0x2c] sm:$0xf]
  %v41 = vld [vmem:[%s1 + $0x30] sm:$0xf]
  %v42 = vld [vmem:[%s1 + $0x34] sm:$0xf]
  %v43 = vld [vmem:[%s1 + $0x38] sm:$0xf]
  %v44 = vld [vmem:[%s1 + $0x3c] sm:$0xf]
  %v45 = vld [vmem:[%s1 + $0x40] sm:$0xf]
  %v46 = vld [vmem:[%s1 + $0x44] sm:$0xf]
  %v47 = vld [vmem:[%s1 + $0x48] sm:$0xf]
  %v48 = vld [vmem:[%s1 + $0x4c] sm:$0xf]
  %v49 = vld [vmem:[%s1 + $0x50] sm:$0xf]
  %v50 = vld [vmem:[%s1 + $0x54] sm:$0xf]
  %v51 = vld [vmem:[%s1 + $0x58] sm:$0xf]
  %v52 = vld [vmem:[%s1 + $0x5c] sm:$0xf]
  %v53 = vld [vmem:[%s1 + $0x60] sm:$0xf]
  %v54 = vld [vmem:[%s1 + $0x64] sm:$0xf]
  %v55 = vld [vmem:[%s1 + $0x68] sm:$0xf]
  %v56 = vld [vmem:[%s1 + $0x6c] sm:$0xf]
  %v57 = vld [vmem:[%s1 + $0x70] sm:$0xf]
  %v58 = vld [vmem:[%s1 + $0x74] sm:$0xf]
  %v59 = vld [vmem:[%s1 + $0x78] sm:$0xf]
  %v60 = vld [vmem:[%s1 + $0x7c] sm:$0xf]
  %v62 = vunpack.c.l.b16 %v27
  %v63 = vunpack.c.h.b16 %v27
  %v64 = vpack.c.b16 %v62, %v62
  %v65 = vpack.c.b16 %v63, %v63
  %v100 = vunpack.c.l.b16 %v29
  %v101 = vunpack.c.l.b16 %v30
  %v102 = vunpack.c.l.b16 %v31
  %v103 = vunpack.c.l.b16 %v32
  %v104 = vunpack.c.l.b16 %v33
  %v105 = vunpack.c.l.b16 %v34
  %v106 = vunpack.c.l.b16 %v35
  %v107 = vunpack.c.l.b16 %v36
  %v108 = vunpack.c.l.b16 %v37
  %v109 = vunpack.c.l.b16 %v38
  %v110 = vunpack.c.l.b16 %v39
  %v111 = vunpack.c.l.b16 %v40
  %v112 = vunpack.c.l.b16 %v41
  %v113 = vunpack.c.l.b16 %v42
  %v114 = vunpack.c.l.b16 %v43
  %v115 = vunpack.c.l.b16 %v44
  %v116 = vunpack.c.l.b16 %v45
  %v117 = vunpack.c.l.b16 %v46
  %v118 = vunpack.c.l.b16 %v47
  %v119 = vunpack.c.l.b16 %v48
  %v120 = vunpack.c.l.b16 %v49
  %v121 = vunpack.c.l.b16 %v50
  %v122 = vunpack.c.l.b16 %v51
  %v123 = vunpack.c.l.b16 %v52
  %v124 = vunpack.c.l.b16 %v53
  %v125 = vunpack.c.l.b16 %v54
  %v126 = vunpack.c.l.b16 %v55
  %v127 = vunpack.c.l.b16 %v56
  %v128 = vunpack.c.l.b16 %v57
  %v129 = vunpack.c.l.b16 %v58
  %v130 = vunpack.c.l.b16 %v59
  %v131 = vunpack.c.l.b16 %v60
  %v132 = vpack.c.b16 %v101, %v100
  %v133 = vpack.c.b16 %v103, %v102
  %v134 = vpack.c.b16 %v105, %v104
  %v135 = vpack.c.b16 %v107, %v106
  %v136 = vpack.c.b16 %v109, %v108
  %v137 = vpack.c.b16 %v111, %v110
  %v138 = vpack.c.b16 %v113, %v112
  %v139 = vpack.c.b16 %v115, %v114
  %v140 = vpack.c.b16 %v117, %v116
  %v141 = vpack.c.b16 %v119, %v118
  %v142 = vpack.c.b16 %v121, %v120
  %v143 = vpack.c.b16 %v123, %v122
  %v144 = vpack.c.b16 %v125, %v124
  %v145 = vpack.c.b16 %v127, %v126
  %v146 = vpack.c.b16 %v129, %v128
  %v147 = vpack.c.b16 %v131, %v130
  %164 = vmatprep.subr.bf16.mxu0 0
  %165 = vmatpush1.bf16.msra.mxu0 %v132
  %166 = vmatprep.subr.bf16.mxu0 0
  %167 = vmatpush1.bf16.msra.mxu0 %v133
  %168 = vmatprep.subr.bf16.mxu0 0
  %169 = vmatpush1.bf16.msra.mxu0 %v134
  %170 = vmatprep.subr.bf16.mxu0 0
  %171 = vmatpush1.bf16.msra.mxu0 %v135
  %172 = vmatprep.subr.bf16.mxu0 0
  %173 = vmatpush1.bf16.msra.mxu0 %v136
  %174 = vmatprep.subr.bf16.mxu0 0
  %175 = vmatpush1.bf16.msra.mxu0 %v137
  %176 = vmatprep.subr.bf16.mxu0 0
  %177 = vmatpush1.bf16.msra.mxu0 %v138
  %178 = vmatprep.subr.bf16.mxu0 0
  %179 = vmatpush1.bf16.msra.mxu0 %v139
  %180 = vmatprep.subr.bf16.mxu0 0
  %181 = vmatpush1.bf16.msra.mxu0 %v140
  %182 = vmatprep.subr.bf16.mxu0 0
  %183 = vmatpush1.bf16.msra.mxu0 %v141
  %184 = vmatprep.subr.bf16.mxu0 0
  %185 = vmatpush1.bf16.msra.mxu0 %v142
  %186 = vmatprep.subr.bf16.mxu0 0
  %187 = vmatpush1.bf16.msra.mxu0 %v143
  %188 = vmatprep.subr.bf16.mxu0 0
  %189 = vmatpush1.bf16.msra.mxu0 %v144
  %190 = vmatprep.subr.bf16.mxu0 0
  %191 = vmatpush1.bf16.msra.mxu0 %v145
  %192 = vmatprep.subr.bf16.mxu0 0
  %193 = vmatpush1.bf16.msra.mxu0 %v146
  %194 = vmatprep.subr.bf16.mxu0 0
  %195 = vmatpush1.bf16.msra.mxu0 %v147
  %196 = vmatprep.mubr.bf16.mxu0 %v65
  %197 = vmatmul.mubr.bf16.gmra.mrb[0].mxu0 %v64
  %v198 = vpop.f32.mrb[0].mxu0
  %v199 = vadd.f32 0.0, %v198
  %v200 = vpop.f32.mrb[0].mxu0
  %v201 = vpop.f32.mrb[0].mxu0
  %v202 = vpop.f32.mrb[0].mxu0
  %203 = vdwg.mxu0
  %v204 = vadd.f32 %v28, %v199
  %205 = vst [vmem:[#allocation2] sm:$0xff] %v204
  // Predicated region
  $region18: #{generator_forward.10} parent=0 // pred_check
    %p206 = pneg %p19
  $region19: #{generator_forward.10} parent=0 // pred_check_branch
    %208 = sbr.rel (%p206) target = $region21
  $region20: #{generator_forward.10} parent=0 // pred_region
    %v209 = vld [vmem:[#allocation2] sm:$0xff]
    %v210 = vrot.slane %v209, 4
    %v211 = vadd.f32 %v209, %v210
    %v212 = vrot.slane %v211, 2
    %v213 = vadd.f32 %v211, %v212
    %v214 = vrot.slane %v213, 1
    %v215 = vadd.f32 %v213, %v214
    %v216 = vmul.f32 %v209, %v209
    %v217 = vrot.slane %v216, 4
    %v218 = vadd.f32 %v216, %v217
    %v219 = vrot.slane %v218, 2
    %v220 = vadd.f32 %v218, %v219
    %v221 = vrot.slane %v220, 1
    %v222 = vadd.f32 %v220, %v221
    %223 = vst [vmem:[%s4] sm:$0xff] %v215
    %224 = vst [vmem:[%s5] sm:$0xff] %v222
    %v225 = vld [vmem:[%s2] sm:$0x1]
    %v227 = vlaneseq
    %v228 = vshrl.u32 %v227, 7
    %v229 = vsub.s32 0, %v228
    %v230 = vrot.slane %v225, %v229
    %v232 = vadd.f32 %v209, %v230
    %233 = vst [vmem:[%s3] sm:$0xff] %v232
  $region21: #{generator_forward.10} parent=0 // pred_fallthru
    _
  // Predicated region
  $region22: #{generator_forward.10} parent=0 // pred_check
    _
  $region23: #{generator_forward.10} parent=0 // pred_check_branch
    %235 = sbr.rel (0) target = $region25
  $region24: #{generator_forward.10} parent=0 // pred_region
    _
  $region25: #{generator_forward.10} parent=0 // pred_fallthru
    _
  // Predicated region
  $region26: #{generator_forward.10} parent=0 // pred_check
    _
  $region27: #{generator_forward.10} parent=0 // pred_check_branch
    %237 = sbr.rel (0) target = $region29
  $region28: #{generator_forward.10} parent=0 // pred_region
    _
  $region29: #{generator_forward.10} parent=0 // pred_fallthru
    _
  // Predicated region
  $region30: #{generator_forward.10} parent=0 // pred_check
    _
  $region31: #{generator_forward.10} parent=0 // pred_check_branch
    %239 = sbr.rel (0) target = $region33
  $region32: #{generator_forward.10} parent=0 // pred_region
    _
  $region33: #{generator_forward.10} parent=0 // pred_fallthru
    _
  // Predicated region
  $region34: #{generator_forward.10} parent=0 // pred_check
    _
  $region35: #{generator_forward.10} parent=0 // pred_check_branch
    %241 = sbr.rel (0) target = $region37
  $region36: #{generator_forward.10} parent=0 // pred_region
    _
  $region37: #{generator_forward.10} parent=0 // pred_fallthru
    _
  // Predicated region
  $region38: #{generator_forward.10} parent=0 // pred_check
    _
  $region39: #{generator_forward.10} parent=0 // pred_check_branch
    %243 = sbr.rel (0) target = $region41
  $region40: #{generator_forward.10} parent=0 // pred_region
    _
  $region41: #{generator_forward.10} parent=0 // pred_fallthru
    _
  // Predicated region
  $region42: #{generator_forward.10} parent=0 // pred_check
    _
  $region43: #{generator_forward.10} parent=0 // pred_check_branch
    %245 = sbr.rel (0) target = $region45
  $region44: #{generator_forward.10} parent=0 // pred_region
    _
  $region45: #{generator_forward.10} parent=0 // pred_fallthru
    _

// kernel: generator_forward.11
$region0: #{generator_forward.11}
  #allocation0 [shape = 'u32[]', space=smem, size = 0x4, offset = 0x4, fixed_abs, tag = 'smem constant byte address 0x4 - core index']
  #allocation1 [shape = 'u32[144,128]{1,0:T(1,128)}', space=vmem, size = 0x12000, scoped, tag = 'internal scratch']
  #allocation2 [shape = 'f32[8,128]{1,0:T(8,128)}', space=vmem, size = 0x1000, scoped, tag = 'scratch operand']
  %s0 = inlined_call_operand.vmem [shape: bf16[1,8,512], index: 0, kind: input, shape index: {}]
  %s1 = inlined_call_operand.vmem [shape: bf16[1,512,128], index: 1, kind: input, shape index: {}]
  %s2 = inlined_call_operand.vmem [shape: f32[1,128], index: 2, kind: input, shape index: {}]
  %s3 = inlined_call_operand.vmem [shape: bf16[1,8,128], index: 3, kind: output, shape index: {0}]
  %s4 = inlined_call_operand.hbm [shape: f32[1,8,128], index: 4, kind: output, shape index: {1}]
  %s5 = inlined_call_operand.hbm [shape: f32[1,8,128], index: 5, kind: output, shape index: {2}]
  %6 = xla_tuple %s3, %s4, %s5
  %s7 = sld [smem:[#allocation0]]
  $region69: #{generator_forward.11} parent=0
    _
  %s9 = ssub.s32 1, %s7
  %s10 = scalar_select 0, %s9, %s7
  $region1: #{generator_forward.11} parent=0
    #allocation3 [shape = 'u8[4096]{0}', space=vmem, size = 0x1000, scoped, tag = 'output window, operand 1, single buffered']
    #allocation4 [shape = 's32[2]{0}', space=sflag, size = 0x8, scoped, tag = 'scoped memory for generator_forward.11']
    #allocation5 [shape = 'u8[4096]{0}', space=vmem, size = 0x1000, scoped, tag = 'output window, operand 2, single buffered']
    #allocation6 [shape = 's32[1]{0}', space=sflag, size = 0x4, scoped, tag = 'scoped memory for generator_forward.11']
    %11 = vsyncpa [#allocation4], 0
    %12 = vsyncpa [#allocation6], 0
    loop: start=0, step=1, limit=4
    $region2: #{generator_forward.11} parent=1 // loop_pre_header
      _
    $region3: #{generator_forward.11} parent=1 // loop_header
      %s14 = sphi 0, %s18
      %p15 = scmp.ge.s32.totalorder %s14, 4
      %s21 = sphi 0, %s47
      %s22 = sphi 0, %s43
      %s23 = sphi 0, %s39
      %s24 = sphi 0, %s35
      %s25 = sphi 0, %s21
      %s26 = sphi 0, %s22
      %s27 = sphi 0, %s23
      %s28 = sphi 0, %s24
      %s29 = sphi 0, %s25
      %s30 = sphi 0, %s26
      %s31 = sphi 0, %s27
      %s32 = sphi 0, %s28
      %s54 = sphi 0, %s56
      %s57 = sphi 0, %s54
      %s58 = sphi 0, %s57
      %s74 = sphi 0, %s58
      %s84 = sphi 0, %s86
      %s87 = sphi 0, %s84
      %s88 = sphi 0, %s87
      %s104 = sphi 0, %s88
      %s110 = sphi 0, %s112
      %s113 = sphi 0, %s110
      %s114 = sphi 0, %s113
      %s130 = sphi 0, %s114
      %s140 = sphi 0, %s142
      %s143 = sphi 0, %s140
      %s144 = sphi 0, %s143
      %s160 = sphi 0, %s144
      %s170 = sphi 0, %s172
      %s173 = sphi 0, %s170
      %s174 = sphi 0, %s173
      %s190 = sphi 0, %s174
      %s200 = sphi 0, %s202
      %s203 = sphi 0, %s200
      %s204 = sphi 0, %s203
      %s220 = sphi 0, %s204
    $region4: #{generator_forward.11} parent=1 // loop_header_branch
      %17 = sbr.rel (%p15) target = $region8
    $region5: #{generator_forward.11} parent=1 // loop_body
      %s19 = ssub.s32 %s14, 1
      %s20 = ssub.s32 %s14, 2
      %s33 = sadd.s32 1, %s24
      %p34 = scmp.ge.s32.totalorder %s33, 2
      %s35 = scalar_select %p34, 0, %s33
      %s36 = sadd.s32 1, %s23
      %s37 = scalar_select %p34, %s36, %s23
      %p38 = scmp.ge.s32.totalorder %s37, 1
      %s39 = scalar_select %p38, 0, %s37
      %s40 = sadd.s32 1, %s22
      %s41 = scalar_select %p38, %s40, %s22
      %p42 = scmp.ge.s32.totalorder %s41, 1
      %s43 = scalar_select %p42, 0, %s41
      %s44 = sadd.s32 1, %s21
      %s45 = scalar_select %p42, %s44, %s21
      %p46 = scmp.ge.s32.totalorder %s45, 1
      %s47 = scalar_select %p46, 0, %s45
      %s48 = ssub.s32 %s21, %s47
      %s49 = ssub.s32 %s22, %s43
      %s50 = sor.u32 %s48, %s49
      %s51 = ssub.s32 %s24, %s35
      %s52 = sor.u32 %s50, %s51
      %p53 = scmp.eq.s32.totalorder %s52, 0
      %s55 = sadd.s32 %s54, 1
      %s56 = scalar_select %p53, %s54, %s55
      %p59 = pneg %p53
      %p60 = scmp.eq.s32.totalorder %s14, 1
      %p61 = por %p59, %p60
      %p62 = scmp.ne.s32.totalorder %s54, %s57
      %p63 = scmp.eq.s32.totalorder %s14, 0
      %p64 = por %p62, %p63
      %p65 = scmp.ne.s32.totalorder %s54, %s57
      %p66 = scmp.eq.s32.totalorder %s19, 1
      %p67 = por %p65, %p66
      %p68 = scmp.ne.s32.totalorder %s57, %s58
      %p69 = scmp.eq.s32.totalorder %s19, 0
      %p70 = por %p68, %p69
      %p71 = scmp.ne.s32.totalorder %s57, %s58
      %p72 = scmp.eq.s32.totalorder %s20, 1
      %p73 = por %p71, %p72
      %p75 = scmp.ne.s32.totalorder %s58, %s74
      %p76 = scmp.eq.s32.totalorder %s20, 0
      %p77 = por %p75, %p76
      %s78 = ssub.s32 %s21, %s47
      %s79 = ssub.s32 %s24, %s35
      %s80 = sor.u32 %s78, %s79
      %s81 = ssub.s32 %s23, %s39
      %s82 = sor.u32 %s80, %s81
      %p83 = scmp.eq.s32.totalorder %s82, 0
      %s85 = sadd.s32 %s84, 1
      %s86 = scalar_select %p83, %s84, %s85
      %p89 = pneg %p83
      %p90 = scmp.eq.s32.totalorder %s14, 1
      %p91 = por %p89, %p90
      %p92 = scmp.ne.s32.totalorder %s84, %s87
      %p93 = scmp.eq.s32.totalorder %s14, 0
      %p94 = por %p92, %p93
      %p95 = scmp.ne.s32.totalorder %s84, %s87
      %p96 = scmp.eq.s32.totalorder %s19, 1
      %p97 = por %p95, %p96
      %p98 = scmp.ne.s32.totalorder %s87, %s88
      %p99 = scmp.eq.s32.totalorder %s19, 0
      %p100 = por %p98, %p99
      %p101 = scmp.ne.s32.totalorder %s87, %s88
      %p102 = scmp.eq.s32.totalorder %s20, 1
      %p103 = por %p101, %p102
      %p105 = scmp.ne.s32.totalorder %s88, %s104
      %p106 = scmp.eq.s32.totalorder %s20, 0
      %p107 = por %p105, %p106
      %s108 = ssub.s32 %s23, %s39
      %p109 = scmp.eq.s32.totalorder %s108, 0
      %s111 = sadd.s32 %s110, 1
      %s112 = scalar_select %p109, %s110, %s111
      %p115 = pneg %p109
      %p116 = scmp.eq.s32.totalorder %s14, 1
      %p117 = por %p115, %p116
      %p118 = scmp.ne.s32.totalorder %s110, %s113
      %p119 = scmp.eq.s32.totalorder %s14, 0
      %p120 = por %p118, %p119
      %p121 = scmp.ne.s32.totalorder %s110, %s113
      %p122 = scmp.eq.s32.totalorder %s19, 1
      %p123 = por %p121, %p122
      %p124 = scmp.ne.s32.totalorder %s113, %s114
      %p125 = scmp.eq.s32.totalorder %s19, 0
      %p126 = por %p124, %p125
      %p127 = scmp.ne.s32.totalorder %s113, %s114
      %p128 = scmp.eq.s32.totalorder %s20, 1
      %p129 = por %p127, %p128
      %p131 = scmp.ne.s32.totalorder %s114, %s130
      %p132 = scmp.eq.s32.totalorder %s20, 0
      %p133 = por %p131, %p132
      %s134 = ssub.s32 %s21, %s47
      %s135 = ssub.s32 %s22, %s43
      %s136 = sor.u32 %s134, %s135
      %s137 = ssub.s32 %s23, %s39
      %s138 = sor.u32 %s136, %s137
      %p139 = scmp.eq.s32.totalorder %s138, 0
      %s141 = sadd.s32 %s140, 1
      %s142 = scalar_select %p139, %s140, %s141
      %p145 = pneg %p139
      %p146 = scmp.eq.s32.totalorder %s14, 1
      %p147 = por %p145, %p146
      %p148 = scmp.ne.s32.totalorder %s140, %s143
      %p149 = scmp.eq.s32.totalorder %s14, 0
      %p150 = por %p148, %p149
      %p151 = scmp.ne.s32.totalorder %s140, %s143
      %p152 = scmp.eq.s32.totalorder %s19, 1
      %p153 = por %p151, %p152
      %p154 = scmp.ne.s32.totalorder %s143, %s144
      %p155 = scmp.eq.s32.totalorder %s19, 0
      %p156 = por %p154, %p155
      %p157 = scmp.ne.s32.totalorder %s143, %s144
      %p158 = scmp.eq.s32.totalorder %s20, 1
      %p159 = por %p157, %p158
      %p161 = scmp.ne.s32.totalorder %s144, %s160
      %p162 = scmp.eq.s32.totalorder %s20, 0
      %p163 = por %p161, %p162
      %s164 = ssub.s32 %s21, %s47
      %s165 = ssub.s32 %s22, %s43
      %s166 = sor.u32 %s164, %s165
      %s167 = ssub.s32 %s23, %s39
      %s168 = sor.u32 %s166, %s167
      %p169 = scmp.eq.s32.totalorder %s168, 0
      %s171 = sadd.s32 %s170, 1
      %s172 = scalar_select %p169, %s170, %s171
      %p175 = pneg %p169
      %p176 = scmp.eq.s32.totalorder %s14, 1
      %p177 = por %p175, %p176
      %p178 = scmp.ne.s32.totalorder %s170, %s173
      %p179 = scmp.eq.s32.totalorder %s14, 0
      %p180 = por %p178, %p179
      %p181 = scmp.ne.s32.totalorder %s170, %s173
      %p182 = scmp.eq.s32.totalorder %s19, 1
      %p183 = por %p181, %p182
      %p184 = scmp.ne.s32.totalorder %s173, %s174
      %p185 = scmp.eq.s32.totalorder %s19, 0
      %p186 = por %p184, %p185
      %p187 = scmp.ne.s32.totalorder %s173, %s174
      %p188 = scmp.eq.s32.totalorder %s20, 1
      %p189 = por %p187, %p188
      %p191 = scmp.ne.s32.totalorder %s174, %s190
      %p192 = scmp.eq.s32.totalorder %s20, 0
      %p193 = por %p191, %p192
      %s194 = ssub.s32 %s21, %s47
      %s195 = ssub.s32 %s22, %s43
      %s196 = sor.u32 %s194, %s195
      %s197 = ssub.s32 %s23, %s39
      %s198 = sor.u32 %s196, %s197
      %p199 = scmp.eq.s32.totalorder %s198, 0
      %s201 = sadd.s32 %s200, 1
      %s202 = scalar_select %p199, %s200, %s201
      %p205 = pneg %p199
      %p206 = scmp.eq.s32.totalorder %s14, 1
      %p207 = por %p205, %p206
      %p208 = scmp.ne.s32.totalorder %s200, %s203
      %p209 = scmp.eq.s32.totalorder %s14, 0
      %p210 = por %p208, %p209
      %p211 = scmp.ne.s32.totalorder %s200, %s203
      %p212 = scmp.eq.s32.totalorder %s19, 1
      %p213 = por %p211, %p212
      %p214 = scmp.ne.s32.totalorder %s203, %s204
      %p215 = scmp.eq.s32.totalorder %s19, 0
      %p216 = por %p214, %p215
      %p217 = scmp.ne.s32.totalorder %s203, %s204
      %p218 = scmp.eq.s32.totalorder %s20, 1
      %p219 = por %p217, %p218
      %p221 = scmp.ne.s32.totalorder %s204, %s220
      %p222 = scmp.eq.s32.totalorder %s20, 0
      %p223 = por %p221, %p222
      %p224 = scmp.le.s32.totalorder 1, %s14
      %p225 = scmp.lt.s32.totalorder %s14, 3
      %p226 = pnand %p224, %p225
      %p227 = pneg %p226
      // Predicated region
      $region9: #{generator_forward.11} parent=5 // pred_check
        _
      $region10: #{generator_forward.11} parent=5 // pred_check_branch
        %229 = sbr.rel (%p226) target = $region12
      $region11: #{generator_forward.11} parent=5 // pred_region
        %s230 = ssub.s32 %s14, 1
        // Predicated region
        $region13: #{generator_forward.11} parent=11 // pred_check
          %p231 = pneg %p126
        $region14: #{generator_forward.11} parent=11 // pred_check_branch
          %233 = sbr.rel (%p231) target = $region16
        $region15: #{generator_forward.11} parent=11 // pred_region
          %p234 = scmp.lt.s32.totalorder %s27, 0
          %s235 = scalar_select %p234, %s27, 0
          %s236 = scalar_lea.vmem %s2, %s235
        $region16: #{generator_forward.11} parent=11 // pred_fallthru
          _
      $region12: #{generator_forward.11} parent=5 // pred_fallthru
        _
      %p237 = scmp.lt.s32.totalorder %s14, 2
      // Predicated region
      $region17: #{generator_forward.11} parent=5 // pred_check
        %p238 = pneg %p237
      $region18: #{generator_forward.11} parent=5 // pred_check_branch
        %240 = sbr.rel (%p238) target = $region20
      $region19: #{generator_forward.11} parent=5 // pred_region
        // Predicated region
        $region21: #{generator_forward.11} parent=19 // pred_check
          %p241 = pneg %p64
        $region22: #{generator_forward.11} parent=19 // pred_check_branch
          %243 = sbr.rel (%p241) target = $region24
        $region23: #{generator_forward.11} parent=19 // pred_region
          %s244 = smul.u32 2, %s24
          %p245 = scmp.lt.s32.totalorder %s21, 0
          %s246 = scalar_select %p245, %s21, 0
          %p247 = scmp.lt.s32.totalorder %s22, 0
          %s248 = scalar_select %p247, %s22, 0
          %p249 = scmp.lt.s32.totalorder %s244, 3
          %s250 = scalar_select %p249, %s244, 3
          %s251 = smul.addr %s248, 4
          %s252 = sadd.s32 %s250, %s251
          %s253 = smul.addr %s246, 4
          %s254 = sadd.s32 %s252, %s253
          %s255 = smul.addr %s254, 4
          %s256 = scalar_lea.vmem %s0, %s255
          %s257 = smul.u32 2, %s24
        $region24: #{generator_forward.11} parent=19 // pred_fallthru
          _
        // Predicated region
        $region25: #{generator_forward.11} parent=19 // pred_check
          %p258 = pneg %p94
        $region26: #{generator_forward.11} parent=19 // pred_check_branch
          %260 = sbr.rel (%p258) target = $region28
        $region27: #{generator_forward.11} parent=19 // pred_region
          %s261 = smul.u32 32, %s24
          %p262 = scmp.lt.s32.totalorder %s21, 0
          %s263 = scalar_select %p262, %s21, 0
          %p264 = scmp.lt.s32.totalorder %s261, 63
          %s265 = scalar_select %p264, %s261, 63
          %p266 = scmp.lt.s32.totalorder %s23, 0
          %s267 = scalar_select %p266, %s23, 0
          %s268 = sadd.s32 %s267, %s265
          %s269 = smul.addr %s263, 64
          %s270 = sadd.s32 %s268, %s269
          %s271 = smul.addr %s270, 4
          %s272 = scalar_lea.vmem %s1, %s271
          %s273 = smul.u32 32, %s24
        $region28: #{generator_forward.11} parent=19 // pred_fallthru
          _
      $region20: #{generator_forward.11} parent=5 // pred_fallthru
        _
      %p274 = scmp.le.s32.totalorder 1, %s14
      %p275 = scmp.lt.s32.totalorder %s14, 3
      %p276 = pnand %p274, %p275
      %p277 = pneg %p276
      // Predicated region
      $region29: #{generator_forward.11} parent=5 // pred_check
        _
      $region30: #{generator_forward.11} parent=5 // pred_check_branch
        %279 = sbr.rel (%p276) target = $region32
      $region31: #{generator_forward.11} parent=5 // pred_region
        %s280 = ssub.s32 %s14, 1
        %s281 = smul.u32 2, %s28
        %p282 = scmp.lt.s32.totalorder %s25, 0
        %s283 = scalar_select %p282, %s25, 0
        %p284 = scmp.lt.s32.totalorder %s26, 0
        %s285 = scalar_select %p284, %s26, 0
        %p286 = scmp.lt.s32.totalorder %s281, 3
        %s287 = scalar_select %p286, %s281, 3
        %s288 = smul.addr %s285, 4
        %s289 = sadd.s32 %s287, %s288
        %s290 = smul.addr %s283, 4
        %s291 = sadd.s32 %s289, %s290
        %s292 = smul.addr %s291, 4
        %s293 = scalar_lea.vmem %s0, %s292
        %p294 = pneg %p70
        %p295 = pneg %p67
        %s296 = smul.u32 32, %s28
        %p297 = scmp.lt.s32.totalorder %s25, 0
        %s298 = scalar_select %p297, %s25, 0
        %p299 = scmp.lt.s32.totalorder %s296, 63
        %s300 = scalar_select %p299, %s296, 63
        %p301 = scmp.lt.s32.totalorder %s27, 0
        %s302 = scalar_select %p301, %s27, 0
        %s303 = sadd.s32 %s302, %s300
        %s304 = smul.addr %s298, 64
        %s305 = sadd.s32 %s303, %s304
        %s306 = smul.addr %s305, 4
        %s307 = scalar_lea.vmem %s1, %s306
        %p308 = pneg %p100
        %p309 = pneg %p97
        %p310 = scmp.lt.s32.totalorder %s27, 0
        %s311 = scalar_select %p310, %s27, 0
        %s312 = scalar_lea.vmem %s2, %s311
        %p313 = pneg %p126
        %p314 = pneg %p123
        %p315 = pneg %p156
        %p316 = pneg %p153
        %p317 = scmp.lt.s32.totalorder %s25, 0
        %s318 = scalar_select %p317, %s25, 0
        %p319 = scmp.lt.s32.totalorder %s26, 0
        %s320 = scalar_select %p319, %s26, 0
        %p321 = scmp.lt.s32.totalorder %s27, 0
        %s322 = scalar_select %p321, %s27, 0
        %s323 = sadd.s32 %s322, %s320
        %s324 = sadd.s32 %s323, %s318
        %s325 = smul.addr %s324, 4
        %s326 = scalar_lea.vmem %s3, %s325
        %p327 = pneg %p186
        %p328 = pneg %p183
        %p329 = pneg %p216
        %p330 = pneg %p213
        %s331 = smul.u32 2, %s28
        %p332 = scmp.lt.s32.totalorder %s25, 0
        %s333 = scalar_select %p332, %s25, 0
        %p334 = scmp.lt.s32.totalorder %s26, 0
        %s335 = scalar_select %p334, %s26, 0
        %p336 = scmp.lt.s32.totalorder %s331, 3
        %s337 = scalar_select %p336, %s331, 3
        %s338 = smul.addr %s335, 4
        %s339 = sadd.s32 %s337, %s338
        %s340 = smul.addr %s333, 4
        %s341 = sadd.s32 %s339, %s340
        %s342 = smul.addr %s341, 4
        %s343 = scalar_lea.vmem %s0, %s342
        %s344 = smul.u32 2, %s28
        %s345 = smul.u32 32, %s28
        %p346 = scmp.lt.s32.totalorder %s25, 0
        %s347 = scalar_select %p346, %s25, 0
        %p348 = scmp.lt.s32.totalorder %s345, 63
        %s349 = scalar_select %p348, %s345, 63
        %p350 = scmp.lt.s32.totalorder %s27, 0
        %s351 = scalar_select %p350, %s27, 0
        %s352 = sadd.s32 %s351, %s349
        %s353 = smul.addr %s347, 64
        %s354 = sadd.s32 %s352, %s353
        %s355 = smul.addr %s354, 4
        %s356 = scalar_lea.vmem %s1, %s355
        %s357 = smul.u32 32, %s28
        %p358 = scmp.lt.s32.totalorder %s27, 0
        %s359 = scalar_select %p358, %s27, 0
        %s360 = scalar_lea.vmem %s2, %s359
        %p361 = scmp.lt.s32.totalorder %s25, 0
        %s362 = scalar_select %p361, %s25, 0
        %p363 = scmp.lt.s32.totalorder %s26, 0
        %s364 = scalar_select %p363, %s26, 0
        %p365 = scmp.lt.s32.totalorder %s27, 0
        %s366 = scalar_select %p365, %s27, 0
        %s367 = sadd.s32 %s366, %s364
        %s368 = sadd.s32 %s367, %s362
        %s369 = smul.addr %s368, 4
        %s370 = scalar_lea.vmem %s3, %s369
        %p373 = scmp.eq.s32.totalorder %s28, 0
        // Predicated region
        $region33: #{generator_forward.11} parent=31 // pred_check
          %p374 = pneg %p373
        $region34: #{generator_forward.11} parent=31 // pred_check_branch
          %376 = sbr.rel (%p374) target = $region36
        $region35: #{generator_forward.11} parent=31 // pred_region
          %377 = vst [vmem:[#allocation2] sm:$0xff] 0.0
        $region36: #{generator_forward.11} parent=31 // pred_fallthru
          _
        %v378 = vld [vmem:[%s343] sm:$0xff]
        %vm379 = vcmp.ge.bf16.partialorder %v378, 0
        %v380 = vmul.bf16 %v378, 1045249613
        %v381 = vsel %vm379, %v378, %v380
        %v382 = vld [vmem:[#allocation2] sm:$0xff]
        %v383 = vld [vmem:[%s356] sm:$0xf]
        %v384 = vld [vmem:[%s356 + $0x4] sm:$0xf]
        %v385 = vld [vmem:[%s356 + $0x8] sm:$0xf]
        %v386 = vld [vmem:[%s356 + $0xc] sm:$0xf]
        %v387 = vld [vmem:[%s356 + $0x10] sm:$0xf]
        %v388 = vld [vmem:[%s356 + $0x14] sm:$0xf]
        %v389 = vld [vmem:[%s356 + $0x18] sm:$0xf]
        %v390 = vld [vmem:[%s356 + $0x1c] sm:$0xf]
        %v391 = vld [vmem:[%s356 + $0x20] sm:$0xf]
        %v392 = vld [vmem:[%s356 + $0x24] sm:$0xf]
        %v393 = vld [vmem:[%s356 + $0x28] sm:$0xf]
        %v394 = vld [vmem:[%s356 + $0x2c] sm:$0xf]
        %v395 = vld [vmem:[%s356 + $0x30] sm:$0xf]
        %v396 = vld [vmem:[%s356 + $0x34] sm:$0xf]
        %v397 = vld [vmem:[%s356 + $0x38] sm:$0xf]
        %v398 = vld [vmem:[%s356 + $0x3c] sm:$0xf]
        %v399 = vld [vmem:[%s356 + $0x40] sm:$0xf]
        %v400 = vld [vmem:[%s356 + $0x44] sm:$0xf]
        %v401 = vld [vmem:[%s356 + $0x48] sm:$0xf]
        %v402 = vld [vmem:[%s356 + $0x4c] sm:$0xf]
        %v403 = vld [vmem:[%s356 + $0x50] sm:$0xf]
        %v404 = vld [vmem:[%s356 + $0x54] sm:$0xf]
        %v405 = vld [vmem:[%s356 + $0x58] sm:$0xf]
        %v406 = vld [vmem:[%s356 + $0x5c] sm:$0xf]
        %v407 = vld [vmem:[%s356 + $0x60] sm:$0xf]
        %v408 = vld [vmem:[%s356 + $0x64] sm:$0xf]
        %v409 = vld [vmem:[%s356 + $0x68] sm:$0xf]
        %v410 = vld [vmem:[%s356 + $0x6c] sm:$0xf]
        %v411 = vld [vmem:[%s356 + $0x70] sm:$0xf]
        %v412 = vld [vmem:[%s356 + $0x74] sm:$0xf]
        %v413 = vld [vmem:[%s356 + $0x78] sm:$0xf]
        %v414 = vld [vmem:[%s356 + $0x7c] sm:$0xf]
        %v416 = vunpack.c.l.b16 %v381
        %v417 = vunpack.c.h.b16 %v381
        %v418 = vpack.c.b16 %v416, %v416
        %v419 = vpack.c.b16 %v417, %v417
        %v454 = vunpack.c.l.b16 %v383
        %v455 = vunpack.c.l.b16 %v384
        %v456 = vunpack.c.l.b16 %v385
        %v457 = vunpack.c.l.b16 %v386
        %v458 = vunpack.c.l.b16 %v387
        %v459 = vunpack.c.l.b16 %v388
        %v460 = vunpack.c.l.b16 %v389
        %v461 = vunpack.c.l.b16 %v390
        %v462 = vunpack.c.l.b16 %v391
        %v463 = vunpack.c.l.b16 %v392
        %v464 = vunpack.c.l.b16 %v393
        %v465 = vunpack.c.l.b16 %v394
        %v466 = vunpack.c.l.b16 %v395
        %v467 = vunpack.c.l.b16 %v396
        %v468 = vunpack.c.l.b16 %v397
        %v469 = vunpack.c.l.b16 %v398
        %v470 = vunpack.c.l.b16 %v399
        %v471 = vunpack.c.l.b16 %v400
        %v472 = vunpack.c.l.b16 %v401
        %v473 = vunpack.c.l.b16 %v402
        %v474 = vunpack.c.l.b16 %v403
        %v475 = vunpack.c.l.b16 %v404
        %v476 = vunpack.c.l.b16 %v405
        %v477 = vunpack.c.l.b16 %v406
        %v478 = vunpack.c.l.b16 %v407
        %v479 = vunpack.c.l.b16 %v408
        %v480 = vunpack.c.l.b16 %v409
        %v481 = vunpack.c.l.b16 %v410
        %v482 = vunpack.c.l.b16 %v411
        %v483 = vunpack.c.l.b16 %v412
        %v484 = vunpack.c.l.b16 %v413
        %v485 = vunpack.c.l.b16 %v414
        %v486 = vpack.c.b16 %v455, %v454
        %v487 = vpack.c.b16 %v457, %v456
        %v488 = vpack.c.b16 %v459, %v458
        %v489 = vpack.c.b16 %v461, %v460
        %v490 = vpack.c.b16 %v463, %v462
        %v491 = vpack.c.b16 %v465, %v464
        %v492 = vpack.c.b16 %v467, %v466
        %v493 = vpack.c.b16 %v469, %v468
        %v494 = vpack.c.b16 %v471, %v470
        %v495 = vpack.c.b16 %v473, %v472
        %v496 = vpack.c.b16 %v475, %v474
        %v497 = vpack.c.b16 %v477, %v476
        %v498 = vpack.c.b16 %v479, %v478
        %v499 = vpack.c.b16 %v481, %v480
        %v500 = vpack.c.b16 %v483, %v482
        %v501 = vpack.c.b16 %v485, %v484
        %518 = vmatprep.subr.bf16.mxu0 0
        %519 = vmatpush1.bf16.msra.mxu0 %v486
        %520 = vmatprep.subr.bf16.mxu0 0
        %521 = vmatpush1.bf16.msra.mxu0 %v487
        %522 = vmatprep.subr.bf16.mxu0 0
        %523 = vmatpush1.bf16.msra.mxu0 %v488
        %524 = vmatprep.subr.bf16.mxu0 0
        %525 = vmatpush1.bf16.msra.mxu0 %v489
        %526 = vmatprep.subr.bf16.mxu0 0
        %527 = vmatpush1.bf16.msra.mxu0 %v490
        %528 = vmatprep.subr.bf16.mxu0 0
        %529 = vmatpush1.bf16.msra.mxu0 %v491
        %530 = vmatprep.subr.bf16.mxu0 0
        %531 = vmatpush1.bf16.msra.mxu0 %v492
        %532 = vmatprep.subr.bf16.mxu0 0
        %533 = vmatpush1.bf16.msra.mxu0 %v493
        %534 = vmatprep.subr.bf16.mxu0 0
        %535 = vmatpush1.bf16.msra.mxu0 %v494
        %536 = vmatprep.subr.bf16.mxu0 0
        %537 = vmatpush1.bf16.msra.mxu0 %v495
        %538 = vmatprep.subr.bf16.mxu0 0
        %539 = vmatpush1.bf16.msra.mxu0 %v496
        %540 = vmatprep.subr.bf16.mxu0 0
        %541 = vmatpush1.bf16.msra.mxu0 %v497
        %542 = vmatprep.subr.bf16.mxu0 0
        %543 = vmatpush1.bf16.msra.mxu0 %v498
        %544 = vmatprep.subr.bf16.mxu0 0
        %545 = vmatpush1.bf16.msra.mxu0 %v499
        %546 = vmatprep.subr.bf16.mxu0 0
        %547 = vmatpush1.bf16.msra.mxu0 %v500
        %548 = vmatprep.subr.bf16.mxu0 0
        %549 = vmatpush1.bf16.msra.mxu0 %v501
        %550 = vmatprep.mubr.bf16.mxu0 %v419
        %551 = vmatmul.mubr.bf16.gmra.mrb[0].mxu0 %v418
        %v552 = vpop.f32.mrb[0].mxu0
        %v553 = vadd.f32 0.0, %v552
        %v554 = vpop.f32.mrb[0].mxu0
        %v555 = vpop.f32.mrb[0].mxu0
        %v556 = vpop.f32.mrb[0].mxu0
        %557 = vdwg.mxu0
        %v558 = vadd.f32 %v382, %v553
        %559 = vst [vmem:[#allocation2] sm:$0xff] %v558
        %p560 = scmp.eq.s32.totalorder %s28, 1
        // Predicated region
        $region37: #{generator_forward.11} parent=31 // pred_check
          %p561 = pneg %p560
        $region38: #{generator_forward.11} parent=31 // pred_check_branch
          %563 = sbr.rel (%p561) target = $region40
        $region39: #{generator_forward.11} parent=31 // pred_region
          %v564 = vld [vmem:[#allocation2] sm:$0xff]
          %v565 = vrot.slane %v564, 4
          %v566 = vadd.f32 %v564, %v565
          %v567 = vrot.slane %v566, 2
          %v568 = vadd.f32 %v566, %v567
          %v569 = vrot.slane %v568, 1
          %v570 = vadd.f32 %v568, %v569
          %v571 = vmul.f32 %v564, %v564
          %v572 = vrot.slane %v571, 4
          %v573 = vadd.f32 %v571, %v572
          %v574 = vrot.slane %v573, 2
          %v575 = vadd.f32 %v573, %v574
          %v576 = vrot.slane %v575, 1
          %v577 = vadd.f32 %v575, %v576
          %578 = vst [vmem:[#allocation3] sm:$0xff] %v570
          %579 = vst [vmem:[#allocation5] sm:$0xff] %v577
          %v580 = vld [vmem:[%s360] sm:$0x1]
          %v582 = vlaneseq
          %v583 = vshrl.u32 %v582, 7
          %v584 = vsub.s32 0, %v583
          %v585 = vrot.slane %v580, %v584
          %v587 = vadd.f32 %v564, %v585
          %v588 = vpack.c.bf16 %v587, %v587
          %589 = vst [vmem:[%s370] sm:$0xf] %v588
        $region40: #{generator_forward.11} parent=31 // pred_fallthru
          _
        %p590 = scmp.lt.s32.totalorder %s25, 0
        %s591 = scalar_select %p590, %s25, 0
        %p592 = scmp.lt.s32.totalorder %s26, 0
        %s593 = scalar_select %p592, %s26, 0
        %p594 = scmp.lt.s32.totalorder %s27, 0
        %s595 = scalar_select %p594, %s27, 0
        %s596 = sadd.s32 %s595, %s593
        %s597 = sadd.s32 %s596, %s591
        %s598 = smul.addr %s597, 4
        %s599 = scalar_lea.vmem %s3, %s598
        // Predicated region
        $region41: #{generator_forward.11} parent=31 // pred_check
          %p600 = pneg %p153
        $region42: #{generator_forward.11} parent=31 // pred_check_branch
          %602 = sbr.rel (%p600) target = $region44
        $region43: #{generator_forward.11} parent=31 // pred_region
          _
        $region44: #{generator_forward.11} parent=31 // pred_fallthru
          _
        // Predicated region
        $region45: #{generator_forward.11} parent=31 // pred_check
          %p603 = pneg %p183
        $region46: #{generator_forward.11} parent=31 // pred_check_branch
          %605 = sbr.rel (%p603) target = $region48
        $region47: #{generator_forward.11} parent=31 // pred_region
          %s607 = ssub.s32 128, 128
          %608 = vsyncadd [#allocation4], %s607
          %s609 = sadd.s32 %s27, %s26
          %s610 = sadd.s32 %s609, %s25
          %s611 = smul.addr %s610, 128
          %s612 = scalar_lea.hbm %s4, %s611
          %s614 = sshll.u32 [#allocation3], 4
          %s615 = int_to_ptr.vmem [resolvable:$true] %s614
          %617 = dma.vmem_to_hbm [thread:$0]  %s615, 128, %s612, [#allocation4]
        $region48: #{generator_forward.11} parent=31 // pred_fallthru
          _
        // Predicated region
        $region49: #{generator_forward.11} parent=31 // pred_check
          %p618 = pneg %p213
        $region50: #{generator_forward.11} parent=31 // pred_check_branch
          %620 = sbr.rel (%p618) target = $region52
        $region51: #{generator_forward.11} parent=31 // pred_region
          %s622 = ssub.s32 128, 128
          %623 = vsyncadd [#allocation6], %s622
          %s624 = sadd.s32 %s27, %s26
          %s625 = sadd.s32 %s624, %s25
          %s626 = smul.addr %s625, 128
          %s627 = scalar_lea.hbm %s5, %s626
          %s629 = sshll.u32 [#allocation5], 4
          %s630 = int_to_ptr.vmem [resolvable:$true] %s629
          %632 = dma.vmem_to_hbm [thread:$0]  %s630, 128, %s627, [#allocation6]
        $region52: #{generator_forward.11} parent=31 // pred_fallthru
          _
        // Predicated region
        $region53: #{generator_forward.11} parent=31 // pred_check
          %p633 = pneg %p153
        $region54: #{generator_forward.11} parent=31 // pred_check_branch
          %635 = sbr.rel (%p633) target = $region56
        $region55: #{generator_forward.11} parent=31 // pred_region
          %p636 = scmp.lt.s32.totalorder %s25, 0
          %s637 = scalar_select %p636, %s25, 0
          %p638 = scmp.lt.s32.totalorder %s26, 0
          %s639 = scalar_select %p638, %s26, 0
          %p640 = scmp.lt.s32.totalorder %s27, 0
          %s641 = scalar_select %p640, %s27, 0
          %s642 = sadd.s32 %s641, %s639
          %s643 = sadd.s32 %s642, %s637
          %s644 = smul.addr %s643, 4
          %s645 = scalar_lea.vmem %s3, %s644
        $region56: #{generator_forward.11} parent=31 // pred_fallthru
          _
        // Predicated region
        $region57: #{generator_forward.11} parent=31 // pred_check
          %p646 = pneg %p183
        $region58: #{generator_forward.11} parent=31 // pred_check_branch
          %648 = sbr.rel (%p646) target = $region60
        $region59: #{generator_forward.11} parent=31 // pred_region
          %649 = dma.done [#allocation4], 128
        $region60: #{generator_forward.11} parent=31 // pred_fallthru
          _
        // Predicated region
        $region61: #{generator_forward.11} parent=31 // pred_check
          %p650 = pneg %p213
        $region62: #{generator_forward.11} parent=31 // pred_check_branch
          %652 = sbr.rel (%p650) target = $region64
        $region63: #{generator_forward.11} parent=31 // pred_region
          %653 = dma.done [#allocation6], 128
        $region64: #{generator_forward.11} parent=31 // pred_fallthru
          _
      $region32: #{generator_forward.11} parent=5 // pred_fallthru
        _
      %p654 = scmp.le.s32.totalorder 2, %s14
      // Predicated region
      $region65: #{generator_forward.11} parent=5 // pred_check
        %p655 = pneg %p654
      $region66: #{generator_forward.11} parent=5 // pred_check_branch
        %657 = sbr.rel (%p655) target = $region68
      $region67: #{generator_forward.11} parent=5 // pred_region
        %s658 = ssub.s32 %s14, 2
      $region68: #{generator_forward.11} parent=5 // pred_fallthru
        _
    $region6: #{generator_forward.11} parent=1 // loop_footer
      %s18 = sadd.s32 1, %s14
    $region7: #{generator_forward.11} parent=1 // loop_footer_branch
      %13 = sbr.rel target = $region3
    $region8: #{generator_forward.11} parent=1 // loop_exit
      _
    %659 = vsyncpa [#allocation4], 1
    %s660 = scalar_lea.sflag [#allocation4], 1
    %661 = vsyncpa %s660, 1
    %662 = vsyncpa [#allocation6], 1

// kernel: generator_forward.12
$region0: #{generator_forward.12}
  #allocation0 [shape = 'u32[]', space=smem, size = 0x4, offset = 0x4, fixed_abs, tag = 'smem constant byte address 0x4 - core index']
  #allocation1 [shape = 'u32[144,128]{1,0:T(1,128)}', space=vmem, size = 0x12000, scoped, tag = 'internal scratch']
  #allocation2 [shape = 'f32[8,128]{1,0:T(8,128)}', space=vmem, size = 0x1000, scoped, tag = 'scratch operand']
  %s0 = inlined_call_operand.vmem [shape: bf16[4,8,256], index: 0, kind: input, shape index: {}]
  %s1 = inlined_call_operand.vmem [shape: bf16[4,256,128], index: 1, kind: input, shape index: {}]
  %s2 = inlined_call_operand.vmem [shape: f32[1,128], index: 2, kind: input, shape index: {}]
  %s3 = inlined_call_operand.vmem [shape: f32[4,8,128], index: 3, kind: output, shape index: {0}]
  %s4 = inlined_call_operand.vmem [shape: f32[4,8,128], index: 4, kind: output, shape index: {1}]
  %s5 = inlined_call_operand.vmem [shape: f32[4,8,128], index: 5, kind: output, shape index: {2}]
  %6 = xla_tuple %s3, %s4, %s5
  %s7 = sld [smem:[#allocation0]]
  $region69: #{generator_forward.12} parent=0
    _
  %s9 = ssub.s32 1, %s7
  %s10 = scalar_select 0, %s9, %s7
  loop: start=0, step=1, limit=6
  $region2: #{generator_forward.12} parent=0 // loop_pre_header
    _
  $region3: #{generator_forward.12} parent=0 // loop_header
    %s12 = sphi 0, %s16
    %p13 = scmp.ge.s32.totalorder %s12, 6
    %s19 = sphi 0, %s45
    %s20 = sphi 0, %s41
    %s21 = sphi 0, %s37
    %s22 = sphi 0, %s33
    %s23 = sphi 0, %s19
    %s24 = sphi 0, %s20
    %s25 = sphi 0, %s21
    %s26 = sphi 0, %s22
    %s27 = sphi 0, %s23
    %s28 = sphi 0, %s24
    %s29 = sphi 0, %s25
    %s30 = sphi 0, %s26
    %s52 = sphi 0, %s54
    %s55 = sphi 0, %s52
    %s56 = sphi 0, %s55
    %s72 = sphi 0, %s56
    %s82 = sphi 0, %s84
    %s85 = sphi 0, %s82
    %s86 = sphi 0, %s85
    %s102 = sphi 0, %s86
    %s108 = sphi 0, %s110
    %s111 = sphi 0, %s108
    %s112 = sphi 0, %s111
    %s128 = sphi 0, %s112
    %s138 = sphi 0, %s140
    %s141 = sphi 0, %s138
    %s142 = sphi 0, %s141
    %s158 = sphi 0, %s142
    %s168 = sphi 0, %s170
    %s171 = sphi 0, %s168
    %s172 = sphi 0, %s171
    %s188 = sphi 0, %s172
    %s198 = sphi 0, %s200
    %s201 = sphi 0, %s198
    %s202 = sphi 0, %s201
    %s218 = sphi 0, %s202
  $region4: #{generator_forward.12} parent=0 // loop_header_branch
    %15 = sbr.rel (%p13) target = $region8
  $region5: #{generator_forward.12} parent=0 // loop_body
    %s17 = ssub.s32 %s12, 1
    %s18 = ssub.s32 %s12, 2
    %s31 = sadd.s32 1, %s22
    %p32 = scmp.ge.s32.totalorder %s31, 1
    %s33 = scalar_select %p32, 0, %s31
    %s34 = sadd.s32 1, %s21
    %s35 = scalar_select %p32, %s34, %s21
    %p36 = scmp.ge.s32.totalorder %s35, 1
    %s37 = scalar_select %p36, 0, %s35
    %s38 = sadd.s32 1, %s20
    %s39 = scalar_select %p36, %s38, %s20
    %p40 = scmp.ge.s32.totalorder %s39, 1
    %s41 = scalar_select %p40, 0, %s39
    %s42 = sadd.s32 1, %s19
    %s43 = scalar_select %p40, %s42, %s19
    %p44 = scmp.ge.s32.totalorder %s43, 4
    %s45 = scalar_select %p44, 0, %s43
    %s46 = ssub.s32 %s19, %s45
    %s47 = ssub.s32 %s20, %s41
    %s48 = sor.u32 %s46, %s47
    %s49 = ssub.s32 %s22, %s33
    %s50 = sor.u32 %s48, %s49
    %p51 = scmp.eq.s32.totalorder %s50, 0
    %s53 = sadd.s32 %s52, 1
    %s54 = scalar_select %p51, %s52, %s53
    %p57 = pneg %p51
    %p58 = scmp.eq.s32.totalorder %s12, 3
    %p59 = por %p57, %p58
    %p60 = scmp.ne.s32.totalorder %s52, %s55
    %p61 = scmp.eq.s32.totalorder %s12, 0
    %p62 = por %p60, %p61
    %p63 = scmp.ne.s32.totalorder %s52, %s55
    %p64 = scmp.eq.s32.totalorder %s17, 3
    %p65 = por %p63, %p64
    %p66 = scmp.ne.s32.totalorder %s55, %s56
    %p67 = scmp.eq.s32.totalorder %s17, 0
    %p68 = por %p66, %p67
    %p69 = scmp.ne.s32.totalorder %s55, %s56
    %p70 = scmp.eq.s32.totalorder %s18, 3
    %p71 = por %p69, %p70
    %p73 = scmp.ne.s32.totalorder %s56, %s72
    %p74 = scmp.eq.s32.totalorder %s18, 0
    %p75 = por %p73, %p74
    %s76 = ssub.s32 %s19, %s45
    %s77 = ssub.s32 %s22, %s33
    %s78 = sor.u32 %s76, %s77
    %s79 = ssub.s32 %s21, %s37
    %s80 = sor.u32 %s78, %s79
    %p81 = scmp.eq.s32.totalorder %s80, 0
    %s83 = sadd.s32 %s82, 1
    %s84 = scalar_select %p81, %s82, %s83
    %p87 = pneg %p81
    %p88 = scmp.eq.s32.totalorder %s12, 3
    %p89 = por %p87, %p88
    %p90 = scmp.ne.s32.totalorder %s82, %s85
    %p91 = scmp.eq.s32.totalorder %s12, 0
    %p92 = por %p90, %p91
    %p93 = scmp.ne.s32.totalorder %s82, %s85
    %p94 = scmp.eq.s32.totalorder %s17, 3
    %p95 = por %p93, %p94
    %p96 = scmp.ne.s32.totalorder %s85, %s86
    %p97 = scmp.eq.s32.totalorder %s17, 0
    %p98 = por %p96, %p97
    %p99 = scmp.ne.s32.totalorder %s85, %s86
    %p100 = scmp.eq.s32.totalorder %s18, 3
    %p101 = por %p99, %p100
    %p103 = scmp.ne.s32.totalorder %s86, %s102
    %p104 = scmp.eq.s32.totalorder %s18, 0
    %p105 = por %p103, %p104
    %s106 = ssub.s32 %s21, %s37
    %p107 = scmp.eq.s32.totalorder %s106, 0
    %s109 = sadd.s32 %s108, 1
    %s110 = scalar_select %p107, %s108, %s109
    %p113 = pneg %p107
    %p114 = scmp.eq.s32.totalorder %s12, 3
    %p115 = por %p113, %p114
    %p116 = scmp.ne.s32.totalorder %s108, %s111
    %p117 = scmp.eq.s32.totalorder %s12, 0
    %p118 = por %p116, %p117
    %p119 = scmp.ne.s32.totalorder %s108, %s111
    %p120 = scmp.eq.s32.totalorder %s17, 3
    %p121 = por %p119, %p120
    %p122 = scmp.ne.s32.totalorder %s111, %s112
    %p123 = scmp.eq.s32.totalorder %s17, 0
    %p124 = por %p122, %p123
    %p125 = scmp.ne.s32.totalorder %s111, %s112
    %p126 = scmp.eq.s32.totalorder %s18, 3
    %p127 = por %p125, %p126
    %p129 = scmp.ne.s32.totalorder %s112, %s128
    %p130 = scmp.eq.s32.totalorder %s18, 0
    %p131 = por %p129, %p130
    %s132 = ssub.s32 %s19, %s45
    %s133 = ssub.s32 %s20, %s41
    %s134 = sor.u32 %s132, %s133
    %s135 = ssub.s32 %s21, %s37
    %s136 = sor.u32 %s134, %s135
    %p137 = scmp.eq.s32.totalorder %s136, 0
    %s139 = sadd.s32 %s138, 1
    %s140 = scalar_select %p137, %s138, %s139
    %p143 = pneg %p137
    %p144 = scmp.eq.s32.totalorder %s12, 3
    %p145 = por %p143, %p144
    %p146 = scmp.ne.s32.totalorder %s138, %s141
    %p147 = scmp.eq.s32.totalorder %s12, 0
    %p148 = por %p146, %p147
    %p149 = scmp.ne.s32.totalorder %s138, %s141
    %p150 = scmp.eq.s32.totalorder %s17, 3
    %p151 = por %p149, %p150
    %p152 = scmp.ne.s32.totalorder %s141, %s142
    %p153 = scmp.eq.s32.totalorder %s17, 0
    %p154 = por %p152, %p153
    %p155 = scmp.ne.s32.totalorder %s141, %s142
    %p156 = scmp.eq.s32.totalorder %s18, 3
    %p157 = por %p155, %p156
    %p159 = scmp.ne.s32.totalorder %s142, %s158
    %p160 = scmp.eq.s32.totalorder %s18, 0
    %p161 = por %p159, %p160
    %s162 = ssub.s32 %s19, %s45
    %s163 = ssub.s32 %s20, %s41
    %s164 = sor.u32 %s162, %s163
    %s165 = ssub.s32 %s21, %s37
    %s166 = sor.u32 %s164, %s165
    %p167 = scmp.eq.s32.totalorder %s166, 0
    %s169 = sadd.s32 %s168, 1
    %s170 = scalar_select %p167, %s168, %s169
    %p173 = pneg %p167
    %p174 = scmp.eq.s32.totalorder %s12, 3
    %p175 = por %p173, %p174
    %p176 = scmp.ne.s32.totalorder %s168, %s171
    %p177 = scmp.eq.s32.totalorder %s12, 0
    %p178 = por %p176, %p177
    %p179 = scmp.ne.s32.totalorder %s168, %s171
    %p180 = scmp.eq.s32.totalorder %s17, 3
    %p181 = por %p179, %p180
    %p182 = scmp.ne.s32.totalorder %s171, %s172
    %p183 = scmp.eq.s32.totalorder %s17, 0
    %p184 = por %p182, %p183
    %p185 = scmp.ne.s32.totalorder %s171, %s172
    %p186 = scmp.eq.s32.totalorder %s18, 3
    %p187 = por %p185, %p186
    %p189 = scmp.ne.s32.totalorder %s172, %s188
    %p190 = scmp.eq.s32.totalorder %s18, 0
    %p191 = por %p189, %p190
    %s192 = ssub.s32 %s19, %s45
    %s193 = ssub.s32 %s20, %s41
    %s194 = sor.u32 %s192, %s193
    %s195 = ssub.s32 %s21, %s37
    %s196 = sor.u32 %s194, %s195
    %p197 = scmp.eq.s32.totalorder %s196, 0
    %s199 = sadd.s32 %s198, 1
    %s200 = scalar_select %p197, %s198, %s199
    %p203 = pneg %p197
    %p204 = scmp.eq.s32.totalorder %s12, 3
    %p205 = por %p203, %p204
    %p206 = scmp.ne.s32.totalorder %s198, %s201
    %p207 = scmp.eq.s32.totalorder %s12, 0
    %p208 = por %p206, %p207
    %p209 = scmp.ne.s32.totalorder %s198, %s201
    %p210 = scmp.eq.s32.totalorder %s17, 3
    %p211 = por %p209, %p210
    %p212 = scmp.ne.s32.totalorder %s201, %s202
    %p213 = scmp.eq.s32.totalorder %s17, 0
    %p214 = por %p212, %p213
    %p215 = scmp.ne.s32.totalorder %s201, %s202
    %p216 = scmp.eq.s32.totalorder %s18, 3
    %p217 = por %p215, %p216
    %p219 = scmp.ne.s32.totalorder %s202, %s218
    %p220 = scmp.eq.s32.totalorder %s18, 0
    %p221 = por %p219, %p220
    %p222 = scmp.le.s32.totalorder 1, %s12
    %p223 = scmp.lt.s32.totalorder %s12, 5
    %p224 = pnand %p222, %p223
    %p225 = pneg %p224
    // Predicated region
    $region9: #{generator_forward.12} parent=5 // pred_check
      _
    $region10: #{generator_forward.12} parent=5 // pred_check_branch
      %227 = sbr.rel (%p224) target = $region12
    $region11: #{generator_forward.12} parent=5 // pred_region
      %s228 = ssub.s32 %s12, 1
      // Predicated region
      $region13: #{generator_forward.12} parent=11 // pred_check
        %p229 = pneg %p124
      $region14: #{generator_forward.12} parent=11 // pred_check_branch
        %231 = sbr.rel (%p229) target = $region16
      $region15: #{generator_forward.12} parent=11 // pred_region
        %p232 = scmp.lt.s32.totalorder %s25, 0
        %s233 = scalar_select %p232, %s25, 0
        %s234 = scalar_lea.vmem %s2, %s233
      $region16: #{generator_forward.12} parent=11 // pred_fallthru
        _
    $region12: #{generator_forward.12} parent=5 // pred_fallthru
      _
    %p235 = scmp.lt.s32.totalorder %s12, 4
    // Predicated region
    $region17: #{generator_forward.12} parent=5 // pred_check
      %p236 = pneg %p235
    $region18: #{generator_forward.12} parent=5 // pred_check_branch
      %238 = sbr.rel (%p236) target = $region20
    $region19: #{generator_forward.12} parent=5 // pred_region
      // Predicated region
      $region21: #{generator_forward.12} parent=19 // pred_check
        %p239 = pneg %p62
      $region22: #{generator_forward.12} parent=19 // pred_check_branch
        %241 = sbr.rel (%p239) target = $region24
      $region23: #{generator_forward.12} parent=19 // pred_region
        %s242 = smul.u32 2, %s22
        %p243 = scmp.lt.s32.totalorder %s19, 3
        %s244 = scalar_select %p243, %s19, 3
        %p245 = scmp.lt.s32.totalorder %s20, 0
        %s246 = scalar_select %p245, %s20, 0
        %p247 = scmp.lt.s32.totalorder %s242, 1
        %s248 = scalar_select %p247, %s242, 1
        %s249 = smul.addr %s246, 2
        %s250 = sadd.s32 %s248, %s249
        %s251 = smul.addr %s244, 2
        %s252 = sadd.s32 %s250, %s251
        %s253 = smul.addr %s252, 4
        %s254 = scalar_lea.vmem %s0, %s253
        %s255 = smul.u32 2, %s22
      $region24: #{generator_forward.12} parent=19 // pred_fallthru
        _
      // Predicated region
      $region25: #{generator_forward.12} parent=19 // pred_check
        %p256 = pneg %p92
      $region26: #{generator_forward.12} parent=19 // pred_check_branch
        %258 = sbr.rel (%p256) target = $region28
      $region27: #{generator_forward.12} parent=19 // pred_region
        %s259 = smul.u32 32, %s22
        %p260 = scmp.lt.s32.totalorder %s19, 3
        %s261 = scalar_select %p260, %s19, 3
        %p262 = scmp.lt.s32.totalorder %s259, 31
        %s263 = scalar_select %p262, %s259, 31
        %p264 = scmp.lt.s32.totalorder %s21, 0
        %s265 = scalar_select %p264, %s21, 0
        %s266 = sadd.s32 %s265, %s263
        %s267 = smul.addr %s261, 32
        %s268 = sadd.s32 %s266, %s267
        %s269 = smul.addr %s268, 4
        %s270 = scalar_lea.vmem %s1, %s269
        %s271 = smul.u32 32, %s22
      $region28: #{generator_forward.12} parent=19 // pred_fallthru
        _
    $region20: #{generator_forward.12} parent=5 // pred_fallthru
      _
    %p272 = scmp.le.s32.totalorder 1, %s12
    %p273 = scmp.lt.s32.totalorder %s12, 5
    %p274 = pnand %p272, %p273
    %p275 = pneg %p274
    // Predicated region
    $region29: #{generator_forward.12} parent=5 // pred_check
      _
    $region30: #{generator_forward.12} parent=5 // pred_check_branch
      %277 = sbr.rel (%p274) target = $region32
    $region31: #{generator_forward.12} parent=5 // pred_region
      %s278 = ssub.s32 %s12, 1
      %s279 = smul.u32 2, %s26
      %p280 = scmp.lt.s32.totalorder %s23, 3
      %s281 = scalar_select %p280, %s23, 3
      %p282 = scmp.lt.s32.totalorder %s24, 0
      %s283 = scalar_select %p282, %s24, 0
      %p284 = scmp.lt.s32.totalorder %s279, 1
      %s285 = scalar_select %p284, %s279, 1
      %s286 = smul.addr %s283, 2
      %s287 = sadd.s32 %s285, %s286
      %s288 = smul.addr %s281, 2
      %s289 = sadd.s32 %s287, %s288
      %s290 = smul.addr %s289, 4
      %s291 = scalar_lea.vmem %s0, %s290
      %p292 = pneg %p68
      %p293 = pneg %p65
      %s294 = smul.u32 32, %s26
      %p295 = scmp.lt.s32.totalorder %s23, 3
      %s296 = scalar_select %p295, %s23, 3
      %p297 = scmp.lt.s32.totalorder %s294, 31
      %s298 = scalar_select %p297, %s294, 31
      %p299 = scmp.lt.s32.totalorder %s25, 0
      %s300 = scalar_select %p299, %s25, 0
      %s301 = sadd.s32 %s300, %s298
      %s302 = smul.addr %s296, 32
      %s303 = sadd.s32 %s301, %s302
      %s304 = smul.addr %s303, 4
      %s305 = scalar_lea.vmem %s1, %s304
      %p306 = pneg %p98
      %p307 = pneg %p95
      %p308 = scmp.lt.s32.totalorder %s25, 0
      %s309 = scalar_select %p308, %s25, 0
      %s310 = scalar_lea.vmem %s2, %s309
      %p311 = pneg %p124
      %p312 = pneg %p121
      %p313 = pneg %p154
      %p314 = pneg %p151
      %p315 = scmp.lt.s32.totalorder %s23, 3
      %s316 = scalar_select %p315, %s23, 3
      %p317 = scmp.lt.s32.totalorder %s24, 0
      %s318 = scalar_select %p317, %s24, 0
      %p319 = scmp.lt.s32.totalorder %s25, 0
      %s320 = scalar_select %p319, %s25, 0
      %s321 = sadd.s32 %s320, %s318
      %s322 = sadd.s32 %s321, %s316
      %s323 = smul.addr %s322, 8
      %s324 = scalar_lea.vmem %s3, %s323
      %p325 = pneg %p184
      %p326 = pneg %p181
      %p327 = scmp.lt.s32.totalorder %s23, 3
      %s328 = scalar_select %p327, %s23, 3
      %p329 = scmp.lt.s32.totalorder %s24, 0
      %s330 = scalar_select %p329, %s24, 0
      %p331 = scmp.lt.s32.totalorder %s25, 0
      %s332 = scalar_select %p331, %s25, 0
      %s333 = sadd.s32 %s332, %s330
      %s334 = sadd.s32 %s333, %s328
      %s335 = smul.addr %s334, 8
      %s336 = scalar_lea.vmem %s4, %s335
      %p337 = pneg %p214
      %p338 = pneg %p211
      %p339 = scmp.lt.s32.totalorder %s23, 3
      %s340 = scalar_select %p339, %s23, 3
      %p341 = scmp.lt.s32.totalorder %s24, 0
      %s342 = scalar_select %p341, %s24, 0
      %p343 = scmp.lt.s32.totalorder %s25, 0
      %s344 = scalar_select %p343, %s25, 0
      %s345 = sadd.s32 %s344, %s342
      %s346 = sadd.s32 %s345, %s340
      %s347 = smul.addr %s346, 8
      %s348 = scalar_lea.vmem %s5, %s347
      %s349 = smul.u32 2, %s26
      %p350 = scmp.lt.s32.totalorder %s23, 3
      %s351 = scalar_select %p350, %s23, 3
      %p352 = scmp.lt.s32.totalorder %s24, 0
      %s353 = scalar_select %p352, %s24, 0
      %p354 = scmp.lt.s32.totalorder %s349, 1
      %s355 = scalar_select %p354, %s349, 1
      %s356 = smul.addr %s353, 2
      %s357 = sadd.s32 %s355, %s356
      %s358 = smul.addr %s351, 2
      %s359 = sadd.s32 %s357, %s358
      %s360 = smul.addr %s359, 4
      %s361 = scalar_lea.vmem %s0, %s360
      %s362 = smul.u32 2, %s26
      %s363 = smul.u32 32, %s26
      %p364 = scmp.lt.s32.totalorder %s23, 3
      %s365 = scalar_select %p364, %s23, 3
      %p366 = scmp.lt.s32.totalorder %s363, 31
      %s367 = scalar_select %p366, %s363, 31
      %p368 = scmp.lt.s32.totalorder %s25, 0
      %s369 = scalar_select %p368, %s25, 0
      %s370 = sadd.s32 %s369, %s367
      %s371 = smul.addr %s365, 32
      %s372 = sadd.s32 %s370, %s371
      %s373 = smul.addr %s372, 4
      %s374 = scalar_lea.vmem %s1, %s373
      %s375 = smul.u32 32, %s26
      %p376 = scmp.lt.s32.totalorder %s25, 0
      %s377 = scalar_select %p376, %s25, 0
      %s378 = scalar_lea.vmem %s2, %s377
      %p379 = scmp.lt.s32.totalorder %s23, 3
      %s380 = scalar_select %p379, %s23, 3
      %p381 = scmp.lt.s32.totalorder %s24, 0
      %s382 = scalar_select %p381, %s24, 0
      %p383 = scmp.lt.s32.totalorder %s25, 0
      %s384 = scalar_select %p383, %s25, 0
      %s385 = sadd.s32 %s384, %s382
      %s386 = sadd.s32 %s385, %s380
      %s387 = smul.addr %s386, 8
      %s388 = scalar_lea.vmem %s3, %s387
      %p389 = scmp.lt.s32.totalorder %s23, 3
      %s390 = scalar_select %p389, %s23, 3
      %p391 = scmp.lt.s32.totalorder %s24, 0
      %s392 = scalar_select %p391, %s24, 0
      %p393 = scmp.lt.s32.totalorder %s25, 0
      %s394 = scalar_select %p393, %s25, 0
      %s395 = sadd.s32 %s394, %s392
      %s396 = sadd.s32 %s395, %s390
      %s397 = smul.addr %s396, 8
      %s398 = scalar_lea.vmem %s4, %s397
      %p399 = scmp.lt.s32.totalorder %s23, 3
      %s400 = scalar_select %p399, %s23, 3
      %p401 = scmp.lt.s32.totalorder %s24, 0
      %s402 = scalar_select %p401, %s24, 0
      %p403 = scmp.lt.s32.totalorder %s25, 0
      %s404 = scalar_select %p403, %s25, 0
      %s405 = sadd.s32 %s404, %s402
      %s406 = sadd.s32 %s405, %s400
      %s407 = smul.addr %s406, 8
      %s408 = scalar_lea.vmem %s5, %s407
      %p410 = scmp.eq.s32.totalorder %s26, 0
      // Predicated region
      $region33: #{generator_forward.12} parent=31 // pred_check
        %p411 = pneg %p410
      $region34: #{generator_forward.12} parent=31 // pred_check_branch
        %413 = sbr.rel (%p411) target = $region36
      $region35: #{generator_forward.12} parent=31 // pred_region
        %414 = vst [vmem:[#allocation2] sm:$0xff] 0.0
      $region36: #{generator_forward.12} parent=31 // pred_fallthru
        _
      %v415 = vld [vmem:[%s361] sm:$0xff]
      %v416 = vmax.bf16 %v415, 0
      %v417 = vld [vmem:[#allocation2] sm:$0xff]
      %v418 = vld [vmem:[%s374] sm:$0xf]
      %v419 = vld [vmem:[%s374 + $0x4] sm:$0xf]
      %v420 = vld [vmem:[%s374 + $0x8] sm:$0xf]
      %v421 = vld [vmem:[%s374 + $0xc] sm:$0xf]
      %v422 = vld [vmem:[%s374 + $0x10] sm:$0xf]
      %v423 = vld [vmem:[%s374 + $0x14] sm:$0xf]
      %v424 = vld [vmem:[%s374 + $0x18] sm:$0xf]
      %v425 = vld [vmem:[%s374 + $0x1c] sm:$0xf]
      %v426 = vld [vmem:[%s374 + $0x20] sm:$0xf]
      %v427 = vld [vmem:[%s374 + $0x24] sm:$0xf]
      %v428 = vld [vmem:[%s374 + $0x28] sm:$0xf]
      %v429 = vld [vmem:[%s374 + $0x2c] sm:$0xf]
      %v430 = vld [vmem:[%s374 + $0x30] sm:$0xf]
      %v431 = vld [vmem:[%s374 + $0x34] sm:$0xf]
      %v432 = vld [vmem:[%s374 + $0x38] sm:$0xf]
      %v433 = vld [vmem:[%s374 + $0x3c] sm:$0xf]
      %v434 = vld [vmem:[%s374 + $0x40] sm:$0xf]
      %v435 = vld [vmem:[%s374 + $0x44] sm:$0xf]
      %v436 = vld [vmem:[%s374 + $0x48] sm:$0xf]
      %v437 = vld [vmem:[%s374 + $0x4c] sm:$0xf]
      %v438 = vld [vmem:[%s374 + $0x50] sm:$0xf]
      %v439 = vld [vmem:[%s374 + $0x54] sm:$0xf]
      %v440 = vld [vmem:[%s374 + $0x58] sm:$0xf]
      %v441 = vld [vmem:[%s374 + $0x5c] sm:$0xf]
      %v442 = vld [vmem:[%s374 + $0x60] sm:$0xf]
      %v443 = vld [vmem:[%s374 + $0x64] sm:$0xf]
      %v444 = vld [vmem:[%s374 + $0x68] sm:$0xf]
      %v445 = vld [vmem:[%s374 + $0x6c] sm:$0xf]
      %v446 = vld [vmem:[%s374 + $0x70] sm:$0xf]
      %v447 = vld [vmem:[%s374 + $0x74] sm:$0xf]
      %v448 = vld [vmem:[%s374 + $0x78] sm:$0xf]
      %v449 = vld [vmem:[%s374 + $0x7c] sm:$0xf]
      %v451 = vunpack.c.l.b16 %v416
      %v452 = vunpack.c.h.b16 %v416
      %v453 = vpack.c.b16 %v451, %v451
      %v454 = vpack.c.b16 %v452, %v452
      %v489 = vunpack.c.l.b16 %v418
      %v490 = vunpack.c.l.b16 %v419
      %v491 = vunpack.c.l.b16 %v420
      %v492 = vunpack.c.l.b16 %v421
      %v493 = vunpack.c.l.b16 %v422
      %v494 = vunpack.c.l.b16 %v423
      %v495 = vunpack.c.l.b16 %v424
      %v496 = vunpack.c.l.b16 %v425
      %v497 = vunpack.c.l.b16 %v426
      %v498 = vunpack.c.l.b16 %v427
      %v499 = vunpack.c.l.b16 %v428
      %v500 = vunpack.c.l.b16 %v429
      %v501 = vunpack.c.l.b16 %v430
      %v502 = vunpack.c.l.b16 %v431
      %v503 = vunpack.c.l.b16 %v432
      %v504 = vunpack.c.l.b16 %v433
      %v505 = vunpack.c.l.b16 %v434
      %v506 = vunpack.c.l.b16 %v435
      %v507 = vunpack.c.l.b16 %v436
      %v508 = vunpack.c.l.b16 %v437
      %v509 = vunpack.c.l.b16 %v438
      %v510 = vunpack.c.l.b16 %v439
      %v511 = vunpack.c.l.b16 %v440
      %v512 = vunpack.c.l.b16 %v441
      %v513 = vunpack.c.l.b16 %v442
      %v514 = vunpack.c.l.b16 %v443
      %v515 = vunpack.c.l.b16 %v444
      %v516 = vunpack.c.l.b16 %v445
      %v517 = vunpack.c.l.b16 %v446
      %v518 = vunpack.c.l.b16 %v447
      %v519 = vunpack.c.l.b16 %v448
      %v520 = vunpack.c.l.b16 %v449
      %v521 = vpack.c.b16 %v490, %v489
      %v522 = vpack.c.b16 %v492, %v491
      %v523 = vpack.c.b16 %v494, %v493
      %v524 = vpack.c.b16 %v496, %v495
      %v525 = vpack.c.b16 %v498, %v497
      %v526 = vpack.c.b16 %v500, %v499
      %v527 = vpack.c.b16 %v502, %v501
      %v528 = vpack.c.b16 %v504, %v503
      %v529 = vpack.c.b16 %v506, %v505
      %v530 = vpack.c.b16 %v508, %v507
      %v531 = vpack.c.b16 %v510, %v509
      %v532 = vpack.c.b16 %v512, %v511
      %v533 = vpack.c.b16 %v514, %v513
      %v534 = vpack.c.b16 %v516, %v515
      %v535 = vpack.c.b16 %v518, %v517
      %v536 = vpack.c.b16 %v520, %v519
      %553 = vmatprep.subr.bf16.mxu0 0
      %554 = vmatpush1.bf16.msra.mxu0 %v521
      %555 = vmatprep.subr.bf16.mxu0 0
      %556 = vmatpush1.bf16.msra.mxu0 %v522
      %557 = vmatprep.subr.bf16.mxu0 0
      %558 = vmatpush1.bf16.msra.mxu0 %v523
      %559 = vmatprep.subr.bf16.mxu0 0
      %560 = vmatpush1.bf16.msra.mxu0 %v524
      %561 = vmatprep.subr.bf16.mxu0 0
      %562 = vmatpush1.bf16.msra.mxu0 %v525
      %563 = vmatprep.subr.bf16.mxu0 0
      %564 = vmatpush1.bf16.msra.mxu0 %v526
      %565 = vmatprep.subr.bf16.mxu0 0
      %566 = vmatpush1.bf16.msra.mxu0 %v527
      %567 = vmatprep.subr.bf16.mxu0 0
      %568 = vmatpush1.bf16.msra.mxu0 %v528
      %569 = vmatprep.subr.bf16.mxu0 0
      %570 = vmatpush1.bf16.msra.mxu0 %v529
      %571 = vmatprep.subr.bf16.mxu0 0
      %572 = vmatpush1.bf16.msra.mxu0 %v530
      %573 = vmatprep.subr.bf16.mxu0 0
      %574 = vmatpush1.bf16.msra.mxu0 %v531
      %575 = vmatprep.subr.bf16.mxu0 0
      %576 = vmatpush1.bf16.msra.mxu0 %v532
      %577 = vmatprep.subr.bf16.mxu0 0
      %578 = vmatpush1.bf16.msra.mxu0 %v533
      %579 = vmatprep.subr.bf16.mxu0 0
      %580 = vmatpush1.bf16.msra.mxu0 %v534
      %581 = vmatprep.subr.bf16.mxu0 0
      %582 = vmatpush1.bf16.msra.mxu0 %v535
      %583 = vmatprep.subr.bf16.mxu0 0
      %584 = vmatpush1.bf16.msra.mxu0 %v536
      %585 = vmatprep.mubr.bf16.mxu0 %v454
      %586 = vmatmul.mubr.bf16.gmra.mrb[0].mxu0 %v453
      %v587 = vpop.f32.mrb[0].mxu0
      %v588 = vadd.f32 0.0, %v587
      %v589 = vpop.f32.mrb[0].mxu0
      %v590 = vpop.f32.mrb[0].mxu0
      %v591 = vpop.f32.mrb[0].mxu0
      %592 = vdwg.mxu0
      %v593 = vadd.f32 %v417, %v588
      %594 = vst [vmem:[#allocation2] sm:$0xff] %v593
      // Predicated region
      $region37: #{generator_forward.12} parent=31 // pred_check
        %p595 = pneg %p410
      $region38: #{generator_forward.12} parent=31 // pred_check_branch
        %597 = sbr.rel (%p595) target = $region40
      $region39: #{generator_forward.12} parent=31 // pred_region
        %v598 = vld [vmem:[#allocation2] sm:$0xff]
        %v599 = vrot.slane %v598, 4
        %v600 = vadd.f32 %v598, %v599
        %v601 = vrot.slane %v600, 2
        %v602 = vadd.f32 %v600, %v601
        %v603 = vrot.slane %v602, 1
        %v604 = vadd.f32 %v602, %v603
        %v605 = vmul.f32 %v598, %v598
        %v606 = vrot.slane %v605, 4
        %v607 = vadd.f32 %v605, %v606
        %v608 = vrot.slane %v607, 2
        %v609 = vadd.f32 %v607, %v608
        %v610 = vrot.slane %v609, 1
        %v611 = vadd.f32 %v609, %v610
        %612 = vst [vmem:[%s398] sm:$0xff] %v604
        %613 = vst [vmem:[%s408] sm:$0xff] %v611
        %v614 = vld [vmem:[%s378] sm:$0x1]
        %v616 = vlaneseq
        %v617 = vshrl.u32 %v616, 7
        %v618 = vsub.s32 0, %v617
        %v619 = vrot.slane %v614, %v618
        %v621 = vadd.f32 %v598, %v619
        %622 = vst [vmem:[%s388] sm:$0xff] %v621
      $region40: #{generator_forward.12} parent=31 // pred_fallthru
        _
      %p623 = scmp.lt.s32.totalorder %s23, 3
      %s624 = scalar_select %p623, %s23, 3
      %p625 = scmp.lt.s32.totalorder %s24, 0
      %s626 = scalar_select %p625, %s24, 0
      %p627 = scmp.lt.s32.totalorder %s25, 0
      %s628 = scalar_select %p627, %s25, 0
      %s629 = sadd.s32 %s628, %s626
      %s630 = sadd.s32 %s629, %s624
      %s631 = smul.addr %s630, 8
      %s632 = scalar_lea.vmem %s3, %s631
      %p633 = scmp.lt.s32.totalorder %s23, 3
      %s634 = scalar_select %p633, %s23, 3
      %p635 = scmp.lt.s32.totalorder %s24, 0
      %s636 = scalar_select %p635, %s24, 0
      %p637 = scmp.lt.s32.totalorder %s25, 0
      %s638 = scalar_select %p637, %s25, 0
      %s639 = sadd.s32 %s638, %s636
      %s640 = sadd.s32 %s639, %s634
      %s641 = smul.addr %s640, 8
      %s642 = scalar_lea.vmem %s4, %s641
      %p643 = scmp.lt.s32.totalorder %s23, 3
      %s644 = scalar_select %p643, %s23, 3
      %p645 = scmp.lt.s32.totalorder %s24, 0
      %s646 = scalar_select %p645, %s24, 0
      %p647 = scmp.lt.s32.totalorder %s25, 0
      %s648 = scalar_select %p647, %s25, 0
      %s649 = sadd.s32 %s648, %s646
      %s650 = sadd.s32 %s649, %s644
      %s651 = smul.addr %s650, 8
      %s652 = scalar_lea.vmem %s5, %s651
      // Predicated region
      $region41: #{generator_forward.12} parent=31 // pred_check
        %p653 = pneg %p151
      $region42: #{generator_forward.12} parent=31 // pred_check_branch
        %655 = sbr.rel (%p653) target = $region44
      $region43: #{generator_forward.12} parent=31 // pred_region
        _
      $region44: #{generator_forward.12} parent=31 // pred_fallthru
        _
      // Predicated region
      $region45: #{generator_forward.12} parent=31 // pred_check
        %p656 = pneg %p181
      $region46: #{generator_forward.12} parent=31 // pred_check_branch
        %658 = sbr.rel (%p656) target = $region48
      $region47: #{generator_forward.12} parent=31 // pred_region
        _
      $region48: #{generator_forward.12} parent=31 // pred_fallthru
        _
      // Predicated region
      $region49: #{generator_forward.12} parent=31 // pred_check
        %p659 = pneg %p211
      $region50: #{generator_forward.12} parent=31 // pred_check_branch
        %661 = sbr.rel (%p659) target = $region52
      $region51: #{generator_forward.12} parent=31 // pred_region
        _
      $region52: #{generator_forward.12} parent=31 // pred_fallthru
        _
    $region32: #{generator_forward.12} parent=5 // pred_fallthru
      _
    %p662 = scmp.le.s32.totalorder 2, %s12
    // Predicated region
    $region53: #{generator_forward.12} parent=5 // pred_check
      %p663 = pneg %p662
    $region54: #{generator_forward.12} parent=5 // pred_check_branch
      %665 = sbr.rel (%p663) target = $region56
    $region55: #{generator_forward.12} parent=5 // pred_region
      %s666 = ssub.s32 %s12, 2
      // Predicated region
      $region57: #{generator_forward.12} parent=55 // pred_check
        %p667 = pneg %p157
      $region58: #{generator_forward.12} parent=55 // pred_check_branch
        %669 = sbr.rel (%p667) target = $region60
      $region59: #{generator_forward.12} parent=55 // pred_region
        %p670 = scmp.lt.s32.totalorder %s27, 3
        %s671 = scalar_select %p670, %s27, 3
        %p672 = scmp.lt.s32.totalorder %s28, 0
        %s673 = scalar_select %p672, %s28, 0
        %p674 = scmp.lt.s32.totalorder %s29, 0
        %s675 = scalar_select %p674, %s29, 0
        %s676 = sadd.s32 %s675, %s673
        %s677 = sadd.s32 %s676, %s671
        %s678 = smul.addr %s677, 8
        %s679 = scalar_lea.vmem %s3, %s678
      $region60: #{generator_forward.12} parent=55 // pred_fallthru
        _
      // Predicated region
      $region61: #{generator_forward.12} parent=55 // pred_check
        %p680 = pneg %p187
      $region62: #{generator_forward.12} parent=55 // pred_check_branch
        %682 = sbr.rel (%p680) target = $region64
      $region63: #{generator_forward.12} parent=55 // pred_region
        %p683 = scmp.lt.s32.totalorder %s27, 3
        %s684 = scalar_select %p683, %s27, 3
        %p685 = scmp.lt.s32.totalorder %s28, 0
        %s686 = scalar_select %p685, %s28, 0
        %p687 = scmp.lt.s32.totalorder %s29, 0
        %s688 = scalar_select %p687, %s29, 0
        %s689 = sadd.s32 %s688, %s686
        %s690 = sadd.s32 %s689, %s684
        %s691 = smul.addr %s690, 8
        %s692 = scalar_lea.vmem %s4, %s691
      $region64: #{generator_forward.12} parent=55 // pred_fallthru
        _
      // Predicated region
      $region65: #{generator_forward.12} parent=55 // pred_check
        %p693 = pneg %p217
      $region66: #{generator_forward.12} parent=55 // pred_check_branch
        %695 = sbr.rel (%p693) target = $region68
      $region67: #{generator_forward.12} parent=55 // pred_region
        %p696 = scmp.lt.s32.totalorder %s27, 3
        %s697 = scalar_select %p696, %s27, 3
        %p698 = scmp.lt.s32.totalorder %s28, 0
        %s699 = scalar_select %p698, %s28, 0
        %p700 = scmp.lt.s32.totalorder %s29, 0
        %s701 = scalar_select %p700, %s29, 0
        %s702 = sadd.s32 %s701, %s699
        %s703 = sadd.s32 %s702, %s697
        %s704 = smul.addr %s703, 8
        %s705 = scalar_lea.vmem %s5, %s704
      $region68: #{generator_forward.12} parent=55 // pred_fallthru
        _
    $region56: #{generator_forward.12} parent=5 // pred_fallthru
      _
  $region6: #{generator_forward.12} parent=0 // loop_footer
    %s16 = sadd.s32 1, %s12
  $region7: #{generator_forward.12} parent=0 // loop_footer_branch
    %11 = sbr.rel target = $region3
  $region8: #{generator_forward.12} parent=0 // loop_exit
    _

// kernel: generator_forward.14
$region0: #{generator_forward.14}
  #allocation0 [shape = 'u32[]', space=smem, size = 0x4, offset = 0x4, fixed_abs, tag = 'smem constant byte address 0x4 - core index']
  #allocation1 [shape = 'u32[144,128]{1,0:T(1,128)}', space=vmem, size = 0x12000, scoped, tag = 'internal scratch']
  #allocation2 [shape = 'f32[32,128]{1,0:T(8,128)}', space=vmem, size = 0x4000, scoped, tag = 'scratch operand']
  %s0 = inlined_call_operand.vmem [shape: bf16[4,32,128], index: 0, kind: input, shape index: {}]
  %s1 = inlined_call_operand.vmem [shape: bf16[4,128,128], index: 1, kind: input, shape index: {}]
  %s2 = inlined_call_operand.vmem [shape: f32[1,128], index: 2, kind: input, shape index: {}]
  %s3 = inlined_call_operand.vmem [shape: f32[4,32,128], index: 3, kind: output, shape index: {0}]
  %s4 = inlined_call_operand.vmem [shape: f32[4,8,128], index: 4, kind: output, shape index: {1}]
  %s5 = inlined_call_operand.vmem [shape: f32[4,8,128], index: 5, kind: output, shape index: {2}]
  %6 = xla_tuple %s3, %s4, %s5
  %s7 = sld [smem:[#allocation0]]
  $region69: #{generator_forward.14} parent=0
    _
  %s9 = ssub.s32 1, %s7
  %s10 = scalar_select 0, %s9, %s7
  loop: start=0, step=1, limit=6
  $region2: #{generator_forward.14} parent=0 // loop_pre_header
    _
  $region3: #{generator_forward.14} parent=0 // loop_header
    %s12 = sphi 0, %s16
    %p13 = scmp.ge.s32.totalorder %s12, 6
    %s19 = sphi 0, %s45
    %s20 = sphi 0, %s41
    %s21 = sphi 0, %s37
    %s22 = sphi 0, %s33
    %s23 = sphi 0, %s19
    %s24 = sphi 0, %s20
    %s25 = sphi 0, %s21
    %s26 = sphi 0, %s22
    %s27 = sphi 0, %s23
    %s28 = sphi 0, %s24
    %s29 = sphi 0, %s25
    %s30 = sphi 0, %s26
    %s52 = sphi 0, %s54
    %s55 = sphi 0, %s52
    %s56 = sphi 0, %s55
    %s72 = sphi 0, %s56
    %s82 = sphi 0, %s84
    %s85 = sphi 0, %s82
    %s86 = sphi 0, %s85
    %s102 = sphi 0, %s86
    %s108 = sphi 0, %s110
    %s111 = sphi 0, %s108
    %s112 = sphi 0, %s111
    %s128 = sphi 0, %s112
    %s138 = sphi 0, %s140
    %s141 = sphi 0, %s138
    %s142 = sphi 0, %s141
    %s158 = sphi 0, %s142
    %s168 = sphi 0, %s170
    %s171 = sphi 0, %s168
    %s172 = sphi 0, %s171
    %s188 = sphi 0, %s172
    %s198 = sphi 0, %s200
    %s201 = sphi 0, %s198
    %s202 = sphi 0, %s201
    %s218 = sphi 0, %s202
  $region4: #{generator_forward.14} parent=0 // loop_header_branch
    %15 = sbr.rel (%p13) target = $region8
  $region5: #{generator_forward.14} parent=0 // loop_body
    %s17 = ssub.s32 %s12, 1
    %s18 = ssub.s32 %s12, 2
    %s31 = sadd.s32 1, %s22
    %p32 = scmp.ge.s32.totalorder %s31, 1
    %s33 = scalar_select %p32, 0, %s31
    %s34 = sadd.s32 1, %s21
    %s35 = scalar_select %p32, %s34, %s21
    %p36 = scmp.ge.s32.totalorder %s35, 1
    %s37 = scalar_select %p36, 0, %s35
    %s38 = sadd.s32 1, %s20
    %s39 = scalar_select %p36, %s38, %s20
    %p40 = scmp.ge.s32.totalorder %s39, 1
    %s41 = scalar_select %p40, 0, %s39
    %s42 = sadd.s32 1, %s19
    %s43 = scalar_select %p40, %s42, %s19
    %p44 = scmp.ge.s32.totalorder %s43, 4
    %s45 = scalar_select %p44, 0, %s43
    %s46 = ssub.s32 %s19, %s45
    %s47 = ssub.s32 %s20, %s41
    %s48 = sor.u32 %s46, %s47
    %s49 = ssub.s32 %s22, %s33
    %s50 = sor.u32 %s48, %s49
    %p51 = scmp.eq.s32.totalorder %s50, 0
    %s53 = sadd.s32 %s52, 1
    %s54 = scalar_select %p51, %s52, %s53
    %p57 = pneg %p51
    %p58 = scmp.eq.s32.totalorder %s12, 3
    %p59 = por %p57, %p58
    %p60 = scmp.ne.s32.totalorder %s52, %s55
    %p61 = scmp.eq.s32.totalorder %s12, 0
    %p62 = por %p60, %p61
    %p63 = scmp.ne.s32.totalorder %s52, %s55
    %p64 = scmp.eq.s32.totalorder %s17, 3
    %p65 = por %p63, %p64
    %p66 = scmp.ne.s32.totalorder %s55, %s56
    %p67 = scmp.eq.s32.totalorder %s17, 0
    %p68 = por %p66, %p67
    %p69 = scmp.ne.s32.totalorder %s55, %s56
    %p70 = scmp.eq.s32.totalorder %s18, 3
    %p71 = por %p69, %p70
    %p73 = scmp.ne.s32.totalorder %s56, %s72
    %p74 = scmp.eq.s32.totalorder %s18, 0
    %p75 = por %p73, %p74
    %s76 = ssub.s32 %s19, %s45
    %s77 = ssub.s32 %s22, %s33
    %s78 = sor.u32 %s76, %s77
    %s79 = ssub.s32 %s21, %s37
    %s80 = sor.u32 %s78, %s79
    %p81 = scmp.eq.s32.totalorder %s80, 0
    %s83 = sadd.s32 %s82, 1
    %s84 = scalar_select %p81, %s82, %s83
    %p87 = pneg %p81
    %p88 = scmp.eq.s32.totalorder %s12, 3
    %p89 = por %p87, %p88
    %p90 = scmp.ne.s32.totalorder %s82, %s85
    %p91 = scmp.eq.s32.totalorder %s12, 0
    %p92 = por %p90, %p91
    %p93 = scmp.ne.s32.totalorder %s82, %s85
    %p94 = scmp.eq.s32.totalorder %s17, 3
    %p95 = por %p93, %p94
    %p96 = scmp.ne.s32.totalorder %s85, %s86
    %p97 = scmp.eq.s32.totalorder %s17, 0
    %p98 = por %p96, %p97
    %p99 = scmp.ne.s32.totalorder %s85, %s86
    %p100 = scmp.eq.s32.totalorder %s18, 3
    %p101 = por %p99, %p100
    %p103 = scmp.ne.s32.totalorder %s86, %s102
    %p104 = scmp.eq.s32.totalorder %s18, 0
    %p105 = por %p103, %p104
    %s106 = ssub.s32 %s21, %s37
    %p107 = scmp.eq.s32.totalorder %s106, 0
    %s109 = sadd.s32 %s108, 1
    %s110 = scalar_select %p107, %s108, %s109
    %p113 = pneg %p107
    %p114 = scmp.eq.s32.totalorder %s12, 3
    %p115 = por %p113, %p114
    %p116 = scmp.ne.s32.totalorder %s108, %s111
    %p117 = scmp.eq.s32.totalorder %s12, 0
    %p118 = por %p116, %p117
    %p119 = scmp.ne.s32.totalorder %s108, %s111
    %p120 = scmp.eq.s32.totalorder %s17, 3
    %p121 = por %p119, %p120
    %p122 = scmp.ne.s32.totalorder %s111, %s112
    %p123 = scmp.eq.s32.totalorder %s17, 0
    %p124 = por %p122, %p123
    %p125 = scmp.ne.s32.totalorder %s111, %s112
    %p126 = scmp.eq.s32.totalorder %s18, 3
    %p127 = por %p125, %p126
    %p129 = scmp.ne.s32.totalorder %s112, %s128
    %p130 = scmp.eq.s32.totalorder %s18, 0
    %p131 = por %p129, %p130
    %s132 = ssub.s32 %s19, %s45
    %s133 = ssub.s32 %s20, %s41
    %s134 = sor.u32 %s132, %s133
    %s135 = ssub.s32 %s21, %s37
    %s136 = sor.u32 %s134, %s135
    %p137 = scmp.eq.s32.totalorder %s136, 0
    %s139 = sadd.s32 %s138, 1
    %s140 = scalar_select %p137, %s138, %s139
    %p143 = pneg %p137
    %p144 = scmp.eq.s32.totalorder %s12, 3
    %p145 = por %p143, %p144
    %p146 = scmp.ne.s32.totalorder %s138, %s141
    %p147 = scmp.eq.s32.totalorder %s12, 0
    %p148 = por %p146, %p147
    %p149 = scmp.ne.s32.totalorder %s138, %s141
    %p150 = scmp.eq.s32.totalorder %s17, 3
    %p151 = por %p149, %p150
    %p152 = scmp.ne.s32.totalorder %s141, %s142
    %p153 = scmp.eq.s32.totalorder %s17, 0
    %p154 = por %p152, %p153
    %p155 = scmp.ne.s32.totalorder %s141, %s142
    %p156 = scmp.eq.s32.totalorder %s18, 3
    %p157 = por %p155, %p156
    %p159 = scmp.ne.s32.totalorder %s142, %s158
    %p160 = scmp.eq.s32.totalorder %s18, 0
    %p161 = por %p159, %p160
    %s162 = ssub.s32 %s19, %s45
    %s163 = ssub.s32 %s20, %s41
    %s164 = sor.u32 %s162, %s163
    %s165 = ssub.s32 %s21, %s37
    %s166 = sor.u32 %s164, %s165
    %p167 = scmp.eq.s32.totalorder %s166, 0
    %s169 = sadd.s32 %s168, 1
    %s170 = scalar_select %p167, %s168, %s169
    %p173 = pneg %p167
    %p174 = scmp.eq.s32.totalorder %s12, 3
    %p175 = por %p173, %p174
    %p176 = scmp.ne.s32.totalorder %s168, %s171
    %p177 = scmp.eq.s32.totalorder %s12, 0
    %p178 = por %p176, %p177
    %p179 = scmp.ne.s32.totalorder %s168, %s171
    %p180 = scmp.eq.s32.totalorder %s17, 3
    %p181 = por %p179, %p180
    %p182 = scmp.ne.s32.totalorder %s171, %s172
    %p183 = scmp.eq.s32.totalorder %s17, 0
    %p184 = por %p182, %p183
    %p185 = scmp.ne.s32.totalorder %s171, %s172
    %p186 = scmp.eq.s32.totalorder %s18, 3
    %p187 = por %p185, %p186
    %p189 = scmp.ne.s32.totalorder %s172, %s188
    %p190 = scmp.eq.s32.totalorder %s18, 0
    %p191 = por %p189, %p190
    %s192 = ssub.s32 %s19, %s45
    %s193 = ssub.s32 %s20, %s41
    %s194 = sor.u32 %s192, %s193
    %s195 = ssub.s32 %s21, %s37
    %s196 = sor.u32 %s194, %s195
    %p197 = scmp.eq.s32.totalorder %s196, 0
    %s199 = sadd.s32 %s198, 1
    %s200 = scalar_select %p197, %s198, %s199
    %p203 = pneg %p197
    %p204 = scmp.eq.s32.totalorder %s12, 3
    %p205 = por %p203, %p204
    %p206 = scmp.ne.s32.totalorder %s198, %s201
    %p207 = scmp.eq.s32.totalorder %s12, 0
    %p208 = por %p206, %p207
    %p209 = scmp.ne.s32.totalorder %s198, %s201
    %p210 = scmp.eq.s32.totalorder %s17, 3
    %p211 = por %p209, %p210
    %p212 = scmp.ne.s32.totalorder %s201, %s202
    %p213 = scmp.eq.s32.totalorder %s17, 0
    %p214 = por %p212, %p213
    %p215 = scmp.ne.s32.totalorder %s201, %s202
    %p216 = scmp.eq.s32.totalorder %s18, 3
    %p217 = por %p215, %p216
    %p219 = scmp.ne.s32.totalorder %s202, %s218
    %p220 = scmp.eq.s32.totalorder %s18, 0
    %p221 = por %p219, %p220
    %p222 = scmp.le.s32.totalorder 1, %s12
    %p223 = scmp.lt.s32.totalorder %s12, 5
    %p224 = pnand %p222, %p223
    %p225 = pneg %p224
    // Predicated region
    $region9: #{generator_forward.14} parent=5 // pred_check
      _
    $region10: #{generator_forward.14} parent=5 // pred_check_branch
      %227 = sbr.rel (%p224) target = $region12
    $region11: #{generator_forward.14} parent=5 // pred_region
      %s228 = ssub.s32 %s12, 1
      // Predicated region
      $region13: #{generator_forward.14} parent=11 // pred_check
        %p229 = pneg %p124
      $region14: #{generator_forward.14} parent=11 // pred_check_branch
        %231 = sbr.rel (%p229) target = $region16
      $region15: #{generator_forward.14} parent=11 // pred_region
        %p232 = scmp.lt.s32.totalorder %s25, 0
        %s233 = scalar_select %p232, %s25, 0
        %s234 = scalar_lea.vmem %s2, %s233
      $region16: #{generator_forward.14} parent=11 // pred_fallthru
        _
    $region12: #{generator_forward.14} parent=5 // pred_fallthru
      _
    %p235 = scmp.lt.s32.totalorder %s12, 4
    // Predicated region
    $region17: #{generator_forward.14} parent=5 // pred_check
      %p236 = pneg %p235
    $region18: #{generator_forward.14} parent=5 // pred_check_branch
      %238 = sbr.rel (%p236) target = $region20
    $region19: #{generator_forward.14} parent=5 // pred_region
      // Predicated region
      $region21: #{generator_forward.14} parent=19 // pred_check
        %p239 = pneg %p62
      $region22: #{generator_forward.14} parent=19 // pred_check_branch
        %241 = sbr.rel (%p239) target = $region24
      $region23: #{generator_forward.14} parent=19 // pred_region
        %s242 = smul.u32 4, %s20
        %p243 = scmp.lt.s32.totalorder %s19, 3
        %s244 = scalar_select %p243, %s19, 3
        %p245 = scmp.lt.s32.totalorder %s242, 3
        %s246 = scalar_select %p245, %s242, 3
        %p247 = scmp.lt.s32.totalorder %s22, 0
        %s248 = scalar_select %p247, %s22, 0
        %s249 = sadd.s32 %s248, %s246
        %s250 = smul.addr %s244, 4
        %s251 = sadd.s32 %s249, %s250
        %s252 = smul.addr %s251, 4
        %s253 = scalar_lea.vmem %s0, %s252
        %s254 = smul.u32 4, %s20
      $region24: #{generator_forward.14} parent=19 // pred_fallthru
        _
      // Predicated region
      $region25: #{generator_forward.14} parent=19 // pred_check
        %p255 = pneg %p92
      $region26: #{generator_forward.14} parent=19 // pred_check_branch
        %257 = sbr.rel (%p255) target = $region28
      $region27: #{generator_forward.14} parent=19 // pred_region
        %s258 = smul.u32 16, %s22
        %p259 = scmp.lt.s32.totalorder %s19, 3
        %s260 = scalar_select %p259, %s19, 3
        %p261 = scmp.lt.s32.totalorder %s258, 15
        %s262 = scalar_select %p261, %s258, 15
        %p263 = scmp.lt.s32.totalorder %s21, 0
        %s264 = scalar_select %p263, %s21, 0
        %s265 = sadd.s32 %s264, %s262
        %s266 = smul.addr %s260, 16
        %s267 = sadd.s32 %s265, %s266
        %s268 = smul.addr %s267, 4
        %s269 = scalar_lea.vmem %s1, %s268
        %s270 = smul.u32 16, %s22
      $region28: #{generator_forward.14} parent=19 // pred_fallthru
        _
    $region20: #{generator_forward.14} parent=5 // pred_fallthru
      _
    %p271 = scmp.le.s32.totalorder 1, %s12
    %p272 = scmp.lt.s32.totalorder %s12, 5
    %p273 = pnand %p271, %p272
    %p274 = pneg %p273
    // Predicated region
    $region29: #{generator_forward.14} parent=5 // pred_check
      _
    $region30: #{generator_forward.14} parent=5 // pred_check_branch
      %276 = sbr.rel (%p273) target = $region32
    $region31: #{generator_forward.14} parent=5 // pred_region
      %s277 = ssub.s32 %s12, 1
      %s278 = smul.u32 4, %s24
      %p279 = scmp.lt.s32.totalorder %s23, 3
      %s280 = scalar_select %p279, %s23, 3
      %p281 = scmp.lt.s32.totalorder %s278, 3
      %s282 = scalar_select %p281, %s278, 3
      %p283 = scmp.lt.s32.totalorder %s26, 0
      %s284 = scalar_select %p283, %s26, 0
      %s285 = sadd.s32 %s284, %s282
      %s286 = smul.addr %s280, 4
      %s287 = sadd.s32 %s285, %s286
      %s288 = smul.addr %s287, 4
      %s289 = scalar_lea.vmem %s0, %s288
      %p290 = pneg %p68
      %p291 = pneg %p65
      %s292 = smul.u32 16, %s26
      %p293 = scmp.lt.s32.totalorder %s23, 3
      %s294 = scalar_select %p293, %s23, 3
      %p295 = scmp.lt.s32.totalorder %s292, 15
      %s296 = scalar_select %p295, %s292, 15
      %p297 = scmp.lt.s32.totalorder %s25, 0
      %s298 = scalar_select %p297, %s25, 0
      %s299 = sadd.s32 %s298, %s296
      %s300 = smul.addr %s294, 16
      %s301 = sadd.s32 %s299, %s300
      %s302 = smul.addr %s301, 4
      %s303 = scalar_lea.vmem %s1, %s302
      %p304 = pneg %p98
      %p305 = pneg %p95
      %p306 = scmp.lt.s32.totalorder %s25, 0
      %s307 = scalar_select %p306, %s25, 0
      %s308 = scalar_lea.vmem %s2, %s307
      %p309 = pneg %p124
      %p310 = pneg %p121
      %p311 = pneg %p154
      %p312 = pneg %p151
      %s313 = smul.u32 4, %s24
      %p314 = scmp.lt.s32.totalorder %s23, 3
      %s315 = scalar_select %p314, %s23, 3
      %p316 = scmp.lt.s32.totalorder %s313, 3
      %s317 = scalar_select %p316, %s313, 3
      %p318 = scmp.lt.s32.totalorder %s25, 0
      %s319 = scalar_select %p318, %s25, 0
      %s320 = sadd.s32 %s319, %s317
      %s321 = smul.addr %s315, 4
      %s322 = sadd.s32 %s320, %s321
      %s323 = smul.addr %s322, 8
      %s324 = scalar_lea.vmem %s3, %s323
      %p325 = pneg %p184
      %p326 = pneg %p181
      %p327 = scmp.lt.s32.totalorder %s23, 3
      %s328 = scalar_select %p327, %s23, 3
      %p329 = scmp.lt.s32.totalorder %s24, 0
      %s330 = scalar_select %p329, %s24, 0
      %p331 = scmp.lt.s32.totalorder %s25, 0
      %s332 = scalar_select %p331, %s25, 0
      %s333 = sadd.s32 %s332, %s330
      %s334 = sadd.s32 %s333, %s328
      %s335 = smul.addr %s334, 8
      %s336 = scalar_lea.vmem %s4, %s335
      %p337 = pneg %p214
      %p338 = pneg %p211
      %p339 = scmp.lt.s32.totalorder %s23, 3
      %s340 = scalar_select %p339, %s23, 3
      %p341 = scmp.lt.s32.totalorder %s24, 0
      %s342 = scalar_select %p341, %s24, 0
      %p343 = scmp.lt.s32.totalorder %s25, 0
      %s344 = scalar_select %p343, %s25, 0
      %s345 = sadd.s32 %s344, %s342
      %s346 = sadd.s32 %s345, %s340
      %s347 = smul.addr %s346, 8
      %s348 = scalar_lea.vmem %s5, %s347
      %s349 = smul.u32 4, %s24
      %p350 = scmp.lt.s32.totalorder %s23, 3
      %s351 = scalar_select %p350, %s23, 3
      %p352 = scmp.lt.s32.totalorder %s349, 3
      %s353 = scalar_select %p352, %s349, 3
      %p354 = scmp.lt.s32.totalorder %s26, 0
      %s355 = scalar_select %p354, %s26, 0
      %s356 = sadd.s32 %s355, %s353
      %s357 = smul.addr %s351, 4
      %s358 = sadd.s32 %s356, %s357
      %s359 = smul.addr %s358, 4
      %s360 = scalar_lea.vmem %s0, %s359
      %s361 = smul.u32 4, %s24
      %s362 = smul.u32 16, %s26
      %p363 = scmp.lt.s32.totalorder %s23, 3
      %s364 = scalar_select %p363, %s23, 3
      %p365 = scmp.lt.s32.totalorder %s362, 15
      %s366 = scalar_select %p365, %s362, 15
      %p367 = scmp.lt.s32.totalorder %s25, 0
      %s368 = scalar_select %p367, %s25, 0
      %s369 = sadd.s32 %s368, %s366
      %s370 = smul.addr %s364, 16
      %s371 = sadd.s32 %s369, %s370
      %s372 = smul.addr %s371, 4
      %s373 = scalar_lea.vmem %s1, %s372
      %s374 = smul.u32 16, %s26
      %p375 = scmp.lt.s32.totalorder %s25, 0
      %s376 = scalar_select %p375, %s25, 0
      %s377 = scalar_lea.vmem %s2, %s376
      %s378 = smul.u32 4, %s24
      %p379 = scmp.lt.s32.totalorder %s23, 3
      %s380 = scalar_select %p379, %s23, 3
      %p381 = scmp.lt.s32.totalorder %s378, 3
      %s382 = scalar_select %p381, %s378, 3
      %p383 = scmp.lt.s32.totalorder %s25, 0
      %s384 = scalar_select %p383, %s25, 0
      %s385 = sadd.s32 %s384, %s382
      %s386 = smul.addr %s380, 4
      %s387 = sadd.s32 %s385, %s386
      %s388 = smul.addr %s387, 8
      %s389 = scalar_lea.vmem %s3, %s388
      %s390 = smul.u32 4, %s24
      %p391 = scmp.lt.s32.totalorder %s23, 3
      %s392 = scalar_select %p391, %s23, 3
      %p393 = scmp.lt.s32.totalorder %s24, 0
      %s394 = scalar_select %p393, %s24, 0
      %p395 = scmp.lt.s32.totalorder %s25, 0
      %s396 = scalar_select %p395, %s25, 0
      %s397 = sadd.s32 %s396, %s394
      %s398 = sadd.s32 %s397, %s392
      %s399 = smul.addr %s398, 8
      %s400 = scalar_lea.vmem %s4, %s399
      %p401 = scmp.lt.s32.totalorder %s23, 3
      %s402 = scalar_select %p401, %s23, 3
      %p403 = scmp.lt.s32.totalorder %s24, 0
      %s404 = scalar_select %p403, %s24, 0
      %p405 = scmp.lt.s32.totalorder %s25, 0
      %s406 = scalar_select %p405, %s25, 0
      %s407 = sadd.s32 %s406, %s404
      %s408 = sadd.s32 %s407, %s402
      %s409 = smul.addr %s408, 8
      %s410 = scalar_lea.vmem %s5, %s409
      %p412 = scmp.eq.s32.totalorder %s26, 0
      // Predicated region
      $region33: #{generator_forward.14} parent=31 // pred_check
        %p413 = pneg %p412
      $region34: #{generator_forward.14} parent=31 // pred_check_branch
        %415 = sbr.rel (%p413) target = $region36
      $region35: #{generator_forward.14} parent=31 // pred_region
        %416 = vst [vmem:[#allocation2] sm:$0xff] 0.0
        %417 = vst [vmem:[#allocation2 + $0x8] sm:$0xff] 0.0
        %418 = vst [vmem:[#allocation2 + $0x10] sm:$0xff] 0.0
        %419 = vst [vmem:[#allocation2 + $0x18] sm:$0xff] 0.0
      $region36: #{generator_forward.14} parent=31 // pred_fallthru
        _
      %v420 = vld [vmem:[%s360] sm:$0xf]
      %v421 = vld [vmem:[%s360 + $0x4] sm:$0xf]
      %v422 = vld [vmem:[%s360 + $0x8] sm:$0xf]
      %v423 = vld [vmem:[%s360 + $0xc] sm:$0xf]
      %v424 = vmax.bf16 %v420, 0
      %v425 = vmax.bf16 %v421, 0
      %v426 = vmax.bf16 %v422, 0
      %v427 = vmax.bf16 %v423, 0
      %v428 = vld [vmem:[#allocation2] sm:$0xff]
      %v429 = vld [vmem:[#allocation2 + $0x8] sm:$0xff]
      %v430 = vld [vmem:[#allocation2 + $0x10] sm:$0xff]
      %v431 = vld [vmem:[#allocation2 + $0x18] sm:$0xff]
      %v432 = vld [vmem:[%s373] sm:$0xf]
      %v433 = vld [vmem:[%s373 + $0x4] sm:$0xf]
      %v434 = vld [vmem:[%s373 + $0x8] sm:$0xf]
      %v435 = vld [vmem:[%s373 + $0xc] sm:$0xf]
      %v436 = vld [vmem:[%s373 + $0x10] sm:$0xf]
      %v437 = vld [vmem:[%s373 + $0x14] sm:$0xf]
      %v438 = vld [vmem:[%s373 + $0x18] sm:$0xf]
      %v439 = vld [vmem:[%s373 + $0x1c] sm:$0xf]
      %v440 = vld [vmem:[%s373 + $0x20] sm:$0xf]
      %v441 = vld [vmem:[%s373 + $0x24] sm:$0xf]
      %v442 = vld [vmem:[%s373 + $0x28] sm:$0xf]
      %v443 = vld [vmem:[%s373 + $0x2c] sm:$0xf]
      %v444 = vld [vmem:[%s373 + $0x30] sm:$0xf]
      %v445 = vld [vmem:[%s373 + $0x34] sm:$0xf]
      %v446 = vld [vmem:[%s373 + $0x38] sm:$0xf]
      %v447 = vld [vmem:[%s373 + $0x3c] sm:$0xf]
      %v452 = vunpack.c.l.b16 %v424
      %v453 = vunpack.c.l.b16 %v425
      %v454 = vunpack.c.l.b16 %v426
      %v455 = vunpack.c.l.b16 %v427
      %v456 = vpack.c.b16 %v453, %v452
      %v457 = vpack.c.b16 %v455, %v454
      %v476 = vunpack.c.l.b16 %v432
      %v477 = vunpack.c.l.b16 %v433
      %v478 = vunpack.c.l.b16 %v434
      %v479 = vunpack.c.l.b16 %v435
      %v480 = vunpack.c.l.b16 %v436
      %v481 = vunpack.c.l.b16 %v437
      %v482 = vunpack.c.l.b16 %v438
      %v483 = vunpack.c.l.b16 %v439
      %v484 = vunpack.c.l.b16 %v440
      %v485 = vunpack.c.l.b16 %v441
      %v486 = vunpack.c.l.b16 %v442
      %v487 = vunpack.c.l.b16 %v443
      %v488 = vunpack.c.l.b16 %v444
      %v489 = vunpack.c.l.b16 %v445
      %v490 = vunpack.c.l.b16 %v446
      %v491 = vunpack.c.l.b16 %v447
      %v492 = vpack.c.b16 %v477, %v476
      %v493 = vpack.c.b16 %v479, %v478
      %v494 = vpack.c.b16 %v481, %v480
      %v495 = vpack.c.b16 %v483, %v482
      %v496 = vpack.c.b16 %v485, %v484
      %v497 = vpack.c.b16 %v487, %v486
      %v498 = vpack.c.b16 %v489, %v488
      %v499 = vpack.c.b16 %v491, %v490
      %508 = vmatprep.subr.bf16.mxu0 0
      %509 = vmatpush1.bf16.msra.mxu0 %v492
      %510 = vmatprep.subr.bf16.mxu0 0
      %511 = vmatpush1.bf16.msra.mxu0 %v493
      %512 = vmatprep.subr.bf16.mxu0 0
      %513 = vmatpush1.bf16.msra.mxu0 %v494
      %514 = vmatprep.subr.bf16.mxu0 0
      %515 = vmatpush1.bf16.msra.mxu0 %v495
      %516 = vmatprep.subr.bf16.mxu0 0
      %517 = vmatpush1.bf16.msra.mxu0 %v496
      %518 = vmatprep.subr.bf16.mxu0 0
      %519 = vmatpush1.bf16.msra.mxu0 %v497
      %520 = vmatprep.subr.bf16.mxu0 0
      %521 = vmatpush1.bf16.msra.mxu0 %v498
      %522 = vmatprep.subr.bf16.mxu0 0
      %523 = vmatpush1.bf16.msra.mxu0 %v499
      %524 = vmatprep.subr.bf16.mxu0 0
      %525 = vmatpush1.bf16.msra.mxu0 0
      %526 = vmatprep.subr.bf16.mxu0 0
      %527 = vmatpush1.bf16.msra.mxu0 0
      %528 = vmatprep.subr.bf16.mxu0 0
      %529 = vmatpush1.bf16.msra.mxu0 0
      %530 = vmatprep.subr.bf16.mxu0 0
      %531 = vmatpush1.bf16.msra.mxu0 0
      %532 = vmatprep.subr.bf16.mxu0 0
      %533 = vmatpush1.bf16.msra.mxu0 0
      %534 = vmatprep.subr.bf16.mxu0 0
      %535 = vmatpush1.bf16.msra.mxu0 0
      %536 = vmatprep.subr.bf16.mxu0 0
      %537 = vmatpush1.bf16.msra.mxu0 0
      %538 = vmatprep.subr.bf16.mxu0 0
      %539 = vmatpush1.bf16.msra.mxu0 0
      %540 = vmatprep.mubr.bf16.mxu0 0
      %541 = vmatmul.mubr.bf16.gmra.mrb[0].mxu0 %v456
      %v542 = vpop.f32.mrb[0].mxu0
      %v543 = vadd.f32 0.0, %v542
      %v544 = vpop.f32.mrb[0].mxu0
      %v545 = vpop.f32.mrb[0].mxu0
      %v546 = vadd.f32 0.0, %v545
      %v547 = vpop.f32.mrb[0].mxu0
      %548 = vmatprep.mubr.bf16.mxu0 0
      %549 = vmatmul.mubr.bf16.gmra.mrb[0].mxu0 %v457
      %v550 = vpop.f32.mrb[0].mxu0
      %v551 = vadd.f32 0.0, %v550
      %v552 = vpop.f32.mrb[0].mxu0
      %v553 = vpop.f32.mrb[0].mxu0
      %v554 = vadd.f32 0.0, %v553
      %v555 = vpop.f32.mrb[0].mxu0
      %556 = vdwg.mxu0
      %v557 = vadd.f32 %v428, %v543
      %v558 = vadd.f32 %v429, %v546
      %v559 = vadd.f32 %v430, %v551
      %v560 = vadd.f32 %v431, %v554
      %561 = vst [vmem:[#allocation2] sm:$0xff] %v557
      %562 = vst [vmem:[#allocation2 + $0x8] sm:$0xff] %v558
      %563 = vst [vmem:[#allocation2 + $0x10] sm:$0xff] %v559
      %564 = vst [vmem:[#allocation2 + $0x18] sm:$0xff] %v560
      // Predicated region
      $region37: #{generator_forward.14} parent=31 // pred_check
        %p565 = pneg %p412
      $region38: #{generator_forward.14} parent=31 // pred_check_branch
        %567 = sbr.rel (%p565) target = $region40
      $region39: #{generator_forward.14} parent=31 // pred_region
        %v568 = vld [vmem:[#allocation2] sm:$0xff]
        %v569 = vld [vmem:[#allocation2 + $0x8] sm:$0xff]
        %v570 = vld [vmem:[#allocation2 + $0x10] sm:$0xff]
        %v571 = vld [vmem:[#allocation2 + $0x18] sm:$0xff]
        %v572 = vadd.f32 %v568, %v569
        %v573 = vadd.f32 %v572, %v570
        %v574 = vadd.f32 %v573, %v571
        %v575 = vrot.slane %v574, 4
        %v576 = vadd.f32 %v574, %v575
        %v577 = vrot.slane %v576, 2
        %v578 = vadd.f32 %v576, %v577
        %v579 = vrot.slane %v578, 1
        %v580 = vadd.f32 %v578, %v579
        %v581 = vmul.f32 %v568, %v568
        %v582 = vmul.f32 %v569, %v569
        %v583 = vmul.f32 %v570, %v570
        %v584 = vmul.f32 %v571, %v571
        %v585 = vadd.f32 %v581, %v582
        %v586 = vadd.f32 %v585, %v583
        %v587 = vadd.f32 %v586, %v584
        %v588 = vrot.slane %v587, 4
        %v589 = vadd.f32 %v587, %v588
        %v590 = vrot.slane %v589, 2
        %v591 = vadd.f32 %v589, %v590
        %v592 = vrot.slane %v591, 1
        %v593 = vadd.f32 %v591, %v592
        %594 = vst [vmem:[%s400] sm:$0xff] %v580
        %595 = vst [vmem:[%s410] sm:$0xff] %v593
        %v596 = vld [vmem:[%s377] sm:$0x1]
        %v598 = vlaneseq
        %v599 = vshrl.u32 %v598, 7
        %v600 = vsub.s32 0, %v599
        %v601 = vrot.slane %v596, %v600
        %v603 = vadd.f32 %v568, %v601
        %v604 = vadd.f32 %v569, %v601
        %v605 = vadd.f32 %v570, %v601
        %v606 = vadd.f32 %v571, %v601
        %607 = vst [vmem:[%s389] sm:$0xff] %v603
        %608 = vst [vmem:[%s389 + $0x8] sm:$0xff] %v604
        %609 = vst [vmem:[%s389 + $0x10] sm:$0xff] %v605
        %610 = vst [vmem:[%s389 + $0x18] sm:$0xff] %v606
      $region40: #{generator_forward.14} parent=31 // pred_fallthru
        _
      %s611 = smul.u32 4, %s24
      %p612 = scmp.lt.s32.totalorder %s23, 3
      %s613 = scalar_select %p612, %s23, 3
      %p614 = scmp.lt.s32.totalorder %s611, 3
      %s615 = scalar_select %p614, %s611, 3
      %p616 = scmp.lt.s32.totalorder %s25, 0
      %s617 = scalar_select %p616, %s25, 0
      %s618 = sadd.s32 %s617, %s615
      %s619 = smul.addr %s613, 4
      %s620 = sadd.s32 %s618, %s619
      %s621 = smul.addr %s620, 8
      %s622 = scalar_lea.vmem %s3, %s621
      %p623 = scmp.lt.s32.totalorder %s23, 3
      %s624 = scalar_select %p623, %s23, 3
      %p625 = scmp.lt.s32.totalorder %s24, 0
      %s626 = scalar_select %p625, %s24, 0
      %p627 = scmp.lt.s32.totalorder %s25, 0
      %s628 = scalar_select %p627, %s25, 0
      %s629 = sadd.s32 %s628, %s626
      %s630 = sadd.s32 %s629, %s624
      %s631 = smul.addr %s630, 8
      %s632 = scalar_lea.vmem %s4, %s631
      %p633 = scmp.lt.s32.totalorder %s23, 3
      %s634 = scalar_select %p633, %s23, 3
      %p635 = scmp.lt.s32.totalorder %s24, 0
      %s636 = scalar_select %p635, %s24, 0
      %p637 = scmp.lt.s32.totalorder %s25, 0
      %s638 = scalar_select %p637, %s25, 0
      %s639 = sadd.s32 %s638, %s636
      %s640 = sadd.s32 %s639, %s634
      %s641 = smul.addr %s640, 8
      %s642 = scalar_lea.vmem %s5, %s641
      // Predicated region
      $region41: #{generator_forward.14} parent=31 // pred_check
        %p643 = pneg %p151
      $region42: #{generator_forward.14} parent=31 // pred_check_branch
        %645 = sbr.rel (%p643) target = $region44
      $region43: #{generator_forward.14} parent=31 // pred_region
        %s646 = smul.u32 4, %s24
      $region44: #{generator_forward.14} parent=31 // pred_fallthru
        _
      // Predicated region
      $region45: #{generator_forward.14} parent=31 // pred_check
        %p647 = pneg %p181
      $region46: #{generator_forward.14} parent=31 // pred_check_branch
        %649 = sbr.rel (%p647) target = $region48
      $region47: #{generator_forward.14} parent=31 // pred_region
        _
      $region48: #{generator_forward.14} parent=31 // pred_fallthru
        _
      // Predicated region
      $region49: #{generator_forward.14} parent=31 // pred_check
        %p650 = pneg %p211
      $region50: #{generator_forward.14} parent=31 // pred_check_branch
        %652 = sbr.rel (%p650) target = $region52
      $region51: #{generator_forward.14} parent=31 // pred_region
        _
      $region52: #{generator_forward.14} parent=31 // pred_fallthru
        _
    $region32: #{generator_forward.14} parent=5 // pred_fallthru
      _
    %p653 = scmp.le.s32.totalorder 2, %s12
    // Predicated region
    $region53: #{generator_forward.14} parent=5 // pred_check
      %p654 = pneg %p653
    $region54: #{generator_forward.14} parent=5 // pred_check_branch
      %656 = sbr.rel (%p654) target = $region56
    $region55: #{generator_forward.14} parent=5 // pred_region
      %s657 = ssub.s32 %s12, 2
      // Predicated region
      $region57: #{generator_forward.14} parent=55 // pred_check
        %p658 = pneg %p157
      $region58: #{generator_forward.14} parent=55 // pred_check_branch
        %660 = sbr.rel (%p658) target = $region60
      $region59: #{generator_forward.14} parent=55 // pred_region
        %s661 = smul.u32 4, %s28
        %p662 = scmp.lt.s32.totalorder %s27, 3
        %s663 = scalar_select %p662, %s27, 3
        %p664 = scmp.lt.s32.totalorder %s661, 3
        %s665 = scalar_select %p664, %s661, 3
        %p666 = scmp.lt.s32.totalorder %s29, 0
        %s667 = scalar_select %p666, %s29, 0
        %s668 = sadd.s32 %s667, %s665
        %s669 = smul.addr %s663, 4
        %s670 = sadd.s32 %s668, %s669
        %s671 = smul.addr %s670, 8
        %s672 = scalar_lea.vmem %s3, %s671
      $region60: #{generator_forward.14} parent=55 // pred_fallthru
        _
      // Predicated region
      $region61: #{generator_forward.14} parent=55 // pred_check
        %p673 = pneg %p187
      $region62: #{generator_forward.14} parent=55 // pred_check_branch
        %675 = sbr.rel (%p673) target = $region64
      $region63: #{generator_forward.14} parent=55 // pred_region
        %p676 = scmp.lt.s32.totalorder %s27, 3
        %s677 = scalar_select %p676, %s27, 3
        %p678 = scmp.lt.s32.totalorder %s28, 0
        %s679 = scalar_select %p678, %s28, 0
        %p680 = scmp.lt.s32.totalorder %s29, 0
        %s681 = scalar_select %p680, %s29, 0
        %s682 = sadd.s32 %s681, %s679
        %s683 = sadd.s32 %s682, %s677
        %s684 = smul.addr %s683, 8
        %s685 = scalar_lea.vmem %s4, %s684
      $region64: #{generator_forward.14} parent=55 // pred_fallthru
        _
      // Predicated region
      $region65: #{generator_forward.14} parent=55 // pred_check
        %p686 = pneg %p217
      $region66: #{generator_forward.14} parent=55 // pred_check_branch
        %688 = sbr.rel (%p686) target = $region68
      $region67: #{generator_forward.14} parent=55 // pred_region
        %p689 = scmp.lt.s32.totalorder %s27, 3
        %s690 = scalar_select %p689, %s27, 3
        %p691 = scmp.lt.s32.totalorder %s28, 0
        %s692 = scalar_select %p691, %s28, 0
        %p693 = scmp.lt.s32.totalorder %s29, 0
        %s694 = scalar_select %p693, %s29, 0
        %s695 = sadd.s32 %s694, %s692
        %s696 = sadd.s32 %s695, %s690
        %s697 = smul.addr %s696, 8
        %s698 = scalar_lea.vmem %s5, %s697
      $region68: #{generator_forward.14} parent=55 // pred_fallthru
        _
    $region56: #{generator_forward.14} parent=5 // pred_fallthru
      _
  $region6: #{generator_forward.14} parent=0 // loop_footer
    %s16 = sadd.s32 1, %s12
  $region7: #{generator_forward.14} parent=0 // loop_footer_branch
    %11 = sbr.rel target = $region3
  $region8: #{generator_forward.14} parent=0 // loop_exit
    _

// kernel: generator_forward.15
$region0: #{generator_forward.15}
  #allocation0 [shape = 'u32[]', space=smem, size = 0x4, offset = 0x4, fixed_abs, tag = 'smem constant byte address 0x4 - core index']
  #allocation1 [shape = 'u32[144,128]{1,0:T(1,128)}', space=vmem, size = 0x12000, scoped, tag = 'internal scratch']
  #allocation2 [shape = 'f32[128,128]{1,0:T(8,128)}', space=vmem, size = 0x10000, scoped, tag = 'scratch operand']
  %s0 = inlined_call_operand.vmem [shape: bf16[4,128,128], index: 0, kind: input, shape index: {}]
  %s1 = inlined_call_operand.vmem [shape: bf16[4,128,128], index: 1, kind: input, shape index: {}]
  %s2 = inlined_call_operand.vmem [shape: f32[1,128], index: 2, kind: input, shape index: {}]
  %s3 = inlined_call_operand.vmem [shape: f32[4,128,128], index: 3, kind: output, shape index: {0}]
  %s4 = inlined_call_operand.hbm [shape: f32[4,8,128], index: 4, kind: output, shape index: {1}]
  %s5 = inlined_call_operand.hbm [shape: f32[4,8,128], index: 5, kind: output, shape index: {2}]
  %6 = xla_tuple %s3, %s4, %s5
  %s7 = sld [smem:[#allocation0]]
  $region69: #{generator_forward.15} parent=0
    _
  %s9 = ssub.s32 1, %s7
  %s10 = scalar_select 0, %s9, %s7
  $region1: #{generator_forward.15} parent=0
    #allocation3 [shape = 'u8[8192]{0}', space=vmem, size = 0x2000, scoped, tag = 'output window, operand 1']
    #allocation4 [shape = 's32[2]{0}', space=sflag, size = 0x8, scoped, tag = 'scoped memory for generator_forward.15']
    #allocation5 [shape = 'u8[8192]{0}', space=vmem, size = 0x2000, scoped, tag = 'output window, operand 2']
    #allocation6 [shape = 's32[2]{0}', space=sflag, size = 0x8, scoped, tag = 'scoped memory for generator_forward.15']
    %11 = vsyncpa [#allocation4], 0
    %s12 = scalar_lea.sflag [#allocation4], 1
    %13 = vsyncpa %s12, 0
    %14 = vsyncpa [#allocation6], 0
    %s15 = scalar_lea.sflag [#allocation6], 1
    %16 = vsyncpa %s15, 0
    loop: start=0, step=1, limit=6
    $region2: #{generator_forward.15} parent=1 // loop_pre_header
      _
    $region3: #{generator_forward.15} parent=1 // loop_header
      %s18 = sphi 0, %s22
      %p19 = scmp.ge.s32.totalorder %s18, 6
      %s25 = sphi 0, %s51
      %s26 = sphi 0, %s47
      %s27 = sphi 0, %s43
      %s28 = sphi 0, %s39
      %s29 = sphi 0, %s25
      %s30 = sphi 0, %s26
      %s31 = sphi 0, %s27
      %s32 = sphi 0, %s28
      %s33 = sphi 0, %s29
      %s34 = sphi 0, %s30
      %s35 = sphi 0, %s31
      %s36 = sphi 0, %s32
      %s58 = sphi 0, %s60
      %s61 = sphi 0, %s58
      %s62 = sphi 0, %s61
      %s78 = sphi 0, %s62
      %s88 = sphi 0, %s90
      %s91 = sphi 0, %s88
      %s92 = sphi 0, %s91
      %s108 = sphi 0, %s92
      %s114 = sphi 0, %s116
      %s117 = sphi 0, %s114
      %s118 = sphi 0, %s117
      %s134 = sphi 0, %s118
      %s144 = sphi 0, %s146
      %s147 = sphi 0, %s144
      %s148 = sphi 0, %s147
      %s164 = sphi 0, %s148
      %s174 = sphi 0, %s176
      %s177 = sphi 0, %s174
      %s178 = sphi 0, %s177
      %s194 = sphi 0, %s178
      %s204 = sphi 0, %s206
      %s207 = sphi 0, %s204
      %s208 = sphi 0, %s207
      %s224 = sphi 0, %s208
    $region4: #{generator_forward.15} parent=1 // loop_header_branch
      %21 = sbr.rel (%p19) target = $region8
    $region5: #{generator_forward.15} parent=1 // loop_body
      %s23 = ssub.s32 %s18, 1
      %s24 = ssub.s32 %s18, 2
      %s37 = sadd.s32 1, %s28
      %p38 = scmp.ge.s32.totalorder %s37, 1
      %s39 = scalar_select %p38, 0, %s37
      %s40 = sadd.s32 1, %s27
      %s41 = scalar_select %p38, %s40, %s27
      %p42 = scmp.ge.s32.totalorder %s41, 1
      %s43 = scalar_select %p42, 0, %s41
      %s44 = sadd.s32 1, %s26
      %s45 = scalar_select %p42, %s44, %s26
      %p46 = scmp.ge.s32.totalorder %s45, 1
      %s47 = scalar_select %p46, 0, %s45
      %s48 = sadd.s32 1, %s25
      %s49 = scalar_select %p46, %s48, %s25
      %p50 = scmp.ge.s32.totalorder %s49, 4
      %s51 = scalar_select %p50, 0, %s49
      %s52 = ssub.s32 %s25, %s51
      %s53 = ssub.s32 %s26, %s47
      %s54 = sor.u32 %s52, %s53
      %s55 = ssub.s32 %s28, %s39
      %s56 = sor.u32 %s54, %s55
      %p57 = scmp.eq.s32.totalorder %s56, 0
      %s59 = sadd.s32 %s58, 1
      %s60 = scalar_select %p57, %s58, %s59
      %p63 = pneg %p57
      %p64 = scmp.eq.s32.totalorder %s18, 3
      %p65 = por %p63, %p64
      %p66 = scmp.ne.s32.totalorder %s58, %s61
      %p67 = scmp.eq.s32.totalorder %s18, 0
      %p68 = por %p66, %p67
      %p69 = scmp.ne.s32.totalorder %s58, %s61
      %p70 = scmp.eq.s32.totalorder %s23, 3
      %p71 = por %p69, %p70
      %p72 = scmp.ne.s32.totalorder %s61, %s62
      %p73 = scmp.eq.s32.totalorder %s23, 0
      %p74 = por %p72, %p73
      %p75 = scmp.ne.s32.totalorder %s61, %s62
      %p76 = scmp.eq.s32.totalorder %s24, 3
      %p77 = por %p75, %p76
      %p79 = scmp.ne.s32.totalorder %s62, %s78
      %p80 = scmp.eq.s32.totalorder %s24, 0
      %p81 = por %p79, %p80
      %s82 = ssub.s32 %s25, %s51
      %s83 = ssub.s32 %s28, %s39
      %s84 = sor.u32 %s82, %s83
      %s85 = ssub.s32 %s27, %s43
      %s86 = sor.u32 %s84, %s85
      %p87 = scmp.eq.s32.totalorder %s86, 0
      %s89 = sadd.s32 %s88, 1
      %s90 = scalar_select %p87, %s88, %s89
      %p93 = pneg %p87
      %p94 = scmp.eq.s32.totalorder %s18, 3
      %p95 = por %p93, %p94
      %p96 = scmp.ne.s32.totalorder %s88, %s91
      %p97 = scmp.eq.s32.totalorder %s18, 0
      %p98 = por %p96, %p97
      %p99 = scmp.ne.s32.totalorder %s88, %s91
      %p100 = scmp.eq.s32.totalorder %s23, 3
      %p101 = por %p99, %p100
      %p102 = scmp.ne.s32.totalorder %s91, %s92
      %p103 = scmp.eq.s32.totalorder %s23, 0
      %p104 = por %p102, %p103
      %p105 = scmp.ne.s32.totalorder %s91, %s92
      %p106 = scmp.eq.s32.totalorder %s24, 3
      %p107 = por %p105, %p106
      %p109 = scmp.ne.s32.totalorder %s92, %s108
      %p110 = scmp.eq.s32.totalorder %s24, 0
      %p111 = por %p109, %p110
      %s112 = ssub.s32 %s27, %s43
      %p113 = scmp.eq.s32.totalorder %s112, 0
      %s115 = sadd.s32 %s114, 1
      %s116 = scalar_select %p113, %s114, %s115
      %p119 = pneg %p113
      %p120 = scmp.eq.s32.totalorder %s18, 3
      %p121 = por %p119, %p120
      %p122 = scmp.ne.s32.totalorder %s114, %s117
      %p123 = scmp.eq.s32.totalorder %s18, 0
      %p124 = por %p122, %p123
      %p125 = scmp.ne.s32.totalorder %s114, %s117
      %p126 = scmp.eq.s32.totalorder %s23, 3
      %p127 = por %p125, %p126
      %p128 = scmp.ne.s32.totalorder %s117, %s118
      %p129 = scmp.eq.s32.totalorder %s23, 0
      %p130 = por %p128, %p129
      %p131 = scmp.ne.s32.totalorder %s117, %s118
      %p132 = scmp.eq.s32.totalorder %s24, 3
      %p133 = por %p131, %p132
      %p135 = scmp.ne.s32.totalorder %s118, %s134
      %p136 = scmp.eq.s32.totalorder %s24, 0
      %p137 = por %p135, %p136
      %s138 = ssub.s32 %s25, %s51
      %s139 = ssub.s32 %s26, %s47
      %s140 = sor.u32 %s138, %s139
      %s141 = ssub.s32 %s27, %s43
      %s142 = sor.u32 %s140, %s141
      %p143 = scmp.eq.s32.totalorder %s142, 0
      %s145 = sadd.s32 %s144, 1
      %s146 = scalar_select %p143, %s144, %s145
      %p149 = pneg %p143
      %p150 = scmp.eq.s32.totalorder %s18, 3
      %p151 = por %p149, %p150
      %p152 = scmp.ne.s32.totalorder %s144, %s147
      %p153 = scmp.eq.s32.totalorder %s18, 0
      %p154 = por %p152, %p153
      %p155 = scmp.ne.s32.totalorder %s144, %s147
      %p156 = scmp.eq.s32.totalorder %s23, 3
      %p157 = por %p155, %p156
      %p158 = scmp.ne.s32.totalorder %s147, %s148
      %p159 = scmp.eq.s32.totalorder %s23, 0
      %p160 = por %p158, %p159
      %p161 = scmp.ne.s32.totalorder %s147, %s148
      %p162 = scmp.eq.s32.totalorder %s24, 3
      %p163 = por %p161, %p162
      %p165 = scmp.ne.s32.totalorder %s148, %s164
      %p166 = scmp.eq.s32.totalorder %s24, 0
      %p167 = por %p165, %p166
      %s168 = ssub.s32 %s25, %s51
      %s169 = ssub.s32 %s26, %s47
      %s170 = sor.u32 %s168, %s169
      %s171 = ssub.s32 %s27, %s43
      %s172 = sor.u32 %s170, %s171
      %p173 = scmp.eq.s32.totalorder %s172, 0
      %s175 = sadd.s32 %s174, 1
      %s176 = scalar_select %p173, %s174, %s175
      %p179 = pneg %p173
      %p180 = scmp.eq.s32.totalorder %s18, 3
      %p181 = por %p179, %p180
      %p182 = scmp.ne.s32.totalorder %s174, %s177
      %p183 = scmp.eq.s32.totalorder %s18, 0
      %p184 = por %p182, %p183
      %p185 = scmp.ne.s32.totalorder %s174, %s177
      %p186 = scmp.eq.s32.totalorder %s23, 3
      %p187 = por %p185, %p186
      %p188 = scmp.ne.s32.totalorder %s177, %s178
      %p189 = scmp.eq.s32.totalorder %s23, 0
      %p190 = por %p188, %p189
      %p191 = scmp.ne.s32.totalorder %s177, %s178
      %p192 = scmp.eq.s32.totalorder %s24, 3
      %p193 = por %p191, %p192
      %p195 = scmp.ne.s32.totalorder %s178, %s194
      %p196 = scmp.eq.s32.totalorder %s24, 0
      %p197 = por %p195, %p196
      %s198 = ssub.s32 %s25, %s51
      %s199 = ssub.s32 %s26, %s47
      %s200 = sor.u32 %s198, %s199
      %s201 = ssub.s32 %s27, %s43
      %s202 = sor.u32 %s200, %s201
      %p203 = scmp.eq.s32.totalorder %s202, 0
      %s205 = sadd.s32 %s204, 1
      %s206 = scalar_select %p203, %s204, %s205
      %p209 = pneg %p203
      %p210 = scmp.eq.s32.totalorder %s18, 3
      %p211 = por %p209, %p210
      %p212 = scmp.ne.s32.totalorder %s204, %s207
      %p213 = scmp.eq.s32.totalorder %s18, 0
      %p214 = por %p212, %p213
      %p215 = scmp.ne.s32.totalorder %s204, %s207
      %p216 = scmp.eq.s32.totalorder %s23, 3
      %p217 = por %p215, %p216
      %p218 = scmp.ne.s32.totalorder %s207, %s208
      %p219 = scmp.eq.s32.totalorder %s23, 0
      %p220 = por %p218, %p219
      %p221 = scmp.ne.s32.totalorder %s207, %s208
      %p222 = scmp.eq.s32.totalorder %s24, 3
      %p223 = por %p221, %p222
      %p225 = scmp.ne.s32.totalorder %s208, %s224
      %p226 = scmp.eq.s32.totalorder %s24, 0
      %p227 = por %p225, %p226
      %p228 = scmp.le.s32.totalorder 1, %s18
      %p229 = scmp.lt.s32.totalorder %s18, 5
      %p230 = pnand %p228, %p229
      %p231 = pneg %p230
      // Predicated region
      $region9: #{generator_forward.15} parent=5 // pred_check
        _
      $region10: #{generator_forward.15} parent=5 // pred_check_branch
        %233 = sbr.rel (%p230) target = $region12
      $region11: #{generator_forward.15} parent=5 // pred_region
        %s234 = ssub.s32 %s18, 1
        // Predicated region
        $region13: #{generator_forward.15} parent=11 // pred_check
          %p235 = pneg %p130
        $region14: #{generator_forward.15} parent=11 // pred_check_branch
          %237 = sbr.rel (%p235) target = $region16
        $region15: #{generator_forward.15} parent=11 // pred_region
          %p238 = scmp.lt.s32.totalorder %s31, 0
          %s239 = scalar_select %p238, %s31, 0
          %s240 = scalar_lea.vmem %s2, %s239
        $region16: #{generator_forward.15} parent=11 // pred_fallthru
          _
      $region12: #{generator_forward.15} parent=5 // pred_fallthru
        _
      %p241 = scmp.lt.s32.totalorder %s18, 4
      // Predicated region
      $region17: #{generator_forward.15} parent=5 // pred_check
        %p242 = pneg %p241
      $region18: #{generator_forward.15} parent=5 // pred_check_branch
        %244 = sbr.rel (%p242) target = $region20
      $region19: #{generator_forward.15} parent=5 // pred_region
        // Predicated region
        $region21: #{generator_forward.15} parent=19 // pred_check
          %p245 = pneg %p68
        $region22: #{generator_forward.15} parent=19 // pred_check_branch
          %247 = sbr.rel (%p245) target = $region24
        $region23: #{generator_forward.15} parent=19 // pred_region
          %s248 = smul.u32 16, %s26
          %p249 = scmp.lt.s32.totalorder %s25, 3
          %s250 = scalar_select %p249, %s25, 3
          %p251 = scmp.lt.s32.totalorder %s248, 15
          %s252 = scalar_select %p251, %s248, 15
          %p253 = scmp.lt.s32.totalorder %s28, 0
          %s254 = scalar_select %p253, %s28, 0
          %s255 = sadd.s32 %s254, %s252
          %s256 = smul.addr %s250, 16
          %s257 = sadd.s32 %s255, %s256
          %s258 = smul.addr %s257, 4
          %s259 = scalar_lea.vmem %s0, %s258
          %s260 = smul.u32 16, %s26
        $region24: #{generator_forward.15} parent=19 // pred_fallthru
          _
        // Predicated region
        $region25: #{generator_forward.15} parent=19 // pred_check
          %p261 = pneg %p98
        $region26: #{generator_forward.15} parent=19 // pred_check_branch
          %263 = sbr.rel (%p261) target = $region28
        $region27: #{generator_forward.15} parent=19 // pred_region
          %s264 = smul.u32 16, %s28
          %p265 = scmp.lt.s32.totalorder %s25, 3
          %s266 = scalar_select %p265, %s25, 3
          %p267 = scmp.lt.s32.totalorder %s264, 15
          %s268 = scalar_select %p267, %s264, 15
          %p269 = scmp.lt.s32.totalorder %s27, 0
          %s270 = scalar_select %p269, %s27, 0
          %s271 = sadd.s32 %s270, %s268
          %s272 = smul.addr %s266, 16
          %s273 = sadd.s32 %s271, %s272
          %s274 = smul.addr %s273, 4
          %s275 = scalar_lea.vmem %s1, %s274
          %s276 = smul.u32 16, %s28
        $region28: #{generator_forward.15} parent=19 // pred_fallthru
          _
      $region20: #{generator_forward.15} parent=5 // pred_fallthru
        _
      %p277 = scmp.le.s32.totalorder 1, %s18
      %p278 = scmp.lt.s32.totalorder %s18, 5
      %p279 = pnand %p277, %p278
      %p280 = pneg %p279
      // Predicated region
      $region29: #{generator_forward.15} parent=5 // pred_check
        _
      $region30: #{generator_forward.15} parent=5 // pred_check_branch
        %282 = sbr.rel (%p279) target = $region32
      $region31: #{generator_forward.15} parent=5 // pred_region
        %s283 = ssub.s32 %s18, 1
        %s284 = smul.u32 16, %s30
        %p285 = scmp.lt.s32.totalorder %s29, 3
        %s286 = scalar_select %p285, %s29, 3
        %p287 = scmp.lt.s32.totalorder %s284, 15
        %s288 = scalar_select %p287, %s284, 15
        %p289 = scmp.lt.s32.totalorder %s32, 0
        %s290 = scalar_select %p289, %s32, 0
        %s291 = sadd.s32 %s290, %s288
        %s292 = smul.addr %s286, 16
        %s293 = sadd.s32 %s291, %s292
        %s294 = smul.addr %s293, 4
        %s295 = scalar_lea.vmem %s0, %s294
        %p296 = pneg %p74
        %p297 = pneg %p71
        %s298 = smul.u32 16, %s32
        %p299 = scmp.lt.s32.totalorder %s29, 3
        %s300 = scalar_select %p299, %s29, 3
        %p301 = scmp.lt.s32.totalorder %s298, 15
        %s302 = scalar_select %p301, %s298, 15
        %p303 = scmp.lt.s32.totalorder %s31, 0
        %s304 = scalar_select %p303, %s31, 0
        %s305 = sadd.s32 %s304, %s302
        %s306 = smul.addr %s300, 16
        %s307 = sadd.s32 %s305, %s306
        %s308 = smul.addr %s307, 4
        %s309 = scalar_lea.vmem %s1, %s308
        %p310 = pneg %p104
        %p311 = pneg %p101
        %p312 = scmp.lt.s32.totalorder %s31, 0
        %s313 = scalar_select %p312, %s31, 0
        %s314 = scalar_lea.vmem %s2, %s313
        %p315 = pneg %p130
        %p316 = pneg %p127
        %p317 = pneg %p160
        %p318 = pneg %p157
        %s319 = smul.u32 16, %s30
        %p320 = scmp.lt.s32.totalorder %s29, 3
        %s321 = scalar_select %p320, %s29, 3
        %p322 = scmp.lt.s32.totalorder %s319, 15
        %s323 = scalar_select %p322, %s319, 15
        %p324 = scmp.lt.s32.totalorder %s31, 0
        %s325 = scalar_select %p324, %s31, 0
        %s326 = sadd.s32 %s325, %s323
        %s327 = smul.addr %s321, 16
        %s328 = sadd.s32 %s326, %s327
        %s329 = smul.addr %s328, 8
        %s330 = scalar_lea.vmem %s3, %s329
        %p331 = pneg %p190
        %p332 = pneg %p187
        %s333 = sand.u32 %s177, 1
        %s334 = scalar_lea.sflag [#allocation4], %s333
        %s335 = sand.u32 %s177, 1
        %s336 = smul.addr %s335, 8
        %s337 = scalar_lea.vmem [#allocation3], %s336
        %p338 = pneg %p220
        %p339 = pneg %p217
        %s340 = sand.u32 %s207, 1
        %s341 = scalar_lea.sflag [#allocation6], %s340
        %s342 = sand.u32 %s207, 1
        %s343 = smul.addr %s342, 8
        %s344 = scalar_lea.vmem [#allocation5], %s343
        %s345 = smul.u32 16, %s30
        %p346 = scmp.lt.s32.totalorder %s29, 3
        %s347 = scalar_select %p346, %s29, 3
        %p348 = scmp.lt.s32.totalorder %s345, 15
        %s349 = scalar_select %p348, %s345, 15
        %p350 = scmp.lt.s32.totalorder %s32, 0
        %s351 = scalar_select %p350, %s32, 0
        %s352 = sadd.s32 %s351, %s349
        %s353 = smul.addr %s347, 16
        %s354 = sadd.s32 %s352, %s353
        %s355 = smul.addr %s354, 4
        %s356 = scalar_lea.vmem %s0, %s355
        %s357 = smul.u32 16, %s30
        %s358 = smul.u32 16, %s32
        %p359 = scmp.lt.s32.totalorder %s29, 3
        %s360 = scalar_select %p359, %s29, 3
        %p361 = scmp.lt.s32.totalorder %s358, 15
        %s362 = scalar_select %p361, %s358, 15
        %p363 = scmp.lt.s32.totalorder %s31, 0
        %s364 = scalar_select %p363, %s31, 0
        %s365 = sadd.s32 %s364, %s362
        %s366 = smul.addr %s360, 16
        %s367 = sadd.s32 %s365, %s366
        %s368 = smul.addr %s367, 4
        %s369 = scalar_lea.vmem %s1, %s368
        %s370 = smul.u32 16, %s32
        %p371 = scmp.lt.s32.totalorder %s31, 0
        %s372 = scalar_select %p371, %s31, 0
        %s373 = scalar_lea.vmem %s2, %s372
        %s374 = smul.u32 16, %s30
        %p375 = scmp.lt.s32.totalorder %s29, 3
        %s376 = scalar_select %p375, %s29, 3
        %p377 = scmp.lt.s32.totalorder %s374, 15
        %s378 = scalar_select %p377, %s374, 15
        %p379 = scmp.lt.s32.totalorder %s31, 0
        %s380 = scalar_select %p379, %s31, 0
        %s381 = sadd.s32 %s380, %s378
        %s382 = smul.addr %s376, 16
        %s383 = sadd.s32 %s381, %s382
        %s384 = smul.addr %s383, 8
        %s385 = scalar_lea.vmem %s3, %s384
        %s386 = smul.u32 16, %s30
        %p388 = scmp.eq.s32.totalorder %s32, 0
        // Predicated region
        $region33: #{generator_forward.15} parent=31 // pred_check
          %p389 = pneg %p388
        $region34: #{generator_forward.15} parent=31 // pred_check_branch
          %391 = sbr.rel (%p389) target = $region36
        $region35: #{generator_forward.15} parent=31 // pred_region
          %392 = vst [vmem:[#allocation2] sm:$0xff] 0.0
          %393 = vst [vmem:[#allocation2 + $0x8] sm:$0xff] 0.0
          %394 = vst [vmem:[#allocation2 + $0x10] sm:$0xff] 0.0
          %395 = vst [vmem:[#allocation2 + $0x18] sm:$0xff] 0.0
          %396 = vst [vmem:[#allocation2 + $0x20] sm:$0xff] 0.0
          %397 = vst [vmem:[#allocation2 + $0x28] sm:$0xff] 0.0
          %398 = vst [vmem:[#allocation2 + $0x30] sm:$0xff] 0.0
          %399 = vst [vmem:[#allocation2 + $0x38] sm:$0xff] 0.0
          %400 = vst [vmem:[#allocation2 + $0x40] sm:$0xff] 0.0
          %401 = vst [vmem:[#allocation2 + $0x48] sm:$0xff] 0.0
          %402 = vst [vmem:[#allocation2 + $0x50] sm:$0xff] 0.0
          %403 = vst [vmem:[#allocation2 + $0x58] sm:$0xff] 0.0
          %404 = vst [vmem:[#allocation2 + $0x60] sm:$0xff] 0.0
          %405 = vst [vmem:[#allocation2 + $0x68] sm:$0xff] 0.0
          %406 = vst [vmem:[#allocation2 + $0x70] sm:$0xff] 0.0
          %407 = vst [vmem:[#allocation2 + $0x78] sm:$0xff] 0.0
        $region36: #{generator_forward.15} parent=31 // pred_fallthru
          _
        %v408 = vld [vmem:[%s356] sm:$0xf]
        %v409 = vld [vmem:[%s356 + $0x4] sm:$0xf]
        %v410 = vld [vmem:[%s356 + $0x8] sm:$0xf]
        %v411 = vld [vmem:[%s356 + $0xc] sm:$0xf]
        %v412 = vld [vmem:[%s356 + $0x10] sm:$0xf]
        %v413 = vld [vmem:[%s356 + $0x14] sm:$0xf]
        %v414 = vld [vmem:[%s356 + $0x18] sm:$0xf]
        %v415 = vld [vmem:[%s356 + $0x1c] sm:$0xf]
        %v416 = vld [vmem:[%s356 + $0x20] sm:$0xf]
        %v417 = vld [vmem:[%s356 + $0x24] sm:$0xf]
        %v418 = vld [vmem:[%s356 + $0x28] sm:$0xf]
        %v419 = vld [vmem:[%s356 + $0x2c] sm:$0xf]
        %v420 = vld [vmem:[%s356 + $0x30] sm:$0xf]
        %v421 = vld [vmem:[%s356 + $0x34] sm:$0xf]
        %v422 = vld [vmem:[%s356 + $0x38] sm:$0xf]
        %v423 = vld [vmem:[%s356 + $0x3c] sm:$0xf]
        %v424 = vld [vmem:[#allocation2] sm:$0xff]
        %v425 = vld [vmem:[#allocation2 + $0x8] sm:$0xff]
        %v426 = vld [vmem:[#allocation2 + $0x10] sm:$0xff]
        %v427 = vld [vmem:[#allocation2 + $0x18] sm:$0xff]
        %v428 = vld [vmem:[#allocation2 + $0x20] sm:$0xff]
        %v429 = vld [vmem:[#allocation2 + $0x28] sm:$0xff]
        %v430 = vld [vmem:[#allocation2 + $0x30] sm:$0xff]
        %v431 = vld [vmem:[#allocation2 + $0x38] sm:$0xff]
        %v432 = vld [vmem:[#allocation2 + $0x40] sm:$0xff]
        %v433 = vld [vmem:[#allocation2 + $0x48] sm:$0xff]
        %v434 = vld [vmem:[#allocation2 + $0x50] sm:$0xff]
        %v435 = vld [vmem:[#allocation2 + $0x58] sm:$0xff]
        %v436 = vld [vmem:[#allocation2 + $0x60] sm:$0xff]
        %v437 = vld [vmem:[#allocation2 + $0x68] sm:$0xff]
        %v438 = vld [vmem:[#allocation2 + $0x70] sm:$0xff]
        %v439 = vld [vmem:[#allocation2 + $0x78] sm:$0xff]
        %v440 = vld [vmem:[%s369] sm:$0xf]
        %v441 = vld [vmem:[%s369 + $0x4] sm:$0xf]
        %v442 = vld [vmem:[%s369 + $0x8] sm:$0xf]
        %v443 = vld [vmem:[%s369 + $0xc] sm:$0xf]
        %v444 = vld [vmem:[%s369 + $0x10] sm:$0xf]
        %v445 = vld [vmem:[%s369 + $0x14] sm:$0xf]
        %v446 = vld [vmem:[%s369 + $0x18] sm:$0xf]
        %v447 = vld [vmem:[%s369 + $0x1c] sm:$0xf]
        %v448 = vld [vmem:[%s369 + $0x20] sm:$0xf]
        %v449 = vld [vmem:[%s369 + $0x24] sm:$0xf]
        %v450 = vld [vmem:[%s369 + $0x28] sm:$0xf]
        %v451 = vld [vmem:[%s369 + $0x2c] sm:$0xf]
        %v452 = vld [vmem:[%s369 + $0x30] sm:$0xf]
        %v453 = vld [vmem:[%s369 + $0x34] sm:$0xf]
        %v454 = vld [vmem:[%s369 + $0x38] sm:$0xf]
        %v455 = vld [vmem:[%s369 + $0x3c] sm:$0xf]
        %v472 = vunpack.c.l.b16 %v408
        %v473 = vunpack.c.l.b16 %v409
        %v474 = vunpack.c.l.b16 %v410
        %v475 = vunpack.c.l.b16 %v411
        %v476 = vunpack.c.l.b16 %v412
        %v477 = vunpack.c.l.b16 %v413
        %v478 = vunpack.c.l.b16 %v414
        %v479 = vunpack.c.l.b16 %v415
        %v480 = vunpack.c.l.b16 %v416
        %v481 = vunpack.c.l.b16 %v417
        %v482 = vunpack.c.l.b16 %v418
        %v483 = vunpack.c.l.b16 %v419
        %v484 = vunpack.c.l.b16 %v420
        %v485 = vunpack.c.l.b16 %v421
        %v486 = vunpack.c.l.b16 %v422
        %v487 = vunpack.c.l.b16 %v423
        %v488 = vpack.c.b16 %v473, %v472
        %v489 = vpack.c.b16 %v475, %v474
        %v490 = vpack.c.b16 %v477, %v476
        %v491 = vpack.c.b16 %v479, %v478
        %v492 = vpack.c.b16 %v481, %v480
        %v493 = vpack.c.b16 %v483, %v482
        %v494 = vpack.c.b16 %v485, %v484
        %v495 = vpack.c.b16 %v487, %v486
        %v520 = vunpack.c.l.b16 %v440
        %v521 = vunpack.c.l.b16 %v441
        %v522 = vunpack.c.l.b16 %v442
        %v523 = vunpack.c.l.b16 %v443
        %v524 = vunpack.c.l.b16 %v444
        %v525 = vunpack.c.l.b16 %v445
        %v526 = vunpack.c.l.b16 %v446
        %v527 = vunpack.c.l.b16 %v447
        %v528 = vunpack.c.l.b16 %v448
        %v529 = vunpack.c.l.b16 %v449
        %v530 = vunpack.c.l.b16 %v450
        %v531 = vunpack.c.l.b16 %v451
        %v532 = vunpack.c.l.b16 %v452
        %v533 = vunpack.c.l.b16 %v453
        %v534 = vunpack.c.l.b16 %v454
        %v535 = vunpack.c.l.b16 %v455
        %v536 = vpack.c.b16 %v521, %v520
        %v537 = vpack.c.b16 %v523, %v522
        %v538 = vpack.c.b16 %v525, %v524
        %v539 = vpack.c.b16 %v527, %v526
        %v540 = vpack.c.b16 %v529, %v528
        %v541 = vpack.c.b16 %v531, %v530
        %v542 = vpack.c.b16 %v533, %v532
        %v543 = vpack.c.b16 %v535, %v534
        %552 = vmatprep.subr.bf16.mxu0 0
        %553 = vmatpush1.bf16.msra.mxu0 %v536
        %554 = vmatprep.subr.bf16.mxu0 0
        %555 = vmatpush1.bf16.msra.mxu0 %v537
        %556 = vmatprep.subr.bf16.mxu0 0
        %557 = vmatpush1.bf16.msra.mxu0 %v538
        %558 = vmatprep.subr.bf16.mxu0 0
        %559 = vmatpush1.bf16.msra.mxu0 %v539
        %560 = vmatprep.subr.bf16.mxu0 0
        %561 = vmatpush1.bf16.msra.mxu0 %v540
        %562 = vmatprep.subr.bf16.mxu0 0
        %563 = vmatpush1.bf16.msra.mxu0 %v541
        %564 = vmatprep.subr.bf16.mxu0 0
        %565 = vmatpush1.bf16.msra.mxu0 %v542
        %566 = vmatprep.subr.bf16.mxu0 0
        %567 = vmatpush1.bf16.msra.mxu0 %v543
        %568 = vmatprep.subr.bf16.mxu0 0
        %569 = vmatpush1.bf16.msra.mxu0 0
        %570 = vmatprep.subr.bf16.mxu0 0
        %571 = vmatpush1.bf16.msra.mxu0 0
        %572 = vmatprep.subr.bf16.mxu0 0
        %573 = vmatpush1.bf16.msra.mxu0 0
        %574 = vmatprep.subr.bf16.mxu0 0
        %575 = vmatpush1.bf16.msra.mxu0 0
        %576 = vmatprep.subr.bf16.mxu0 0
        %577 = vmatpush1.bf16.msra.mxu0 0
        %578 = vmatprep.subr.bf16.mxu0 0
        %579 = vmatpush1.bf16.msra.mxu0 0
        %580 = vmatprep.subr.bf16.mxu0 0
        %581 = vmatpush1.bf16.msra.mxu0 0
        %582 = vmatprep.subr.bf16.mxu0 0
        %583 = vmatpush1.bf16.msra.mxu0 0
        %584 = vmatprep.mubr.bf16.mxu0 0
        %585 = vmatmul.mubr.bf16.gmra.mrb[0].mxu0 %v488
        %v586 = vpop.f32.mrb[0].mxu0
        %v587 = vadd.f32 0.0, %v586
        %v588 = vpop.f32.mrb[0].mxu0
        %v589 = vpop.f32.mrb[0].mxu0
        %v590 = vadd.f32 0.0, %v589
        %v591 = vpop.f32.mrb[0].mxu0
        %592 = vmatprep.mubr.bf16.mxu0 0
        %593 = vmatmul.mubr.bf16.gmra.mrb[0].mxu0 %v489
        %v594 = vpop.f32.mrb[0].mxu0
        %v595 = vadd.f32 0.0, %v594
        %v596 = vpop.f32.mrb[0].mxu0
        %v597 = vpop.f32.mrb[0].mxu0
        %v598 = vadd.f32 0.0, %v597
        %v599 = vpop.f32.mrb[0].mxu0
        %600 = vmatprep.mubr.bf16.mxu0 0
        %601 = vmatmul.mubr.bf16.gmra.mrb[0].mxu0 %v490
        %v602 = vpop.f32.mrb[0].mxu0
        %v603 = vadd.f32 0.0, %v602
        %v604 = vpop.f32.mrb[0].mxu0
        %v605 = vpop.f32.mrb[0].mxu0
        %v606 = vadd.f32 0.0, %v605
        %v607 = vpop.f32.mrb[0].mxu0
        %608 = vmatprep.mubr.bf16.mxu0 0
        %609 = vmatmul.mubr.bf16.gmra.mrb[0].mxu0 %v491
        %v610 = vpop.f32.mrb[0].mxu0
        %v611 = vadd.f32 0.0, %v610
        %v612 = vpop.f32.mrb[0].mxu0
        %v613 = vpop.f32.mrb[0].mxu0
        %v614 = vadd.f32 0.0, %v613
        %v615 = vpop.f32.mrb[0].mxu0
        %616 = vmatprep.mubr.bf16.mxu0 0
        %617 = vmatmul.mubr.bf16.gmra.mrb[0].mxu0 %v492
        %v618 = vpop.f32.mrb[0].mxu0
        %v619 = vadd.f32 0.0, %v618
        %v620 = vpop.f32.mrb[0].mxu0
        %v621 = vpop.f32.mrb[0].mxu0
        %v622 = vadd.f32 0.0, %v621
        %v623 = vpop.f32.mrb[0].mxu0
        %624 = vmatprep.mubr.bf16.mxu0 0
        %625 = vmatmul.mubr.bf16.gmra.mrb[0].mxu0 %v493
        %v626 = vpop.f32.mrb[0].mxu0
        %v627 = vadd.f32 0.0, %v626
        %v628 = vpop.f32.mrb[0].mxu0
        %v629 = vpop.f32.mrb[0].mxu0
        %v630 = vadd.f32 0.0, %v629
        %v631 = vpop.f32.mrb[0].mxu0
        %632 = vmatprep.mubr.bf16.mxu0 0
        %633 = vmatmul.mubr.bf16.gmra.mrb[0].mxu0 %v494
        %v634 = vpop.f32.mrb[0].mxu0
        %v635 = vadd.f32 0.0, %v634
        %v636 = vpop.f32.mrb[0].mxu0
        %v637 = vpop.f32.mrb[0].mxu0
        %v638 = vadd.f32 0.0, %v637
        %v639 = vpop.f32.mrb[0].mxu0
        %640 = vmatprep.mubr.bf16.mxu0 0
        %641 = vmatmul.mubr.bf16.gmra.mrb[0].mxu0 %v495
        %v642 = vpop.f32.mrb[0].mxu0
        %v643 = vadd.f32 0.0, %v642
        %v644 = vpop.f32.mrb[0].mxu0
        %v645 = vpop.f32.mrb[0].mxu0
        %v646 = vadd.f32 0.0, %v645
        %v647 = vpop.f32.mrb[0].mxu0
        %648 = vdwg.mxu0
        %v649 = vadd.f32 %v424, %v587
        %v650 = vadd.f32 %v425, %v590
        %v651 = vadd.f32 %v426, %v595
        %v652 = vadd.f32 %v427, %v598
        %v653 = vadd.f32 %v428, %v603
        %v654 = vadd.f32 %v429, %v606
        %v655 = vadd.f32 %v430, %v611
        %v656 = vadd.f32 %v431, %v614
        %v657 = vadd.f32 %v432, %v619
        %v658 = vadd.f32 %v433, %v622
        %v659 = vadd.f32 %v434, %v627
        %v660 = vadd.f32 %v435, %v630
        %v661 = vadd.f32 %v436, %v635
        %v662 = vadd.f32 %v437, %v638
        %v663 = vadd.f32 %v438, %v643
        %v664 = vadd.f32 %v439, %v646
        %665 = vst [vmem:[#allocation2] sm:$0xff] %v649
        %666 = vst [vmem:[#allocation2 + $0x8] sm:$0xff] %v650
        %667 = vst [vmem:[#allocation2 + $0x10] sm:$0xff] %v651
        %668 = vst [vmem:[#allocation2 + $0x18] sm:$0xff] %v652
        %669 = vst [vmem:[#allocation2 + $0x20] sm:$0xff] %v653
        %670 = vst [vmem:[#allocation2 + $0x28] sm:$0xff] %v654
        %671 = vst [vmem:[#allocation2 + $0x30] sm:$0xff] %v655
        %672 = vst [vmem:[#allocation2 + $0x38] sm:$0xff] %v656
        %673 = vst [vmem:[#allocation2 + $0x40] sm:$0xff] %v657
        %674 = vst [vmem:[#allocation2 + $0x48] sm:$0xff] %v658
        %675 = vst [vmem:[#allocation2 + $0x50] sm:$0xff] %v659
        %676 = vst [vmem:[#allocation2 + $0x58] sm:$0xff] %v660
        %677 = vst [vmem:[#allocation2 + $0x60] sm:$0xff] %v661
        %678 = vst [vmem:[#allocation2 + $0x68] sm:$0xff] %v662
        %679 = vst [vmem:[#allocation2 + $0x70] sm:$0xff] %v663
        %680 = vst [vmem:[#allocation2 + $0x78] sm:$0xff] %v664
        // Predicated region
        $region37: #{generator_forward.15} parent=31 // pred_check
          %p681 = pneg %p388
        $region38: #{generator_forward.15} parent=31 // pred_check_branch
          %683 = sbr.rel (%p681) target = $region40
        $region39: #{generator_forward.15} parent=31 // pred_region
          %v684 = vld [vmem:[#allocation2] sm:$0xff]
          %v685 = vld [vmem:[#allocation2 + $0x8] sm:$0xff]
          %v686 = vld [vmem:[#allocation2 + $0x10] sm:$0xff]
          %v687 = vld [vmem:[#allocation2 + $0x18] sm:$0xff]
          %v688 = vld [vmem:[#allocation2 + $0x20] sm:$0xff]
          %v689 = vld [vmem:[#allocation2 + $0x28] sm:$0xff]
          %v690 = vld [vmem:[#allocation2 + $0x30] sm:$0xff]
          %v691 = vld [vmem:[#allocation2 + $0x38] sm:$0xff]
          %v692 = vld [vmem:[#allocation2 + $0x40] sm:$0xff]
          %v693 = vld [vmem:[#allocation2 + $0x48] sm:$0xff]
          %v694 = vld [vmem:[#allocation2 + $0x50] sm:$0xff]
          %v695 = vld [vmem:[#allocation2 + $0x58] sm:$0xff]
          %v696 = vld [vmem:[#allocation2 + $0x60] sm:$0xff]
          %v697 = vld [vmem:[#allocation2 + $0x68] sm:$0xff]
          %v698 = vld [vmem:[#allocation2 + $0x70] sm:$0xff]
          %v699 = vld [vmem:[#allocation2 + $0x78] sm:$0xff]
          %v700 = vadd.f32 %v684, %v685
          %v701 = vadd.f32 %v700, %v686
          %v702 = vadd.f32 %v701, %v687
          %v703 = vadd.f32 %v702, %v688
          %v704 = vadd.f32 %v703, %v689
          %v705 = vadd.f32 %v704, %v690
          %v706 = vadd.f32 %v705, %v691
          %v707 = vadd.f32 %v706, %v692
          %v708 = vadd.f32 %v707, %v693
          %v709 = vadd.f32 %v708, %v694
          %v710 = vadd.f32 %v709, %v695
          %v711 = vadd.f32 %v710, %v696
          %v712 = vadd.f32 %v711, %v697
          %v713 = vadd.f32 %v712, %v698
          %v714 = vadd.f32 %v713, %v699
          %v715 = vrot.slane %v714, 4
          %v716 = vadd.f32 %v714, %v715
          %v717 = vrot.slane %v716, 2
          %v718 = vadd.f32 %v716, %v717
          %v719 = vrot.slane %v718, 1
          %v720 = vadd.f32 %v718, %v719
          %v721 = vmul.f32 %v684, %v684
          %v722 = vmul.f32 %v685, %v685
          %v723 = vmul.f32 %v686, %v686
          %v724 = vmul.f32 %v687, %v687
          %v725 = vmul.f32 %v688, %v688
          %v726 = vmul.f32 %v689, %v689
          %v727 = vmul.f32 %v690, %v690
          %v728 = vmul.f32 %v691, %v691
          %v729 = vmul.f32 %v692, %v692
          %v730 = vmul.f32 %v693, %v693
          %v731 = vmul.f32 %v694, %v694
          %v732 = vmul.f32 %v695, %v695
          %v733 = vmul.f32 %v696, %v696
          %v734 = vmul.f32 %v697, %v697
          %v735 = vmul.f32 %v698, %v698
          %v736 = vmul.f32 %v699, %v699
          %v737 = vadd.f32 %v721, %v722
          %v738 = vadd.f32 %v737, %v723
          %v739 = vadd.f32 %v738, %v724
          %v740 = vadd.f32 %v739, %v725
          %v741 = vadd.f32 %v740, %v726
          %v742 = vadd.f32 %v741, %v727
          %v743 = vadd.f32 %v742, %v728
          %v744 = vadd.f32 %v743, %v729
          %v745 = vadd.f32 %v744, %v730
          %v746 = vadd.f32 %v745, %v731
          %v747 = vadd.f32 %v746, %v732
          %v748 = vadd.f32 %v747, %v733
          %v749 = vadd.f32 %v748, %v734
          %v750 = vadd.f32 %v749, %v735
          %v751 = vadd.f32 %v750, %v736
          %v752 = vrot.slane %v751, 4
          %v753 = vadd.f32 %v751, %v752
          %v754 = vrot.slane %v753, 2
          %v755 = vadd.f32 %v753, %v754
          %v756 = vrot.slane %v755, 1
          %v757 = vadd.f32 %v755, %v756
          %758 = vst [vmem:[%s337] sm:$0xff] %v720
          %759 = vst [vmem:[%s344] sm:$0xff] %v757
          %v760 = vld [vmem:[%s373] sm:$0x1]
          %v762 = vlaneseq
          %v763 = vshrl.u32 %v762, 7
          %v764 = vsub.s32 0, %v763
          %v765 = vrot.slane %v760, %v764
          %v767 = vadd.f32 %v684, %v765
          %v768 = vadd.f32 %v685, %v765
          %v769 = vadd.f32 %v686, %v765
          %v770 = vadd.f32 %v687, %v765
          %v771 = vadd.f32 %v688, %v765
          %v772 = vadd.f32 %v689, %v765
          %v773 = vadd.f32 %v690, %v765
          %v774 = vadd.f32 %v691, %v765
          %v775 = vadd.f32 %v692, %v765
          %v776 = vadd.f32 %v693, %v765
          %v777 = vadd.f32 %v694, %v765
          %v778 = vadd.f32 %v695, %v765
          %v779 = vadd.f32 %v696, %v765
          %v780 = vadd.f32 %v697, %v765
          %v781 = vadd.f32 %v698, %v765
          %v782 = vadd.f32 %v699, %v765
          %v783 = vtanh.pop %v767
          %v784 = vtanh.pop %v768
          %v785 = vtanh.pop %v769
          %v786 = vtanh.pop %v770
          %v787 = vtanh.pop %v771
          %v788 = vtanh.pop %v772
          %v789 = vtanh.pop %v773
          %v790 = vtanh.pop %v774
          %v791 = vtanh.pop %v775
          %v792 = vtanh.pop %v776
          %v793 = vtanh.pop %v777
          %v794 = vtanh.pop %v778
          %v795 = vtanh.pop %v779
          %v796 = vtanh.pop %v780
          %v797 = vtanh.pop %v781
          %v798 = vtanh.pop %v782
          %799 = vst [vmem:[%s385] sm:$0xff] %v783
          %800 = vst [vmem:[%s385 + $0x8] sm:$0xff] %v784
          %801 = vst [vmem:[%s385 + $0x10] sm:$0xff] %v785
          %802 = vst [vmem:[%s385 + $0x18] sm:$0xff] %v786
          %803 = vst [vmem:[%s385 + $0x20] sm:$0xff] %v787
          %804 = vst [vmem:[%s385 + $0x28] sm:$0xff] %v788
          %805 = vst [vmem:[%s385 + $0x30] sm:$0xff] %v789
          %806 = vst [vmem:[%s385 + $0x38] sm:$0xff] %v790
          %807 = vst [vmem:[%s385 + $0x40] sm:$0xff] %v791
          %808 = vst [vmem:[%s385 + $0x48] sm:$0xff] %v792
          %809 = vst [vmem:[%s385 + $0x50] sm:$0xff] %v793
          %810 = vst [vmem:[%s385 + $0x58] sm:$0xff] %v794
          %811 = vst [vmem:[%s385 + $0x60] sm:$0xff] %v795
          %812 = vst [vmem:[%s385 + $0x68] sm:$0xff] %v796
          %813 = vst [vmem:[%s385 + $0x70] sm:$0xff] %v797
          %814 = vst [vmem:[%s385 + $0x78] sm:$0xff] %v798
        $region40: #{generator_forward.15} parent=31 // pred_fallthru
          _
        %s815 = smul.u32 16, %s30
        %p816 = scmp.lt.s32.totalorder %s29, 3
        %s817 = scalar_select %p816, %s29, 3
        %p818 = scmp.lt.s32.totalorder %s815, 15
        %s819 = scalar_select %p818, %s815, 15
        %p820 = scmp.lt.s32.totalorder %s31, 0
        %s821 = scalar_select %p820, %s31, 0
        %s822 = sadd.s32 %s821, %s819
        %s823 = smul.addr %s817, 16
        %s824 = sadd.s32 %s822, %s823
        %s825 = smul.addr %s824, 8
        %s826 = scalar_lea.vmem %s3, %s825
        %s827 = sand.u32 %s177, 1
        %s828 = scalar_lea.sflag [#allocation4], %s827
        %s829 = sand.u32 %s177, 1
        %s830 = smul.addr %s829, 8
        %s831 = scalar_lea.vmem [#allocation3], %s830
        %s832 = sand.u32 %s207, 1
        %s833 = scalar_lea.sflag [#allocation6], %s832
        %s834 = sand.u32 %s207, 1
        %s835 = smul.addr %s834, 8
        %s836 = scalar_lea.vmem [#allocation5], %s835
        // Predicated region
        $region41: #{generator_forward.15} parent=31 // pred_check
          %p837 = pneg %p157
        $region42: #{generator_forward.15} parent=31 // pred_check_branch
          %839 = sbr.rel (%p837) target = $region44
        $region43: #{generator_forward.15} parent=31 // pred_region
          %s840 = smul.u32 16, %s30
        $region44: #{generator_forward.15} parent=31 // pred_fallthru
          _
        // Predicated region
        $region45: #{generator_forward.15} parent=31 // pred_check
          %p841 = pneg %p187
        $region46: #{generator_forward.15} parent=31 // pred_check_branch
          %843 = sbr.rel (%p841) target = $region48
        $region47: #{generator_forward.15} parent=31 // pred_region
          %s845 = ssub.s32 128, 128
          %846 = vsyncadd %s828, %s845
          %s847 = sadd.s32 %s31, %s30
          %s848 = sadd.s32 %s847, %s29
          %s849 = smul.addr %s848, 128
          %s850 = scalar_lea.hbm %s4, %s849
          %s852 = sshll.u32 %s831, 4
          %s853 = int_to_ptr.vmem [resolvable:$true] %s852
          %855 = dma.vmem_to_hbm [thread:$0]  %s853, 128, %s850, %s828
        $region48: #{generator_forward.15} parent=31 // pred_fallthru
          _
        // Predicated region
        $region49: #{generator_forward.15} parent=31 // pred_check
          %p856 = pneg %p217
        $region50: #{generator_forward.15} parent=31 // pred_check_branch
          %858 = sbr.rel (%p856) target = $region52
        $region51: #{generator_forward.15} parent=31 // pred_region
          %s860 = ssub.s32 128, 128
          %861 = vsyncadd %s833, %s860
          %s862 = sadd.s32 %s31, %s30
          %s863 = sadd.s32 %s862, %s29
          %s864 = smul.addr %s863, 128
          %s865 = scalar_lea.hbm %s5, %s864
          %s867 = sshll.u32 %s836, 4
          %s868 = int_to_ptr.vmem [resolvable:$true] %s867
          %870 = dma.vmem_to_hbm [thread:$0]  %s868, 128, %s865, %s833
        $region52: #{generator_forward.15} parent=31 // pred_fallthru
          _
      $region32: #{generator_forward.15} parent=5 // pred_fallthru
        _
      %p871 = scmp.le.s32.totalorder 2, %s18
      // Predicated region
      $region53: #{generator_forward.15} parent=5 // pred_check
        %p872 = pneg %p871
      $region54: #{generator_forward.15} parent=5 // pred_check_branch
        %874 = sbr.rel (%p872) target = $region56
      $region55: #{generator_forward.15} parent=5 // pred_region
        %s875 = ssub.s32 %s18, 2
        // Predicated region
        $region57: #{generator_forward.15} parent=55 // pred_check
          %p876 = pneg %p163
        $region58: #{generator_forward.15} parent=55 // pred_check_branch
          %878 = sbr.rel (%p876) target = $region60
        $region59: #{generator_forward.15} parent=55 // pred_region
          %s879 = smul.u32 16, %s34
          %p880 = scmp.lt.s32.totalorder %s33, 3
          %s881 = scalar_select %p880, %s33, 3
          %p882 = scmp.lt.s32.totalorder %s879, 15
          %s883 = scalar_select %p882, %s879, 15
          %p884 = scmp.lt.s32.totalorder %s35, 0
          %s885 = scalar_select %p884, %s35, 0
          %s886 = sadd.s32 %s885, %s883
          %s887 = smul.addr %s881, 16
          %s888 = sadd.s32 %s886, %s887
          %s889 = smul.addr %s888, 8
          %s890 = scalar_lea.vmem %s3, %s889
        $region60: #{generator_forward.15} parent=55 // pred_fallthru
          _
        // Predicated region
        $region61: #{generator_forward.15} parent=55 // pred_check
          %p891 = pneg %p193
        $region62: #{generator_forward.15} parent=55 // pred_check_branch
          %893 = sbr.rel (%p891) target = $region64
        $region63: #{generator_forward.15} parent=55 // pred_region
          %s894 = sand.u32 %s178, 1
          %s895 = scalar_lea.sflag [#allocation4], %s894
          %s896 = sand.u32 %s178, 1
          %s897 = smul.addr %s896, 8
          %s898 = scalar_lea.vmem [#allocation3], %s897
          %899 = dma.done %s895, 128
        $region64: #{generator_forward.15} parent=55 // pred_fallthru
          _
        // Predicated region
        $region65: #{generator_forward.15} parent=55 // pred_check
          %p900 = pneg %p223
        $region66: #{generator_forward.15} parent=55 // pred_check_branch
          %902 = sbr.rel (%p900) target = $region68
        $region67: #{generator_forward.15} parent=55 // pred_region
          %s903 = sand.u32 %s208, 1
          %s904 = scalar_lea.sflag [#allocation6], %s903
          %s905 = sand.u32 %s208, 1
          %s906 = smul.addr %s905, 8
          %s907 = scalar_lea.vmem [#allocation5], %s906
          %908 = dma.done %s904, 128
        $region68: #{generator_forward.15} parent=55 // pred_fallthru
          _
      $region56: #{generator_forward.15} parent=5 // pred_fallthru
        _
    $region6: #{generator_forward.15} parent=1 // loop_footer
      %s22 = sadd.s32 1, %s18
    $region7: #{generator_forward.15} parent=1 // loop_footer_branch
      %17 = sbr.rel target = $region3
    $region8: #{generator_forward.15} parent=1 // loop_exit
      _
    %909 = vsyncpa [#allocation4], 1
    %s910 = scalar_lea.sflag [#allocation4], 1
    %911 = vsyncpa %s910, 1
    %912 = vsyncpa [#allocation6], 1
    %s913 = scalar_lea.sflag [#allocation6], 1
    %914 = vsyncpa %s913, 1

</llo_original>
